<compile_context>
chip_gen: v6e
topology: v6e:2x2x1
jax: 0.10.0
libtpu: 0.0.40
codegen_flags: <defaults>
</compile_context>

<pallas_src>
import functools

import jax
import jax.numpy as jnp
import numpy as np
from jax.experimental import pallas as pl
from jax.experimental.pallas import tpu as pltpu


def _deephit_kernel(dur_i_ref, dur_adj_j_ref, ev_i_ref, phi_i_ref, phi_j_ref,
                    nll_ref, rank_ref, step_ref, gate_ref, *, inv_sigma, eps):
    j = pl.program_id(1)
    ti, m = phi_i_ref.shape

    # ---- per-row-tile pass (once per i tile): padded-softmax stats, NLL, gate ----
    @pl.when(j == 0)
    def _row_pass():
        phi_i = phi_i_ref[...]                                            # (TI, m)
        dur_i = dur_i_ref[...]                                            # (TI, 1) int32
        ev_i = ev_i_ref[...]                                              # (TI, 1) f32
        # pad_col semantics: a zero column is appended analytically.
        gamma = jnp.maximum(jnp.max(phi_i, axis=1, keepdims=True), 0.0)   # (TI,1)
        e = jnp.exp(phi_i - gamma)
        sum_ = jnp.sum(e, axis=1, keepdims=True) + jnp.exp(-gamma)        # incl. pad
        inv_sum = 1.0 / sum_                                              # one recip / row
        col = jax.lax.broadcasted_iota(jnp.int32, (ti, m), 1)
        step_f = (col <= dur_i).astype(jnp.float32)                       # (TI, m)
        step_ref[...] = step_f                                            # reused for all j
        onehot = col == dur_i
        cum_at = jnp.sum(step_f * e, axis=1, keepdims=True)               # F-numerator at T_i
        phi_at = jnp.sum(jnp.where(onehot, phi_i, 0.0), axis=1, keepdims=True)
        diag = cum_at * inv_sum                                           # F_i(T_i)

        # nll_pmf per row (normalized by n in the JAX epilogue)
        part1 = (phi_at - gamma) * ev_i
        part2 = -jnp.log(sum_ + eps)                                      # sum_ > 0
        part3 = jnp.log(jnp.maximum(sum_ - cum_at, 0.0) + eps) * (1.0 - ev_i)
        nll_ref[...] = -(part1 + part2 + part3)

        # rank-loss row gate: 1{D_i != 0} * exp(-F_i(T_i)/sigma); applied after
        # the lane reduce so the (t,t) block never sees it.
        gate_ref[...] = jnp.where(ev_i != 0.0, jnp.exp(-diag * inv_sigma), 0.0)
        rank_ref[...] = jnp.zeros_like(rank_ref)

    # ---- per (i, j) tile: rank-loss block ----
    phi_j = phi_j_ref[...]                                                # (TJ, m)
    gamma_j = jnp.maximum(jnp.max(phi_j, axis=1, keepdims=True), 0.0)
    e_j = jnp.exp(phi_j - gamma_j)
    sum_j = jnp.sum(e_j, axis=1, keepdims=True) + jnp.exp(-gamma_j)
    pmf_j = e_j * (inv_sigma / sum_j)                                     # pmf / sigma, (TJ, m)

    # rT_s[a, b] = F_{j_b}(T_{i_a}) / sigma  via one matmul with the cached step matrix.
    rT_s = jax.lax.dot_general(step_ref[...], pmf_j, (((1,), (1,)), ((), ())),
                               preferred_element_type=jnp.float32,
                               precision=jax.lax.Precision.HIGHEST)       # (TI, TJ)

    # pair_rank_mat condition folded to a single compare:
    #   (T_i < T_j) or (T_i == T_j and D_j == 0)  ==  T_i < T_j + 1{D_j==0}
    cond = dur_i_ref[...] < dur_adj_j_ref[...]                            # (TI, TJ) bool
    row_part = jnp.sum(jnp.where(cond, jnp.exp(rT_s), 0.0),
                       axis=1, keepdims=True)                             # lane-only reduce
    rank_ref[...] += gate_ref[...] * row_part


def _choose_tile(n):
    """Pick (tile, padded_n).  Big tiles amortize per-step overhead; cap at 1024
    so (t,t) f32 intermediates stay inside v7x's 64 MiB VMEM."""
    for t in (1024, 512, 256, 128):
        if n % t == 0:
            return t, n
    # ragged batch: pad up to a tile multiple (smaller tiles bound pad waste).
    if n <= 2048:
        t = 128
    elif n <= 8192:
        t = 256
    else:
        t = 512
    n_pad = ((n + t - 1) // t) * t
    return t, n_pad


def deephit_loss(survtimes, events, logits, *, alpha=0.5, sigma=1.0):
    """DeepHitSingleLoss (pycox semantics) computed in one tiled Pallas TPU kernel."""
    # TODO(synk): competing-risks DeepHitLoss (single=False branch of the module)
    # is not implemented; this covers the default DeepHitSingleLoss path.
    logits = jnp.asarray(logits, jnp.float32)
    n, m = logits.shape
    dur = jnp.asarray(survtimes, jnp.int32).reshape(-1)
    ev = jnp.asarray(events, jnp.float32).reshape(-1)
    assert dur.shape[0] == n and ev.shape[0] == n

    t, n_pad = _choose_tile(n)
    pad = n_pad - n
    if pad:
        logits = jnp.pad(logits, ((0, pad), (0, 0)))
        dur = jnp.pad(dur, (0, pad))
        ev = jnp.pad(ev, (0, pad))

    # dur_j_adj = T_j + 1{D_j == 0}; pad columns get -1 so cond is always false.
    dur_adj = dur + (ev == 0.0).astype(jnp.int32)
    if pad:
        dur_adj = dur_adj.at[n:].set(-1)

    dur_col = dur.reshape(n_pad, 1)
    ev_col = ev.reshape(n_pad, 1)
    dur_adj_row = dur_adj.reshape(1, n_pad)

    num_t = n_pad // t
    kernel = functools.partial(_deephit_kernel, inv_sigma=1.0 / float(sigma), eps=1e-7)

    cost = pl.CostEstimate(
        flops=int(2 * n_pad * n_pad * m + 6 * n_pad * n_pad
                  + 10 * n_pad * m * (num_t + 1)),
        transcendentals=int(n_pad * n_pad + n_pad * m * (num_t + 1)
                            + 3 * n_pad * (num_t + 1)),
        bytes_accessed=int(4 * (n_pad * m * (num_t + 1)        # phi row + streamed col tiles
                                + 3 * n_pad * num_t            # dur/ev/dur_adj tiles
                                + 2 * n_pad)),                 # nll/rank row outputs
    )

    grid_spec = pltpu.PrefetchScalarGridSpec(
        num_scalar_prefetch=0,
        grid=(num_t, num_t),
        in_specs=[
            pl.BlockSpec((t, 1), lambda i, j: (i, 0)),   # dur, row tile (column vec)
            pl.BlockSpec((1, t), lambda i, j: (0, j)),   # dur_adj, col tile (row vec)
            pl.BlockSpec((t, 1), lambda i, j: (i, 0)),   # events, row tile
            pl.BlockSpec((t, m), lambda i, j: (i, 0)),   # logits for row tile
            pl.BlockSpec((t, m), lambda i, j: (j, 0)),   # logits for col tile
        ],
        out_specs=[
            pl.BlockSpec((t, 1), lambda i, j: (i, 0)),   # per-row NLL
            pl.BlockSpec((t, 1), lambda i, j: (i, 0)),   # per-row rank partial sums
        ],
        scratch_shapes=[
            pltpu.VMEM((t, m), jnp.float32),   # step matrix (col <= dur_i), cached per i
            pltpu.VMEM((t, 1), jnp.float32),   # row gate ev_i * exp(-F_i(T_i)/sigma)
        ],
    )

    nll_rows, rank_rows = pl.pallas_call(
        kernel,
        out_shape=(jax.ShapeDtypeStruct((n_pad, 1), jnp.float32),
                   jax.ShapeDtypeStruct((n_pad, 1), jnp.float32)),
        grid_spec=grid_spec,
        compiler_params=pltpu.CompilerParams(
            # Per-i-tile outputs + per-core scratch => the i axis is safely
            # megacore-parallel; j (rank-loss reduction) stays "arbitrary".
            dimension_semantics=("parallel", "arbitrary"),
            vmem_limit_bytes=48 * 1024 * 1024,
        ),
        cost_estimate=cost,
    )(dur_col, dur_adj_row, ev_col, logits, logits)

    # Tiny epilogue in JAX: normalize with the ORIGINAL n, drop pad rows.
    nll = jnp.sum(nll_rows[:n, 0]) * (1.0 / n)
    rank = jnp.sum(rank_rows[:n, 0]) * (1.0 / (n * n))
    return alpha * nll + (1.0 - alpha) * rank


def deephit_loss_ref(survtimes, events, logits, *, alpha=0.5, sigma=1.0):
    """Pure-JAX reference mirroring pycox DeepHitSingleLoss + pair_rank_mat."""
    phi = jnp.asarray(logits, jnp.float32)
    dur = jnp.asarray(survtimes, jnp.int32).reshape(-1)
    ev = jnp.asarray(events, jnp.float32).reshape(-1)
    n, m = phi.shape
    pad = jnp.concatenate([phi, jnp.zeros((n, 1), jnp.float32)], axis=1)
    gamma = jnp.max(pad, axis=1)
    cums = jnp.cumsum(jnp.exp(pad - gamma[:, None]), axis=1)
    sum_ = cums[:, -1]
    idx = jnp.arange(n)
    part1 = (pad[idx, dur] - gamma) * ev
    part2 = -jnp.log(jnp.maximum(sum_, 0.0) + 1e-7)
    part3 = jnp.log(jnp.maximum(sum_ - cums[idx, dur], 0.0) + 1e-7) * (1.0 - ev)
    nll = jnp.mean(-(part1 + part2 + part3))
    pmf = jax.nn.softmax(pad, axis=1)
    y = jax.nn.one_hot(dur, m + 1, dtype=jnp.float32)
    r = jnp.cumsum(pmf, axis=1) @ y.T
    diag_r = jnp.diag(r)
    rdiff = (diag_r[None, :] - r).T
    cond = (dur[:, None] < dur[None, :]) | ((dur[:, None] == dur[None, :]) & (ev[None, :] == 0.0))
    rank_mat = cond.astype(jnp.float32) * (ev[:, None] != 0.0).astype(jnp.float32)
    rank_loss = jnp.mean(jnp.mean(rank_mat * jnp.exp(-rdiff / sigma), axis=1))
    return alpha * nll + (1.0 - alpha) * rank_loss


if __name__ == "__main__":
    key = jax.random.PRNGKey(0)

    # (8, 16): single padded block.  (200, 16): ragged n -> padded (2,2) grid.
    # (256, 16): exact tiling, exercises the per-row accumulation across j.
    for (n, m) in ((8, 16), (200, 16), (256, 16)):
        k1, k2, k3, key = jax.random.split(key, 4)
        survtimes = jax.random.randint(k1, (n,), 0, m, dtype=jnp.int32)
        events = jax.random.bernoulli(k2, 0.6, (n,)).astype(jnp.float32)
        logits = jax.random.normal(k3, (n, m), dtype=jnp.float32)

        loss = deephit_loss(survtimes, events, logits, alpha=0.5, sigma=1.0)
        loss = jax.block_until_ready(loss)

        ref = deephit_loss_ref(survtimes, events, logits, alpha=0.5, sigma=1.0)
        np.testing.assert_allclose(np.asarray(loss), np.asarray(ref),
                                   rtol=1e-4, atol=1e-5)

    print("KERNEL_OK")
</pallas_src>

<mosaic_0001>
module attributes {stable_mosaic.version = 11 : i64} {
  func.func @_deephit_kernel(%arg0: i32, %arg1: i32, %arg2: memref<128x1xi32, #tpu.memory_space<vmem>>, %arg3: memref<1x128xi32, #tpu.memory_space<vmem>>, %arg4: memref<128x1xf32, #tpu.memory_space<vmem>>, %arg5: memref<128x16xf32, #tpu.memory_space<vmem>>, %arg6: memref<128x16xf32, #tpu.memory_space<vmem>>, %arg7: memref<128x1xf32, #tpu.memory_space<vmem>>, %arg8: memref<128x1xf32, #tpu.memory_space<vmem>>, %arg9: memref<128x16xf32, #tpu.memory_space<vmem>>, %arg10: memref<128x1xf32, #tpu.memory_space<vmem>>) attributes {dimension_semantics = [#tpu.dimension_semantics<parallel>, #tpu.dimension_semantics<arbitrary>], iteration_bounds = array<i64: 1, 1>, scalar_prefetch = 0 : i64, scratch_operands = 2 : i64, tpu.core_type = #tpu.core_type<tc>, window_params = [{transform_indices = @transform_0, window_bounds = array<i64: 128, 1>}, {transform_indices = @transform_1, window_bounds = array<i64: 1, 128>}, {transform_indices = @transform_2, window_bounds = array<i64: 128, 1>}, {transform_indices = @transform_3, window_bounds = array<i64: 128, 16>}, {transform_indices = @transform_4, window_bounds = array<i64: 128, 16>}, {transform_indices = @transform_5, window_bounds = array<i64: 128, 1>}, {transform_indices = @transform_6, window_bounds = array<i64: 128, 1>}]} {
    %c0_i32 = arith.constant 0 : i32
    %0 = arith.cmpi eq, %arg1, %c0_i32 : i32
    %1 = arith.extui %0 : i1 to i32
    %c0_i32_0 = arith.constant 0 : i32
    %2 = arith.cmpi ne, %1, %c0_i32_0 : i32
    scf.if %2 {
      %c0_21 = arith.constant 0 : index
      %c0_22 = arith.constant 0 : index
      %38 = vector.load %arg5[%c0_21, %c0_22] : memref<128x16xf32, #tpu.memory_space<vmem>>, vector<128x16xf32>
      %c0_23 = arith.constant 0 : index
      %c0_24 = arith.constant 0 : index
      %39 = vector.load %arg2[%c0_23, %c0_24] : memref<128x1xi32, #tpu.memory_space<vmem>>, vector<128x1xi32>
      %c0_25 = arith.constant 0 : index
      %c0_26 = arith.constant 0 : index
      %40 = vector.load %arg4[%c0_25, %c0_26] : memref<128x1xf32, #tpu.memory_space<vmem>>, vector<128x1xf32>
      %cst_27 = arith.constant dense<0xFF800000> : vector<128xf32>
      %41 = vector.multi_reduction <maximumf>, %38, %cst_27 [1] : vector<128x16xf32> to vector<128xf32>
      %42 = vector.shape_cast %41 : vector<128xf32> to vector<128x1xf32>
      %cst_28 = arith.constant 0.000000e+00 : f32
      %43 = vector.broadcast %cst_28 : f32 to vector<128x1xf32>
      %44 = arith.maximumf %42, %43 : vector<128x1xf32>
      %45 = vector.broadcast %44 : vector<128x1xf32> to vector<128x16xf32>
      %46 = arith.subf %38, %45 : vector<128x16xf32>
      %47 = math.exp %46 : vector<128x16xf32>
      %cst_29 = arith.constant dense<0.000000e+00> : vector<128xf32>
      %48 = vector.multi_reduction <add>, %47, %cst_29 [1] : vector<128x16xf32> to vector<128xf32>
      %49 = vector.shape_cast %48 : vector<128xf32> to vector<128x1xf32>
      %cst_30 = arith.constant 0.000000e+00 : f32
      %50 = vector.broadcast %cst_30 : f32 to vector<128x1xf32>
      %51 = arith.subf %50, %44 : vector<128x1xf32>
      %52 = math.exp %51 : vector<128x1xf32>
      %53 = arith.addf %49, %52 : vector<128x1xf32>
      %cst_31 = arith.constant 1.000000e+00 : f32
      %54 = vector.broadcast %cst_31 : f32 to vector<128x1xf32>
      %55 = arith.divf %54, %53 : vector<128x1xf32>
      %56 = tpu.iota {dimensions = array<i32: 1>} : vector<128x16xi32>
      %57 = vector.broadcast %39 : vector<128x1xi32> to vector<128x16xi32>
      %58 = arith.cmpi sle, %56, %57 : vector<128x16xi32>
      %59 = arith.extui %58 : vector<128x16xi1> to vector<128x16xi32>
      %60 = arith.sitofp %59 : vector<128x16xi32> to vector<128x16xf32>
      %c0_32 = arith.constant 0 : index
      %c0_33 = arith.constant 0 : index
      %61 = vector.load %arg9[%c0_32, %c0_33] : memref<128x16xf32, #tpu.memory_space<vmem>>, vector<128x16xf32>
      tpu.vector_store %arg9[%c0_32, %c0_33], %60 {strides = array<i32>} : memref<128x16xf32, #tpu.memory_space<vmem>>, vector<128x16xf32>,
      %62 = vector.broadcast %39 : vector<128x1xi32> to vector<128x16xi32>
      %63 = arith.cmpi eq, %56, %62 : vector<128x16xi32>
      %64 = arith.mulf %60, %47 : vector<128x16xf32>
      %cst_34 = arith.constant dense<0.000000e+00> : vector<128xf32>
      %65 = vector.multi_reduction <add>, %64, %cst_34 [1] : vector<128x16xf32> to vector<128xf32>
      %66 = vector.shape_cast %65 : vector<128xf32> to vector<128x1xf32>
      %cst_35 = arith.constant 0.000000e+00 : f32
      %67 = vector.broadcast %cst_35 : f32 to vector<128x16xf32>
      %68 = arith.select %63, %38, %67 : vector<128x16xi1>, vector<128x16xf32>
      %cst_36 = arith.constant dense<0.000000e+00> : vector<128xf32>
      %69 = vector.multi_reduction <add>, %68, %cst_36 [1] : vector<128x16xf32> to vector<128xf32>
      %70 = vector.shape_cast %69 : vector<128xf32> to vector<128x1xf32>
      %71 = arith.mulf %66, %55 : vector<128x1xf32>
      %72 = arith.subf %70, %44 : vector<128x1xf32>
      %73 = arith.mulf %72, %40 : vector<128x1xf32>
      %cst_37 = arith.constant 1.000000e-07 : f32
      %74 = vector.broadcast %cst_37 : f32 to vector<128x1xf32>
      %75 = arith.addf %53, %74 : vector<128x1xf32>
      %76 = math.log %75 : vector<128x1xf32>
      %cst_38 = arith.constant 0.000000e+00 : f32
      %77 = vector.broadcast %cst_38 : f32 to vector<128x1xf32>
      %78 = arith.subf %77, %76 : vector<128x1xf32>
      %79 = arith.subf %53, %66 : vector<128x1xf32>
      %cst_39 = arith.constant 0.000000e+00 : f32
      %80 = vector.broadcast %cst_39 : f32 to vector<128x1xf32>
      %81 = arith.maximumf %79, %80 : vector<128x1xf32>
      %cst_40 = arith.constant 1.000000e-07 : f32
      %82 = vector.broadcast %cst_40 : f32 to vector<128x1xf32>
      %83 = arith.addf %81, %82 : vector<128x1xf32>
      %84 = math.log %83 : vector<128x1xf32>
      %cst_41 = arith.constant 1.000000e+00 : f32
      %85 = vector.broadcast %cst_41 : f32 to vector<128x1xf32>
      %86 = arith.subf %85, %40 : vector<128x1xf32>
      %87 = arith.mulf %84, %86 : vector<128x1xf32>
      %88 = arith.addf %73, %78 : vector<128x1xf32>
      %89 = arith.addf %88, %87 : vector<128x1xf32>
      %cst_42 = arith.constant 0.000000e+00 : f32
      %90 = vector.broadcast %cst_42 : f32 to vector<128x1xf32>
      %91 = arith.subf %90, %89 : vector<128x1xf32>
      %c0_43 = arith.constant 0 : index
      %c0_44 = arith.constant 0 : index
      %92 = vector.load %arg7[%c0_43, %c0_44] : memref<128x1xf32, #tpu.memory_space<vmem>>, vector<128x1xf32>
      tpu.vector_store %arg7[%c0_43, %c0_44], %91 {strides = array<i32>} : memref<128x1xf32, #tpu.memory_space<vmem>>, vector<128x1xf32>,
      %cst_45 = arith.constant 0.000000e+00 : f32
      %93 = vector.broadcast %cst_45 : f32 to vector<128x1xf32>
      %94 = arith.cmpf one, %40, %93 : vector<128x1xf32>
      %cst_46 = arith.constant 0.000000e+00 : f32
      %95 = vector.broadcast %cst_46 : f32 to vector<128x1xf32>
      %96 = arith.subf %95, %71 : vector<128x1xf32>
      %cst_47 = arith.constant 1.000000e+00 : f32
      %97 = vector.broadcast %cst_47 : f32 to vector<128x1xf32>
      %98 = arith.mulf %96, %97 : vector<128x1xf32>
      %99 = math.exp %98 : vector<128x1xf32>
      %cst_48 = arith.constant 0.000000e+00 : f32
      %100 = vector.broadcast %cst_48 : f32 to vector<128x1xf32>
      %101 = arith.select %94, %99, %100 : vector<128x1xi1>, vector<128x1xf32>
      %c0_49 = arith.constant 0 : index
      %c0_50 = arith.constant 0 : index
      %102 = vector.load %arg10[%c0_49, %c0_50] : memref<128x1xf32, #tpu.memory_space<vmem>>, vector<128x1xf32>
      tpu.vector_store %arg10[%c0_49, %c0_50], %101 {strides = array<i32>} : memref<128x1xf32, #tpu.memory_space<vmem>>, vector<128x1xf32>,
      %cst_51 = arith.constant 0.000000e+00 : f32
      %103 = vector.broadcast %cst_51 : f32 to vector<128x1xf32>
      %c0_52 = arith.constant 0 : index
      %c0_53 = arith.constant 0 : index
      %104 = vector.load %arg8[%c0_52, %c0_53] : memref<128x1xf32, #tpu.memory_space<vmem>>, vector<128x1xf32>
      tpu.vector_store %arg8[%c0_52, %c0_53], %103 {strides = array<i32>} : memref<128x1xf32, #tpu.memory_space<vmem>>, vector<128x1xf32>,
    } else {
    }
    %c0 = arith.constant 0 : index
    %c0_1 = arith.constant 0 : index
    %3 = vector.load %arg6[%c0, %c0_1] : memref<128x16xf32, #tpu.memory_space<vmem>>, vector<128x16xf32>
    %cst = arith.constant dense<0xFF800000> : vector<128xf32>
    %4 = vector.multi_reduction <maximumf>, %3, %cst [1] : vector<128x16xf32> to vector<128xf32>
    %5 = vector.shape_cast %4 : vector<128xf32> to vector<128x1xf32>
    %cst_2 = arith.constant 0.000000e+00 : f32
    %6 = vector.broadcast %cst_2 : f32 to vector<128x1xf32>
    %7 = arith.maximumf %5, %6 : vector<128x1xf32>
    %8 = vector.broadcast %7 : vector<128x1xf32> to vector<128x16xf32>
    %9 = arith.subf %3, %8 : vector<128x16xf32>
    %10 = math.exp %9 : vector<128x16xf32>
    %cst_3 = arith.constant dense<0.000000e+00> : vector<128xf32>
    %11 = vector.multi_reduction <add>, %10, %cst_3 [1] : vector<128x16xf32> to vector<128xf32>
    %12 = vector.shape_cast %11 : vector<128xf32> to vector<128x1xf32>
    %cst_4 = arith.constant 0.000000e+00 : f32
    %13 = vector.broadcast %cst_4 : f32 to vector<128x1xf32>
    %14 = arith.subf %13, %7 : vector<128x1xf32>
    %15 = math.exp %14 : vector<128x1xf32>
    %16 = arith.addf %12, %15 : vector<128x1xf32>
    %cst_5 = arith.constant 1.000000e+00 : f32
    %17 = vector.broadcast %cst_5 : f32 to vector<128x1xf32>
    %18 = arith.divf %17, %16 : vector<128x1xf32>
    %19 = vector.broadcast %18 : vector<128x1xf32> to vector<128x16xf32>
    %20 = arith.mulf %10, %19 : vector<128x16xf32>
    %c0_6 = arith.constant 0 : index
    %c0_7 = arith.constant 0 : index
    %21 = vector.load %arg9[%c0_6, %c0_7] : memref<128x16xf32, #tpu.memory_space<vmem>>, vector<128x16xf32>
    %cst_8 = arith.constant dense<0.000000e+00> : vector<128x128xf32>
    %22 = tpu.matmul %21, %20, %cst_8 {dimension_numbers = #tpu.dot_dimension_numbers<[1], [1], [0], [0], [0, 0, 1, 0], [], []>, precision = #tpu.contract_precision<fp32>} : vector<128x16xf32>, vector<128x16xf32>, vector<128x128xf32> -> vector<128x128xf32>
    %c0_9 = arith.constant 0 : index
    %c0_10 = arith.constant 0 : index
    %23 = vector.load %arg2[%c0_9, %c0_10] : memref<128x1xi32, #tpu.memory_space<vmem>>, vector<128x1xi32>
    %c0_11 = arith.constant 0 : index
    %c0_12 = arith.constant 0 : index
    %24 = vector.load %arg3[%c0_11, %c0_12] : memref<1x128xi32, #tpu.memory_space<vmem>>, vector<1x128xi32>
    %25 = vector.broadcast %23 : vector<128x1xi32> to vector<128x128xi32>
    %26 = vector.broadcast %24 : vector<1x128xi32> to vector<128x128xi32>
    %27 = arith.cmpi slt, %25, %26 : vector<128x128xi32>
    %28 = math.exp %22 : vector<128x128xf32>
    %cst_13 = arith.constant 0.000000e+00 : f32
    %29 = vector.broadcast %cst_13 : f32 to vector<128x128xf32>
    %30 = arith.select %27, %28, %29 : vector<128x128xi1>, vector<128x128xf32>
    %cst_14 = arith.constant dense<0.000000e+00> : vector<128xf32>
    %31 = vector.multi_reduction <add>, %30, %cst_14 [1] : vector<128x128xf32> to vector<128xf32>
    %32 = vector.shape_cast %31 : vector<128xf32> to vector<128x1xf32>
    %c0_15 = arith.constant 0 : index
    %c0_16 = arith.constant 0 : index
    %33 = vector.load %arg8[%c0_15, %c0_16] : memref<128x1xf32, #tpu.memory_space<vmem>>, vector<128x1xf32>
    %c0_17 = arith.constant 0 : index
    %c0_18 = arith.constant 0 : index
    %34 = vector.load %arg10[%c0_17, %c0_18] : memref<128x1xf32, #tpu.memory_space<vmem>>, vector<128x1xf32>
    %35 = arith.mulf %34, %32 : vector<128x1xf32>
    %36 = arith.addf %33, %35 : vector<128x1xf32>
    %c0_19 = arith.constant 0 : index
    %c0_20 = arith.constant 0 : index
    %37 = vector.load %arg8[%c0_19, %c0_20] : memref<128x1xf32, #tpu.memory_space<vmem>>, vector<128x1xf32>
    tpu.vector_store %arg8[%c0_19, %c0_20], %36 {strides = array<i32>} : memref<128x1xf32, #tpu.memory_space<vmem>>, vector<128x1xf32>,
    return
  }
  func.func @transform_0(%arg0: i32, %arg1: i32) -> (i32, i32) {
    %c0_i32 = arith.constant 0 : i32
    %c0_i32_0 = arith.constant 0 : i32
    return %arg0, %c0_i32 : i32, i32
  }
  func.func @transform_1(%arg0: i32, %arg1: i32) -> (i32, i32) {
    %c0_i32 = arith.constant 0 : i32
    %c0_i32_0 = arith.constant 0 : i32
    return %c0_i32, %arg1 : i32, i32
  }
  func.func @transform_2(%arg0: i32, %arg1: i32) -> (i32, i32) {
    %c0_i32 = arith.constant 0 : i32
    %c0_i32_0 = arith.constant 0 : i32
    return %arg0, %c0_i32 : i32, i32
  }
  func.func @transform_3(%arg0: i32, %arg1: i32) -> (i32, i32) {
    %c0_i32 = arith.constant 0 : i32
    %c0_i32_0 = arith.constant 0 : i32
    return %arg0, %c0_i32 : i32, i32
  }
  func.func @transform_4(%arg0: i32, %arg1: i32) -> (i32, i32) {
    %c0_i32 = arith.constant 0 : i32
    %c0_i32_0 = arith.constant 0 : i32
    return %arg1, %c0_i32 : i32, i32
  }
  func.func @transform_5(%arg0: i32, %arg1: i32) -> (i32, i32) {
    %c0_i32 = arith.constant 0 : i32
    %c0_i32_0 = arith.constant 0 : i32
    return %arg0, %c0_i32 : i32, i32
  }
  func.func @transform_6(%arg0: i32, %arg1: i32) -> (i32, i32) {
    %c0_i32 = arith.constant 0 : i32
    %c0_i32_0 = arith.constant 0 : i32
    return %arg0, %c0_i32 : i32, i32
  }
}

</mosaic_0001>

<llo_original>
// kernel: tpu_custom_call.1
$region0: #{tpu_custom_call.1}
  #allocation0 [shape = 'u32[]', space=smem, size = 0x4, offset = 0x4, fixed_abs, tag = 'smem constant byte address 0x4 - core index']
  #allocation1 [shape = 'u32[144,128]{1,0:T(1,128)}', space=vmem, size = 0x12000, scoped, tag = 'internal scratch']
  #allocation2 [shape = 'f32[128,16]{1,0:T(8,128)}', space=vmem, size = 0x10000, scoped, tag = 'scratch operand']
  #allocation3 [shape = 'f32[128,1]{1,0:T(8,128)}', space=vmem, size = 0x10000, scoped, tag = 'scratch operand']
  %s0 = inlined_call_operand.vmem [shape: s32[128,1], index: 0, kind: input, shape index: {}]
  %s1 = inlined_call_operand.vmem [shape: s32[1,128], index: 1, kind: input, shape index: {}]
  %s2 = inlined_call_operand.vmem [shape: f32[128,1], index: 2, kind: input, shape index: {}]
  %s3 = inlined_call_operand.vmem [shape: f32[128,16], index: 3, kind: input, shape index: {}]
  %s4 = inlined_call_operand.vmem [shape: f32[128,16], index: 4, kind: input, shape index: {}]
  %s5 = inlined_call_operand.vmem [shape: f32[128,1], index: 5, kind: output, shape index: {0}]
  %s6 = inlined_call_operand.vmem [shape: f32[128,1], index: 6, kind: output, shape index: {1}]
  %7 = xla_tuple %s5, %s6
  %s8 = sld [smem:[#allocation0]]
  $region42: #{tpu_custom_call.1} parent=0
    _
  %s10 = ssub.s32 1, %s8
  %s11 = scalar_select 0, %s10, %s8
  // Predicated region
  $region2: #{tpu_custom_call.1} parent=0 // pred_check
    _
  $region3: #{tpu_custom_call.1} parent=0 // pred_check_branch
    %13 = sbr.rel (0) target = $region5
  $region4: #{tpu_custom_call.1} parent=0 // pred_region
    _
  $region5: #{tpu_custom_call.1} parent=0 // pred_fallthru
    _
  // Predicated region
  $region6: #{tpu_custom_call.1} parent=0 // pred_check
    _
  $region7: #{tpu_custom_call.1} parent=0 // pred_check_branch
    %15 = sbr.rel (0) target = $region9
  $region8: #{tpu_custom_call.1} parent=0 // pred_region
    _
  $region9: #{tpu_custom_call.1} parent=0 // pred_fallthru
    _
  // Predicated region
  $region10: #{tpu_custom_call.1} parent=0 // pred_check
    _
  $region11: #{tpu_custom_call.1} parent=0 // pred_check_branch
    %17 = sbr.rel (0) target = $region13
  $region12: #{tpu_custom_call.1} parent=0 // pred_region
    _
  $region13: #{tpu_custom_call.1} parent=0 // pred_fallthru
    _
  // Predicated region
  $region14: #{tpu_custom_call.1} parent=0 // pred_check
    _
  $region15: #{tpu_custom_call.1} parent=0 // pred_check_branch
    %19 = sbr.rel (0) target = $region17
  $region16: #{tpu_custom_call.1} parent=0 // pred_region
    _
  $region17: #{tpu_custom_call.1} parent=0 // pred_fallthru
    _
  // Predicated region
  $region18: #{tpu_custom_call.1} parent=0 // pred_check
    _
  $region19: #{tpu_custom_call.1} parent=0 // pred_check_branch
    %21 = sbr.rel (0) target = $region21
  $region20: #{tpu_custom_call.1} parent=0 // pred_region
    _
  $region21: #{tpu_custom_call.1} parent=0 // pred_fallthru
    _
  %p22 = scmp.eq.s32.totalorder 0, 0
  // Predicated region
  $region22: #{tpu_custom_call.1} parent=0 // pred_check
    %p23 = pneg %p22
  $region23: #{tpu_custom_call.1} parent=0 // pred_check_branch
    %25 = sbr.rel (%p23) target = $region25
  $region24: #{tpu_custom_call.1} parent=0 // pred_region
    %v26 = vld [vmem:[%s3] sm:$0xff]
    %v27 = vld [vmem:[%s3 + $0x8] sm:$0xff]
    %v28 = vld [vmem:[%s3 + $0x10] sm:$0xff]
    %v29 = vld [vmem:[%s3 + $0x18] sm:$0xff]
    %v30 = vld [vmem:[%s3 + $0x20] sm:$0xff]
    %v31 = vld [vmem:[%s3 + $0x28] sm:$0xff]
    %v32 = vld [vmem:[%s3 + $0x30] sm:$0xff]
    %v33 = vld [vmem:[%s3 + $0x38] sm:$0xff]
    %v34 = vld [vmem:[%s3 + $0x40] sm:$0xff]
    %v35 = vld [vmem:[%s3 + $0x48] sm:$0xff]
    %v36 = vld [vmem:[%s3 + $0x50] sm:$0xff]
    %v37 = vld [vmem:[%s3 + $0x58] sm:$0xff]
    %v38 = vld [vmem:[%s3 + $0x60] sm:$0xff]
    %v39 = vld [vmem:[%s3 + $0x68] sm:$0xff]
    %v40 = vld [vmem:[%s3 + $0x70] sm:$0xff]
    %v41 = vld [vmem:[%s3 + $0x78] sm:$0xff]
    %v42 = vld [vmem:[%s0] sm:$0xff]
    %v43 = vld [vmem:[%s0 + $0x8] sm:$0xff]
    %v44 = vld [vmem:[%s0 + $0x10] sm:$0xff]
    %v45 = vld [vmem:[%s0 + $0x18] sm:$0xff]
    %v46 = vld [vmem:[%s0 + $0x20] sm:$0xff]
    %v47 = vld [vmem:[%s0 + $0x28] sm:$0xff]
    %v48 = vld [vmem:[%s0 + $0x30] sm:$0xff]
    %v49 = vld [vmem:[%s0 + $0x38] sm:$0xff]
    %v50 = vld [vmem:[%s0 + $0x40] sm:$0xff]
    %v51 = vld [vmem:[%s0 + $0x48] sm:$0xff]
    %v52 = vld [vmem:[%s0 + $0x50] sm:$0xff]
    %v53 = vld [vmem:[%s0 + $0x58] sm:$0xff]
    %v54 = vld [vmem:[%s0 + $0x60] sm:$0xff]
    %v55 = vld [vmem:[%s0 + $0x68] sm:$0xff]
    %v56 = vld [vmem:[%s0 + $0x70] sm:$0xff]
    %v57 = vld [vmem:[%s0 + $0x78] sm:$0xff]
    %v58 = vld [vmem:[%s2] sm:$0xff]
    %v59 = vld [vmem:[%s2 + $0x8] sm:$0xff]
    %v60 = vld [vmem:[%s2 + $0x10] sm:$0xff]
    %v61 = vld [vmem:[%s2 + $0x18] sm:$0xff]
    %v62 = vld [vmem:[%s2 + $0x20] sm:$0xff]
    %v63 = vld [vmem:[%s2 + $0x28] sm:$0xff]
    %v64 = vld [vmem:[%s2 + $0x30] sm:$0xff]
    %v65 = vld [vmem:[%s2 + $0x38] sm:$0xff]
    %v66 = vld [vmem:[%s2 + $0x40] sm:$0xff]
    %v67 = vld [vmem:[%s2 + $0x48] sm:$0xff]
    %v68 = vld [vmem:[%s2 + $0x50] sm:$0xff]
    %v69 = vld [vmem:[%s2 + $0x58] sm:$0xff]
    %v70 = vld [vmem:[%s2 + $0x60] sm:$0xff]
    %v71 = vld [vmem:[%s2 + $0x68] sm:$0xff]
    %v72 = vld [vmem:[%s2 + $0x70] sm:$0xff]
    %v73 = vld [vmem:[%s2 + $0x78] sm:$0xff]
    %vm74 = vcmask 130048
    %v75 = vsel %vm74, %v26, -inf
    %76 = vmax.xlane.f32.xlu0 %v75
    %v77 = vpop.xlane.xlu0 %76
    %v78 = vsel %vm74, %v27, -inf
    %79 = vmax.xlane.f32.xlu0 %v78
    %v80 = vpop.xlane.xlu0 %79
    %v81 = vsel %vm74, %v28, -inf
    %82 = vmax.xlane.f32.xlu0 %v81
    %v83 = vpop.xlane.xlu0 %82
    %v84 = vsel %vm74, %v29, -inf
    %85 = vmax.xlane.f32.xlu0 %v84
    %v86 = vpop.xlane.xlu0 %85
    %v87 = vsel %vm74, %v30, -inf
    %88 = vmax.xlane.f32.xlu0 %v87
    %v89 = vpop.xlane.xlu0 %88
    %v90 = vsel %vm74, %v31, -inf
    %91 = vmax.xlane.f32.xlu0 %v90
    %v92 = vpop.xlane.xlu0 %91
    %v93 = vsel %vm74, %v32, -inf
    %94 = vmax.xlane.f32.xlu0 %v93
    %v95 = vpop.xlane.xlu0 %94
    %v96 = vsel %vm74, %v33, -inf
    %97 = vmax.xlane.f32.xlu0 %v96
    %v98 = vpop.xlane.xlu0 %97
    %v99 = vsel %vm74, %v34, -inf
    %100 = vmax.xlane.f32.xlu0 %v99
    %v101 = vpop.xlane.xlu0 %100
    %v102 = vsel %vm74, %v35, -inf
    %103 = vmax.xlane.f32.xlu0 %v102
    %v104 = vpop.xlane.xlu0 %103
    %v105 = vsel %vm74, %v36, -inf
    %106 = vmax.xlane.f32.xlu0 %v105
    %v107 = vpop.xlane.xlu0 %106
    %v108 = vsel %vm74, %v37, -inf
    %109 = vmax.xlane.f32.xlu0 %v108
    %v110 = vpop.xlane.xlu0 %109
    %v111 = vsel %vm74, %v38, -inf
    %112 = vmax.xlane.f32.xlu0 %v111
    %v113 = vpop.xlane.xlu0 %112
    %v114 = vsel %vm74, %v39, -inf
    %115 = vmax.xlane.f32.xlu0 %v114
    %v116 = vpop.xlane.xlu0 %115
    %v117 = vsel %vm74, %v40, -inf
    %118 = vmax.xlane.f32.xlu0 %v117
    %v119 = vpop.xlane.xlu0 %118
    %v120 = vsel %vm74, %v41, -inf
    %121 = vmax.xlane.f32.xlu0 %v120
    %v122 = vpop.xlane.xlu0 %121
    %v123 = vmax.f32 %v77, 0.0
    %v124 = vmax.f32 %v80, 0.0
    %v125 = vmax.f32 %v83, 0.0
    %v126 = vmax.f32 %v86, 0.0
    %v127 = vmax.f32 %v89, 0.0
    %v128 = vmax.f32 %v92, 0.0
    %v129 = vmax.f32 %v95, 0.0
    %v130 = vmax.f32 %v98, 0.0
    %v131 = vmax.f32 %v101, 0.0
    %v132 = vmax.f32 %v104, 0.0
    %v133 = vmax.f32 %v107, 0.0
    %v134 = vmax.f32 %v110, 0.0
    %v135 = vmax.f32 %v113, 0.0
    %v136 = vmax.f32 %v116, 0.0
    %v137 = vmax.f32 %v119, 0.0
    %v138 = vmax.f32 %v122, 0.0
    %v139 = vsub.f32 %v26, %v123
    %v140 = vsub.f32 %v27, %v124
    %v141 = vsub.f32 %v28, %v125
    %v142 = vsub.f32 %v29, %v126
    %v143 = vsub.f32 %v30, %v127
    %v144 = vsub.f32 %v31, %v128
    %v145 = vsub.f32 %v32, %v129
    %v146 = vsub.f32 %v33, %v130
    %v147 = vsub.f32 %v34, %v131
    %v148 = vsub.f32 %v35, %v132
    %v149 = vsub.f32 %v36, %v133
    %v150 = vsub.f32 %v37, %v134
    %v151 = vsub.f32 %v38, %v135
    %v152 = vsub.f32 %v39, %v136
    %v153 = vsub.f32 %v40, %v137
    %v154 = vsub.f32 %v41, %v138
    %v155 = vmul.f32 %v139, 1.442695
    %v156 = vpow.pop %v155
    %v157 = vmul.f32 %v140, 1.442695
    %v158 = vpow.pop %v157
    %v159 = vmul.f32 %v141, 1.442695
    %v160 = vpow.pop %v159
    %v161 = vmul.f32 %v142, 1.442695
    %v162 = vpow.pop %v161
    %v163 = vmul.f32 %v143, 1.442695
    %v164 = vpow.pop %v163
    %v165 = vmul.f32 %v144, 1.442695
    %v166 = vpow.pop %v165
    %v167 = vmul.f32 %v145, 1.442695
    %v168 = vpow.pop %v167
    %v169 = vmul.f32 %v146, 1.442695
    %v170 = vpow.pop %v169
    %v171 = vmul.f32 %v147, 1.442695
    %v172 = vpow.pop %v171
    %v173 = vmul.f32 %v148, 1.442695
    %v174 = vpow.pop %v173
    %v175 = vmul.f32 %v149, 1.442695
    %v176 = vpow.pop %v175
    %v177 = vmul.f32 %v150, 1.442695
    %v178 = vpow.pop %v177
    %v179 = vmul.f32 %v151, 1.442695
    %v180 = vpow.pop %v179
    %v181 = vmul.f32 %v152, 1.442695
    %v182 = vpow.pop %v181
    %v183 = vmul.f32 %v153, 1.442695
    %v184 = vpow.pop %v183
    %v185 = vmul.f32 %v154, 1.442695
    %v186 = vpow.pop %v185
    %v187 = vsel %vm74, %v156, 0.0
    %188 = vadd.xlane.f32.xlu0 %v187
    %v189 = vpop.xlane.xlu0 %188
    %v190 = vsel %vm74, %v158, 0.0
    %191 = vadd.xlane.f32.xlu0 %v190
    %v192 = vpop.xlane.xlu0 %191
    %v193 = vsel %vm74, %v160, 0.0
    %194 = vadd.xlane.f32.xlu0 %v193
    %v195 = vpop.xlane.xlu0 %194
    %v196 = vsel %vm74, %v162, 0.0
    %197 = vadd.xlane.f32.xlu0 %v196
    %v198 = vpop.xlane.xlu0 %197
    %v199 = vsel %vm74, %v164, 0.0
    %200 = vadd.xlane.f32.xlu0 %v199
    %v201 = vpop.xlane.xlu0 %200
    %v202 = vsel %vm74, %v166, 0.0
    %203 = vadd.xlane.f32.xlu0 %v202
    %v204 = vpop.xlane.xlu0 %203
    %v205 = vsel %vm74, %v168, 0.0
    %206 = vadd.xlane.f32.xlu0 %v205
    %v207 = vpop.xlane.xlu0 %206
    %v208 = vsel %vm74, %v170, 0.0
    %209 = vadd.xlane.f32.xlu0 %v208
    %v210 = vpop.xlane.xlu0 %209
    %v211 = vsel %vm74, %v172, 0.0
    %212 = vadd.xlane.f32.xlu0 %v211
    %v213 = vpop.xlane.xlu0 %212
    %v214 = vsel %vm74, %v174, 0.0
    %215 = vadd.xlane.f32.xlu0 %v214
    %v216 = vpop.xlane.xlu0 %215
    %v217 = vsel %vm74, %v176, 0.0
    %218 = vadd.xlane.f32.xlu0 %v217
    %v219 = vpop.xlane.xlu0 %218
    %v220 = vsel %vm74, %v178, 0.0
    %221 = vadd.xlane.f32.xlu0 %v220
    %v222 = vpop.xlane.xlu0 %221
    %v223 = vsel %vm74, %v180, 0.0
    %224 = vadd.xlane.f32.xlu0 %v223
    %v225 = vpop.xlane.xlu0 %224
    %v226 = vsel %vm74, %v182, 0.0
    %227 = vadd.xlane.f32.xlu0 %v226
    %v228 = vpop.xlane.xlu0 %227
    %v229 = vsel %vm74, %v184, 0.0
    %230 = vadd.xlane.f32.xlu0 %v229
    %v231 = vpop.xlane.xlu0 %230
    %v232 = vsel %vm74, %v186, 0.0
    %233 = vadd.xlane.f32.xlu0 %v232
    %v234 = vpop.xlane.xlu0 %233
    %v235 = vsub.f32 0.0, %v123
    %v236 = vsub.f32 0.0, %v124
    %v237 = vsub.f32 0.0, %v125
    %v238 = vsub.f32 0.0, %v126
    %v239 = vsub.f32 0.0, %v127
    %v240 = vsub.f32 0.0, %v128
    %v241 = vsub.f32 0.0, %v129
    %v242 = vsub.f32 0.0, %v130
    %v243 = vsub.f32 0.0, %v131
    %v244 = vsub.f32 0.0, %v132
    %v245 = vsub.f32 0.0, %v133
    %v246 = vsub.f32 0.0, %v134
    %v247 = vsub.f32 0.0, %v135
    %v248 = vsub.f32 0.0, %v136
    %v249 = vsub.f32 0.0, %v137
    %v250 = vsub.f32 0.0, %v138
    %v251 = vmul.f32 %v235, 1.442695
    %v252 = vpow.pop %v251
    %v253 = vmul.f32 %v236, 1.442695
    %v254 = vpow.pop %v253
    %v255 = vmul.f32 %v237, 1.442695
    %v256 = vpow.pop %v255
    %v257 = vmul.f32 %v238, 1.442695
    %v258 = vpow.pop %v257
    %v259 = vmul.f32 %v239, 1.442695
    %v260 = vpow.pop %v259
    %v261 = vmul.f32 %v240, 1.442695
    %v262 = vpow.pop %v261
    %v263 = vmul.f32 %v241, 1.442695
    %v264 = vpow.pop %v263
    %v265 = vmul.f32 %v242, 1.442695
    %v266 = vpow.pop %v265
    %v267 = vmul.f32 %v243, 1.442695
    %v268 = vpow.pop %v267
    %v269 = vmul.f32 %v244, 1.442695
    %v270 = vpow.pop %v269
    %v271 = vmul.f32 %v245, 1.442695
    %v272 = vpow.pop %v271
    %v273 = vmul.f32 %v246, 1.442695
    %v274 = vpow.pop %v273
    %v275 = vmul.f32 %v247, 1.442695
    %v276 = vpow.pop %v275
    %v277 = vmul.f32 %v248, 1.442695
    %v278 = vpow.pop %v277
    %v279 = vmul.f32 %v249, 1.442695
    %v280 = vpow.pop %v279
    %v281 = vmul.f32 %v250, 1.442695
    %v282 = vpow.pop %v281
    %v283 = vadd.f32 %v189, %v252
    %v284 = vadd.f32 %v192, %v254
    %v285 = vadd.f32 %v195, %v256
    %v286 = vadd.f32 %v198, %v258
    %v287 = vadd.f32 %v201, %v260
    %v288 = vadd.f32 %v204, %v262
    %v289 = vadd.f32 %v207, %v264
    %v290 = vadd.f32 %v210, %v266
    %v291 = vadd.f32 %v213, %v268
    %v292 = vadd.f32 %v216, %v270
    %v293 = vadd.f32 %v219, %v272
    %v294 = vadd.f32 %v222, %v274
    %v295 = vadd.f32 %v225, %v276
    %v296 = vadd.f32 %v228, %v278
    %v297 = vadd.f32 %v231, %v280
    %v298 = vadd.f32 %v234, %v282
    %v299 = vrcp.pop %v283
    %v300 = vmul.f32 1.0, %v299
    %v301 = vrcp.pop %v284
    %v302 = vmul.f32 1.0, %v301
    %v303 = vrcp.pop %v285
    %v304 = vmul.f32 1.0, %v303
    %v305 = vrcp.pop %v286
    %v306 = vmul.f32 1.0, %v305
    %v307 = vrcp.pop %v287
    %v308 = vmul.f32 1.0, %v307
    %v309 = vrcp.pop %v288
    %v310 = vmul.f32 1.0, %v309
    %v311 = vrcp.pop %v289
    %v312 = vmul.f32 1.0, %v311
    %v313 = vrcp.pop %v290
    %v314 = vmul.f32 1.0, %v313
    %v315 = vrcp.pop %v291
    %v316 = vmul.f32 1.0, %v315
    %v317 = vrcp.pop %v292
    %v318 = vmul.f32 1.0, %v317
    %v319 = vrcp.pop %v293
    %v320 = vmul.f32 1.0, %v319
    %v321 = vrcp.pop %v294
    %v322 = vmul.f32 1.0, %v321
    %v323 = vrcp.pop %v295
    %v324 = vmul.f32 1.0, %v323
    %v325 = vrcp.pop %v296
    %v326 = vmul.f32 1.0, %v325
    %v327 = vrcp.pop %v297
    %v328 = vmul.f32 1.0, %v327
    %v329 = vrcp.pop %v298
    %v330 = vmul.f32 1.0, %v329
    %v331 = vlaneseq
    %v332 = vand.u32 %v331, 127
    %333 = vset.pattern.permute.xlu0 0
    %334 = vperm.xlu0 %333, %v42
    %v335 = vpop.permute.xlu0 %334
    %336 = vset.pattern.permute.xlu0 0
    %337 = vperm.xlu0 %336, %v43
    %v338 = vpop.permute.xlu0 %337
    %339 = vset.pattern.permute.xlu0 0
    %340 = vperm.xlu0 %339, %v44
    %v341 = vpop.permute.xlu0 %340
    %342 = vset.pattern.permute.xlu0 0
    %343 = vperm.xlu0 %342, %v45
    %v344 = vpop.permute.xlu0 %343
    %345 = vset.pattern.permute.xlu0 0
    %346 = vperm.xlu0 %345, %v46
    %v347 = vpop.permute.xlu0 %346
    %348 = vset.pattern.permute.xlu0 0
    %349 = vperm.xlu0 %348, %v47
    %v350 = vpop.permute.xlu0 %349
    %351 = vset.pattern.permute.xlu0 0
    %352 = vperm.xlu0 %351, %v48
    %v353 = vpop.permute.xlu0 %352
    %354 = vset.pattern.permute.xlu0 0
    %355 = vperm.xlu0 %354, %v49
    %v356 = vpop.permute.xlu0 %355
    %357 = vset.pattern.permute.xlu0 0
    %358 = vperm.xlu0 %357, %v50
    %v359 = vpop.permute.xlu0 %358
    %360 = vset.pattern.permute.xlu0 0
    %361 = vperm.xlu0 %360, %v51
    %v362 = vpop.permute.xlu0 %361
    %363 = vset.pattern.permute.xlu0 0
    %364 = vperm.xlu0 %363, %v52
    %v365 = vpop.permute.xlu0 %364
    %366 = vset.pattern.permute.xlu0 0
    %367 = vperm.xlu0 %366, %v53
    %v368 = vpop.permute.xlu0 %367
    %369 = vset.pattern.permute.xlu0 0
    %370 = vperm.xlu0 %369, %v54
    %v371 = vpop.permute.xlu0 %370
    %372 = vset.pattern.permute.xlu0 0
    %373 = vperm.xlu0 %372, %v55
    %v374 = vpop.permute.xlu0 %373
    %375 = vset.pattern.permute.xlu0 0
    %376 = vperm.xlu0 %375, %v56
    %v377 = vpop.permute.xlu0 %376
    %378 = vset.pattern.permute.xlu0 0
    %379 = vperm.xlu0 %378, %v57
    %v380 = vpop.permute.xlu0 %379
    %vm381 = vcmp.le.s32.totalorder %v332, %v335
    %vm382 = vcmp.le.s32.totalorder %v332, %v338
    %vm383 = vcmp.le.s32.totalorder %v332, %v341
    %vm384 = vcmp.le.s32.totalorder %v332, %v344
    %vm385 = vcmp.le.s32.totalorder %v332, %v347
    %vm386 = vcmp.le.s32.totalorder %v332, %v350
    %vm387 = vcmp.le.s32.totalorder %v332, %v353
    %vm388 = vcmp.le.s32.totalorder %v332, %v356
    %vm389 = vcmp.le.s32.totalorder %v332, %v359
    %vm390 = vcmp.le.s32.totalorder %v332, %v362
    %vm391 = vcmp.le.s32.totalorder %v332, %v365
    %vm392 = vcmp.le.s32.totalorder %v332, %v368
    %vm393 = vcmp.le.s32.totalorder %v332, %v371
    %vm394 = vcmp.le.s32.totalorder %v332, %v374
    %vm395 = vcmp.le.s32.totalorder %v332, %v377
    %vm396 = vcmp.le.s32.totalorder %v332, %v380
    %v397 = vsel %vm381, 1, 0
    %v398 = vsel %vm382, 1, 0
    %v399 = vsel %vm383, 1, 0
    %v400 = vsel %vm384, 1, 0
    %v401 = vsel %vm385, 1, 0
    %v402 = vsel %vm386, 1, 0
    %v403 = vsel %vm387, 1, 0
    %v404 = vsel %vm388, 1, 0
    %v405 = vsel %vm389, 1, 0
    %v406 = vsel %vm390, 1, 0
    %v407 = vsel %vm391, 1, 0
    %v408 = vsel %vm392, 1, 0
    %v409 = vsel %vm393, 1, 0
    %v410 = vsel %vm394, 1, 0
    %v411 = vsel %vm395, 1, 0
    %v412 = vsel %vm396, 1, 0
    %v413 = vcvt.s32.f32 %v397
    %v414 = vcvt.s32.f32 %v398
    %v415 = vcvt.s32.f32 %v399
    %v416 = vcvt.s32.f32 %v400
    %v417 = vcvt.s32.f32 %v401
    %v418 = vcvt.s32.f32 %v402
    %v419 = vcvt.s32.f32 %v403
    %v420 = vcvt.s32.f32 %v404
    %v421 = vcvt.s32.f32 %v405
    %v422 = vcvt.s32.f32 %v406
    %v423 = vcvt.s32.f32 %v407
    %v424 = vcvt.s32.f32 %v408
    %v425 = vcvt.s32.f32 %v409
    %v426 = vcvt.s32.f32 %v410
    %v427 = vcvt.s32.f32 %v411
    %v428 = vcvt.s32.f32 %v412
    %429 = vst.msk [vmem:[#allocation2] sm:$0xff] %vm74, %v413
    %430 = vst.msk [vmem:[#allocation2 + $0x8] sm:$0xff] %vm74, %v414
    %431 = vst.msk [vmem:[#allocation2 + $0x10] sm:$0xff] %vm74, %v415
    %432 = vst.msk [vmem:[#allocation2 + $0x18] sm:$0xff] %vm74, %v416
    %433 = vst.msk [vmem:[#allocation2 + $0x20] sm:$0xff] %vm74, %v417
    %434 = vst.msk [vmem:[#allocation2 + $0x28] sm:$0xff] %vm74, %v418
    %435 = vst.msk [vmem:[#allocation2 + $0x30] sm:$0xff] %vm74, %v419
    %436 = vst.msk [vmem:[#allocation2 + $0x38] sm:$0xff] %vm74, %v420
    %437 = vst.msk [vmem:[#allocation2 + $0x40] sm:$0xff] %vm74, %v421
    %438 = vst.msk [vmem:[#allocation2 + $0x48] sm:$0xff] %vm74, %v422
    %439 = vst.msk [vmem:[#allocation2 + $0x50] sm:$0xff] %vm74, %v423
    %440 = vst.msk [vmem:[#allocation2 + $0x58] sm:$0xff] %vm74, %v424
    %441 = vst.msk [vmem:[#allocation2 + $0x60] sm:$0xff] %vm74, %v425
    %442 = vst.msk [vmem:[#allocation2 + $0x68] sm:$0xff] %vm74, %v426
    %443 = vst.msk [vmem:[#allocation2 + $0x70] sm:$0xff] %vm74, %v427
    %444 = vst.msk [vmem:[#allocation2 + $0x78] sm:$0xff] %vm74, %v428
    %vm445 = vcmp.eq.s32.totalorder %v332, %v335
    %vm446 = vcmp.eq.s32.totalorder %v332, %v338
    %vm447 = vcmp.eq.s32.totalorder %v332, %v341
    %vm448 = vcmp.eq.s32.totalorder %v332, %v344
    %vm449 = vcmp.eq.s32.totalorder %v332, %v347
    %vm450 = vcmp.eq.s32.totalorder %v332, %v350
    %vm451 = vcmp.eq.s32.totalorder %v332, %v353
    %vm452 = vcmp.eq.s32.totalorder %v332, %v356
    %vm453 = vcmp.eq.s32.totalorder %v332, %v359
    %vm454 = vcmp.eq.s32.totalorder %v332, %v362
    %vm455 = vcmp.eq.s32.totalorder %v332, %v365
    %vm456 = vcmp.eq.s32.totalorder %v332, %v368
    %vm457 = vcmp.eq.s32.totalorder %v332, %v371
    %vm458 = vcmp.eq.s32.totalorder %v332, %v374
    %vm459 = vcmp.eq.s32.totalorder %v332, %v377
    %vm460 = vcmp.eq.s32.totalorder %v332, %v380
    %v461 = vmul.f32 %v413, %v156
    %v462 = vmul.f32 %v414, %v158
    %v463 = vmul.f32 %v415, %v160
    %v464 = vmul.f32 %v416, %v162
    %v465 = vmul.f32 %v417, %v164
    %v466 = vmul.f32 %v418, %v166
    %v467 = vmul.f32 %v419, %v168
    %v468 = vmul.f32 %v420, %v170
    %v469 = vmul.f32 %v421, %v172
    %v470 = vmul.f32 %v422, %v174
    %v471 = vmul.f32 %v423, %v176
    %v472 = vmul.f32 %v424, %v178
    %v473 = vmul.f32 %v425, %v180
    %v474 = vmul.f32 %v426, %v182
    %v475 = vmul.f32 %v427, %v184
    %v476 = vmul.f32 %v428, %v186
    %v477 = vsel %vm74, %v461, 0.0
    %478 = vadd.xlane.f32.xlu0 %v477
    %v479 = vpop.xlane.xlu0 %478
    %v480 = vsel %vm74, %v462, 0.0
    %481 = vadd.xlane.f32.xlu0 %v480
    %v482 = vpop.xlane.xlu0 %481
    %v483 = vsel %vm74, %v463, 0.0
    %484 = vadd.xlane.f32.xlu0 %v483
    %v485 = vpop.xlane.xlu0 %484
    %v486 = vsel %vm74, %v464, 0.0
    %487 = vadd.xlane.f32.xlu0 %v486
    %v488 = vpop.xlane.xlu0 %487
    %v489 = vsel %vm74, %v465, 0.0
    %490 = vadd.xlane.f32.xlu0 %v489
    %v491 = vpop.xlane.xlu0 %490
    %v492 = vsel %vm74, %v466, 0.0
    %493 = vadd.xlane.f32.xlu0 %v492
    %v494 = vpop.xlane.xlu0 %493
    %v495 = vsel %vm74, %v467, 0.0
    %496 = vadd.xlane.f32.xlu0 %v495
    %v497 = vpop.xlane.xlu0 %496
    %v498 = vsel %vm74, %v468, 0.0
    %499 = vadd.xlane.f32.xlu0 %v498
    %v500 = vpop.xlane.xlu0 %499
    %v501 = vsel %vm74, %v469, 0.0
    %502 = vadd.xlane.f32.xlu0 %v501
    %v503 = vpop.xlane.xlu0 %502
    %v504 = vsel %vm74, %v470, 0.0
    %505 = vadd.xlane.f32.xlu0 %v504
    %v506 = vpop.xlane.xlu0 %505
    %v507 = vsel %vm74, %v471, 0.0
    %508 = vadd.xlane.f32.xlu0 %v507
    %v509 = vpop.xlane.xlu0 %508
    %v510 = vsel %vm74, %v472, 0.0
    %511 = vadd.xlane.f32.xlu0 %v510
    %v512 = vpop.xlane.xlu0 %511
    %v513 = vsel %vm74, %v473, 0.0
    %514 = vadd.xlane.f32.xlu0 %v513
    %v515 = vpop.xlane.xlu0 %514
    %v516 = vsel %vm74, %v474, 0.0
    %517 = vadd.xlane.f32.xlu0 %v516
    %v518 = vpop.xlane.xlu0 %517
    %v519 = vsel %vm74, %v475, 0.0
    %520 = vadd.xlane.f32.xlu0 %v519
    %v521 = vpop.xlane.xlu0 %520
    %v522 = vsel %vm74, %v476, 0.0
    %523 = vadd.xlane.f32.xlu0 %v522
    %v524 = vpop.xlane.xlu0 %523
    %v525 = vsel %vm445, %v26, 0.0
    %v526 = vsel %vm446, %v27, 0.0
    %v527 = vsel %vm447, %v28, 0.0
    %v528 = vsel %vm448, %v29, 0.0
    %v529 = vsel %vm449, %v30, 0.0
    %v530 = vsel %vm450, %v31, 0.0
    %v531 = vsel %vm451, %v32, 0.0
    %v532 = vsel %vm452, %v33, 0.0
    %v533 = vsel %vm453, %v34, 0.0
    %v534 = vsel %vm454, %v35, 0.0
    %v535 = vsel %vm455, %v36, 0.0
    %v536 = vsel %vm456, %v37, 0.0
    %v537 = vsel %vm457, %v38, 0.0
    %v538 = vsel %vm458, %v39, 0.0
    %v539 = vsel %vm459, %v40, 0.0
    %v540 = vsel %vm460, %v41, 0.0
    %v541 = vsel %vm74, %v525, 0.0
    %542 = vadd.xlane.f32.xlu0 %v541
    %v543 = vpop.xlane.xlu0 %542
    %v544 = vsel %vm74, %v526, 0.0
    %545 = vadd.xlane.f32.xlu0 %v544
    %v546 = vpop.xlane.xlu0 %545
    %v547 = vsel %vm74, %v527, 0.0
    %548 = vadd.xlane.f32.xlu0 %v547
    %v549 = vpop.xlane.xlu0 %548
    %v550 = vsel %vm74, %v528, 0.0
    %551 = vadd.xlane.f32.xlu0 %v550
    %v552 = vpop.xlane.xlu0 %551
    %v553 = vsel %vm74, %v529, 0.0
    %554 = vadd.xlane.f32.xlu0 %v553
    %v555 = vpop.xlane.xlu0 %554
    %v556 = vsel %vm74, %v530, 0.0
    %557 = vadd.xlane.f32.xlu0 %v556
    %v558 = vpop.xlane.xlu0 %557
    %v559 = vsel %vm74, %v531, 0.0
    %560 = vadd.xlane.f32.xlu0 %v559
    %v561 = vpop.xlane.xlu0 %560
    %v562 = vsel %vm74, %v532, 0.0
    %563 = vadd.xlane.f32.xlu0 %v562
    %v564 = vpop.xlane.xlu0 %563
    %v565 = vsel %vm74, %v533, 0.0
    %566 = vadd.xlane.f32.xlu0 %v565
    %v567 = vpop.xlane.xlu0 %566
    %v568 = vsel %vm74, %v534, 0.0
    %569 = vadd.xlane.f32.xlu0 %v568
    %v570 = vpop.xlane.xlu0 %569
    %v571 = vsel %vm74, %v535, 0.0
    %572 = vadd.xlane.f32.xlu0 %v571
    %v573 = vpop.xlane.xlu0 %572
    %v574 = vsel %vm74, %v536, 0.0
    %575 = vadd.xlane.f32.xlu0 %v574
    %v576 = vpop.xlane.xlu0 %575
    %v577 = vsel %vm74, %v537, 0.0
    %578 = vadd.xlane.f32.xlu0 %v577
    %v579 = vpop.xlane.xlu0 %578
    %v580 = vsel %vm74, %v538, 0.0
    %581 = vadd.xlane.f32.xlu0 %v580
    %v582 = vpop.xlane.xlu0 %581
    %v583 = vsel %vm74, %v539, 0.0
    %584 = vadd.xlane.f32.xlu0 %v583
    %v585 = vpop.xlane.xlu0 %584
    %v586 = vsel %vm74, %v540, 0.0
    %587 = vadd.xlane.f32.xlu0 %v586
    %v588 = vpop.xlane.xlu0 %587
    %v589 = vmul.f32 %v479, %v300
    %v590 = vmul.f32 %v482, %v302
    %v591 = vmul.f32 %v485, %v304
    %v592 = vmul.f32 %v488, %v306
    %v593 = vmul.f32 %v491, %v308
    %v594 = vmul.f32 %v494, %v310
    %v595 = vmul.f32 %v497, %v312
    %v596 = vmul.f32 %v500, %v314
    %v597 = vmul.f32 %v503, %v316
    %v598 = vmul.f32 %v506, %v318
    %v599 = vmul.f32 %v509, %v320
    %v600 = vmul.f32 %v512, %v322
    %v601 = vmul.f32 %v515, %v324
    %v602 = vmul.f32 %v518, %v326
    %v603 = vmul.f32 %v521, %v328
    %v604 = vmul.f32 %v524, %v330
    %v605 = vsub.f32 %v543, %v123
    %v606 = vsub.f32 %v546, %v124
    %v607 = vsub.f32 %v549, %v125
    %v608 = vsub.f32 %v552, %v126
    %v609 = vsub.f32 %v555, %v127
    %v610 = vsub.f32 %v558, %v128
    %v611 = vsub.f32 %v561, %v129
    %v612 = vsub.f32 %v564, %v130
    %v613 = vsub.f32 %v567, %v131
    %v614 = vsub.f32 %v570, %v132
    %v615 = vsub.f32 %v573, %v133
    %v616 = vsub.f32 %v576, %v134
    %v617 = vsub.f32 %v579, %v135
    %v618 = vsub.f32 %v582, %v136
    %v619 = vsub.f32 %v585, %v137
    %v620 = vsub.f32 %v588, %v138
    %v621 = vmul.f32 %v605, %v58
    %v622 = vmul.f32 %v606, %v59
    %v623 = vmul.f32 %v607, %v60
    %v624 = vmul.f32 %v608, %v61
    %v625 = vmul.f32 %v609, %v62
    %v626 = vmul.f32 %v610, %v63
    %v627 = vmul.f32 %v611, %v64
    %v628 = vmul.f32 %v612, %v65
    %v629 = vmul.f32 %v613, %v66
    %v630 = vmul.f32 %v614, %v67
    %v631 = vmul.f32 %v615, %v68
    %v632 = vmul.f32 %v616, %v69
    %v633 = vmul.f32 %v617, %v70
    %v634 = vmul.f32 %v618, %v71
    %v635 = vmul.f32 %v619, %v72
    %v636 = vmul.f32 %v620, %v73
    %v637 = vadd.f32 %v283, 1e-07
    %v638 = vadd.f32 %v284, 1e-07
    %v639 = vadd.f32 %v285, 1e-07
    %v640 = vadd.f32 %v286, 1e-07
    %v641 = vadd.f32 %v287, 1e-07
    %v642 = vadd.f32 %v288, 1e-07
    %v643 = vadd.f32 %v289, 1e-07
    %v644 = vadd.f32 %v290, 1e-07
    %v645 = vadd.f32 %v291, 1e-07
    %v646 = vadd.f32 %v292, 1e-07
    %v647 = vadd.f32 %v293, 1e-07
    %v648 = vadd.f32 %v294, 1e-07
    %v649 = vadd.f32 %v295, 1e-07
    %v650 = vadd.f32 %v296, 1e-07
    %v651 = vadd.f32 %v297, 1e-07
    %v652 = vadd.f32 %v298, 1e-07
    %v653 = vlog2.pop %v637
    %v654 = vmul.f32 %v653, 0.6931472
    %v655 = vlog2.pop %v638
    %v656 = vmul.f32 %v655, 0.6931472
    %v657 = vlog2.pop %v639
    %v658 = vmul.f32 %v657, 0.6931472
    %v659 = vlog2.pop %v640
    %v660 = vmul.f32 %v659, 0.6931472
    %v661 = vlog2.pop %v641
    %v662 = vmul.f32 %v661, 0.6931472
    %v663 = vlog2.pop %v642
    %v664 = vmul.f32 %v663, 0.6931472
    %v665 = vlog2.pop %v643
    %v666 = vmul.f32 %v665, 0.6931472
    %v667 = vlog2.pop %v644
    %v668 = vmul.f32 %v667, 0.6931472
    %v669 = vlog2.pop %v645
    %v670 = vmul.f32 %v669, 0.6931472
    %v671 = vlog2.pop %v646
    %v672 = vmul.f32 %v671, 0.6931472
    %v673 = vlog2.pop %v647
    %v674 = vmul.f32 %v673, 0.6931472
    %v675 = vlog2.pop %v648
    %v676 = vmul.f32 %v675, 0.6931472
    %v677 = vlog2.pop %v649
    %v678 = vmul.f32 %v677, 0.6931472
    %v679 = vlog2.pop %v650
    %v680 = vmul.f32 %v679, 0.6931472
    %v681 = vlog2.pop %v651
    %v682 = vmul.f32 %v681, 0.6931472
    %v683 = vlog2.pop %v652
    %v684 = vmul.f32 %v683, 0.6931472
    %v685 = vsub.f32 0.0, %v654
    %v686 = vsub.f32 0.0, %v656
    %v687 = vsub.f32 0.0, %v658
    %v688 = vsub.f32 0.0, %v660
    %v689 = vsub.f32 0.0, %v662
    %v690 = vsub.f32 0.0, %v664
    %v691 = vsub.f32 0.0, %v666
    %v692 = vsub.f32 0.0, %v668
    %v693 = vsub.f32 0.0, %v670
    %v694 = vsub.f32 0.0, %v672
    %v695 = vsub.f32 0.0, %v674
    %v696 = vsub.f32 0.0, %v676
    %v697 = vsub.f32 0.0, %v678
    %v698 = vsub.f32 0.0, %v680
    %v699 = vsub.f32 0.0, %v682
    %v700 = vsub.f32 0.0, %v684
    %v701 = vsub.f32 %v283, %v479
    %v702 = vsub.f32 %v284, %v482
    %v703 = vsub.f32 %v285, %v485
    %v704 = vsub.f32 %v286, %v488
    %v705 = vsub.f32 %v287, %v491
    %v706 = vsub.f32 %v288, %v494
    %v707 = vsub.f32 %v289, %v497
    %v708 = vsub.f32 %v290, %v500
    %v709 = vsub.f32 %v291, %v503
    %v710 = vsub.f32 %v292, %v506
    %v711 = vsub.f32 %v293, %v509
    %v712 = vsub.f32 %v294, %v512
    %v713 = vsub.f32 %v295, %v515
    %v714 = vsub.f32 %v296, %v518
    %v715 = vsub.f32 %v297, %v521
    %v716 = vsub.f32 %v298, %v524
    %v717 = vmax.f32 %v701, 0.0
    %v718 = vmax.f32 %v702, 0.0
    %v719 = vmax.f32 %v703, 0.0
    %v720 = vmax.f32 %v704, 0.0
    %v721 = vmax.f32 %v705, 0.0
    %v722 = vmax.f32 %v706, 0.0
    %v723 = vmax.f32 %v707, 0.0
    %v724 = vmax.f32 %v708, 0.0
    %v725 = vmax.f32 %v709, 0.0
    %v726 = vmax.f32 %v710, 0.0
    %v727 = vmax.f32 %v711, 0.0
    %v728 = vmax.f32 %v712, 0.0
    %v729 = vmax.f32 %v713, 0.0
    %v730 = vmax.f32 %v714, 0.0
    %v731 = vmax.f32 %v715, 0.0
    %v732 = vmax.f32 %v716, 0.0
    %v733 = vadd.f32 %v717, 1e-07
    %v734 = vadd.f32 %v718, 1e-07
    %v735 = vadd.f32 %v719, 1e-07
    %v736 = vadd.f32 %v720, 1e-07
    %v737 = vadd.f32 %v721, 1e-07
    %v738 = vadd.f32 %v722, 1e-07
    %v739 = vadd.f32 %v723, 1e-07
    %v740 = vadd.f32 %v724, 1e-07
    %v741 = vadd.f32 %v725, 1e-07
    %v742 = vadd.f32 %v726, 1e-07
    %v743 = vadd.f32 %v727, 1e-07
    %v744 = vadd.f32 %v728, 1e-07
    %v745 = vadd.f32 %v729, 1e-07
    %v746 = vadd.f32 %v730, 1e-07
    %v747 = vadd.f32 %v731, 1e-07
    %v748 = vadd.f32 %v732, 1e-07
    %v749 = vlog2.pop %v733
    %v750 = vmul.f32 %v749, 0.6931472
    %v751 = vlog2.pop %v734
    %v752 = vmul.f32 %v751, 0.6931472
    %v753 = vlog2.pop %v735
    %v754 = vmul.f32 %v753, 0.6931472
    %v755 = vlog2.pop %v736
    %v756 = vmul.f32 %v755, 0.6931472
    %v757 = vlog2.pop %v737
    %v758 = vmul.f32 %v757, 0.6931472
    %v759 = vlog2.pop %v738
    %v760 = vmul.f32 %v759, 0.6931472
    %v761 = vlog2.pop %v739
    %v762 = vmul.f32 %v761, 0.6931472
    %v763 = vlog2.pop %v740
    %v764 = vmul.f32 %v763, 0.6931472
    %v765 = vlog2.pop %v741
    %v766 = vmul.f32 %v765, 0.6931472
    %v767 = vlog2.pop %v742
    %v768 = vmul.f32 %v767, 0.6931472
    %v769 = vlog2.pop %v743
    %v770 = vmul.f32 %v769, 0.6931472
    %v771 = vlog2.pop %v744
    %v772 = vmul.f32 %v771, 0.6931472
    %v773 = vlog2.pop %v745
    %v774 = vmul.f32 %v773, 0.6931472
    %v775 = vlog2.pop %v746
    %v776 = vmul.f32 %v775, 0.6931472
    %v777 = vlog2.pop %v747
    %v778 = vmul.f32 %v777, 0.6931472
    %v779 = vlog2.pop %v748
    %v780 = vmul.f32 %v779, 0.6931472
    %v781 = vsub.f32 1.0, %v58
    %v782 = vsub.f32 1.0, %v59
    %v783 = vsub.f32 1.0, %v60
    %v784 = vsub.f32 1.0, %v61
    %v785 = vsub.f32 1.0, %v62
    %v786 = vsub.f32 1.0, %v63
    %v787 = vsub.f32 1.0, %v64
    %v788 = vsub.f32 1.0, %v65
    %v789 = vsub.f32 1.0, %v66
    %v790 = vsub.f32 1.0, %v67
    %v791 = vsub.f32 1.0, %v68
    %v792 = vsub.f32 1.0, %v69
    %v793 = vsub.f32 1.0, %v70
    %v794 = vsub.f32 1.0, %v71
    %v795 = vsub.f32 1.0, %v72
    %v796 = vsub.f32 1.0, %v73
    %v797 = vmul.f32 %v750, %v781
    %v798 = vmul.f32 %v752, %v782
    %v799 = vmul.f32 %v754, %v783
    %v800 = vmul.f32 %v756, %v784
    %v801 = vmul.f32 %v758, %v785
    %v802 = vmul.f32 %v760, %v786
    %v803 = vmul.f32 %v762, %v787
    %v804 = vmul.f32 %v764, %v788
    %v805 = vmul.f32 %v766, %v789
    %v806 = vmul.f32 %v768, %v790
    %v807 = vmul.f32 %v770, %v791
    %v808 = vmul.f32 %v772, %v792
    %v809 = vmul.f32 %v774, %v793
    %v810 = vmul.f32 %v776, %v794
    %v811 = vmul.f32 %v778, %v795
    %v812 = vmul.f32 %v780, %v796
    %v813 = vadd.f32 %v621, %v685
    %v814 = vadd.f32 %v622, %v686
    %v815 = vadd.f32 %v623, %v687
    %v816 = vadd.f32 %v624, %v688
    %v817 = vadd.f32 %v625, %v689
    %v818 = vadd.f32 %v626, %v690
    %v819 = vadd.f32 %v627, %v691
    %v820 = vadd.f32 %v628, %v692
    %v821 = vadd.f32 %v629, %v693
    %v822 = vadd.f32 %v630, %v694
    %v823 = vadd.f32 %v631, %v695
    %v824 = vadd.f32 %v632, %v696
    %v825 = vadd.f32 %v633, %v697
    %v826 = vadd.f32 %v634, %v698
    %v827 = vadd.f32 %v635, %v699
    %v828 = vadd.f32 %v636, %v700
    %v829 = vadd.f32 %v813, %v797
    %v830 = vadd.f32 %v814, %v798
    %v831 = vadd.f32 %v815, %v799
    %v832 = vadd.f32 %v816, %v800
    %v833 = vadd.f32 %v817, %v801
    %v834 = vadd.f32 %v818, %v802
    %v835 = vadd.f32 %v819, %v803
    %v836 = vadd.f32 %v820, %v804
    %v837 = vadd.f32 %v821, %v805
    %v838 = vadd.f32 %v822, %v806
    %v839 = vadd.f32 %v823, %v807
    %v840 = vadd.f32 %v824, %v808
    %v841 = vadd.f32 %v825, %v809
    %v842 = vadd.f32 %v826, %v810
    %v843 = vadd.f32 %v827, %v811
    %v844 = vadd.f32 %v828, %v812
    %v845 = vsub.f32 0.0, %v829
    %v846 = vsub.f32 0.0, %v830
    %v847 = vsub.f32 0.0, %v831
    %v848 = vsub.f32 0.0, %v832
    %v849 = vsub.f32 0.0, %v833
    %v850 = vsub.f32 0.0, %v834
    %v851 = vsub.f32 0.0, %v835
    %v852 = vsub.f32 0.0, %v836
    %v853 = vsub.f32 0.0, %v837
    %v854 = vsub.f32 0.0, %v838
    %v855 = vsub.f32 0.0, %v839
    %v856 = vsub.f32 0.0, %v840
    %v857 = vsub.f32 0.0, %v841
    %v858 = vsub.f32 0.0, %v842
    %v859 = vsub.f32 0.0, %v843
    %v860 = vsub.f32 0.0, %v844
    %vm861 = vcmask 7168
    %862 = vst.msk [vmem:[%s5] sm:$0xff] %vm861, %v845
    %863 = vst.msk [vmem:[%s5 + $0x8] sm:$0xff] %vm861, %v846
    %864 = vst.msk [vmem:[%s5 + $0x10] sm:$0xff] %vm861, %v847
    %865 = vst.msk [vmem:[%s5 + $0x18] sm:$0xff] %vm861, %v848
    %866 = vst.msk [vmem:[%s5 + $0x20] sm:$0xff] %vm861, %v849
    %867 = vst.msk [vmem:[%s5 + $0x28] sm:$0xff] %vm861, %v850
    %868 = vst.msk [vmem:[%s5 + $0x30] sm:$0xff] %vm861, %v851
    %869 = vst.msk [vmem:[%s5 + $0x38] sm:$0xff] %vm861, %v852
    %870 = vst.msk [vmem:[%s5 + $0x40] sm:$0xff] %vm861, %v853
    %871 = vst.msk [vmem:[%s5 + $0x48] sm:$0xff] %vm861, %v854
    %872 = vst.msk [vmem:[%s5 + $0x50] sm:$0xff] %vm861, %v855
    %873 = vst.msk [vmem:[%s5 + $0x58] sm:$0xff] %vm861, %v856
    %874 = vst.msk [vmem:[%s5 + $0x60] sm:$0xff] %vm861, %v857
    %875 = vst.msk [vmem:[%s5 + $0x68] sm:$0xff] %vm861, %v858
    %876 = vst.msk [vmem:[%s5 + $0x70] sm:$0xff] %vm861, %v859
    %877 = vst.msk [vmem:[%s5 + $0x78] sm:$0xff] %vm861, %v860
    %vm878 = vcmp.ne.f32.partialorder %v58, 0.0
    %vm879 = vcmp.ne.f32.partialorder %v59, 0.0
    %vm880 = vcmp.ne.f32.partialorder %v60, 0.0
    %vm881 = vcmp.ne.f32.partialorder %v61, 0.0
    %vm882 = vcmp.ne.f32.partialorder %v62, 0.0
    %vm883 = vcmp.ne.f32.partialorder %v63, 0.0
    %vm884 = vcmp.ne.f32.partialorder %v64, 0.0
    %vm885 = vcmp.ne.f32.partialorder %v65, 0.0
    %vm886 = vcmp.ne.f32.partialorder %v66, 0.0
    %vm887 = vcmp.ne.f32.partialorder %v67, 0.0
    %vm888 = vcmp.ne.f32.partialorder %v68, 0.0
    %vm889 = vcmp.ne.f32.partialorder %v69, 0.0
    %vm890 = vcmp.ne.f32.partialorder %v70, 0.0
    %vm891 = vcmp.ne.f32.partialorder %v71, 0.0
    %vm892 = vcmp.ne.f32.partialorder %v72, 0.0
    %vm893 = vcmp.ne.f32.partialorder %v73, 0.0
    %v894 = vsub.f32 0.0, %v589
    %v895 = vsub.f32 0.0, %v590
    %v896 = vsub.f32 0.0, %v591
    %v897 = vsub.f32 0.0, %v592
    %v898 = vsub.f32 0.0, %v593
    %v899 = vsub.f32 0.0, %v594
    %v900 = vsub.f32 0.0, %v595
    %v901 = vsub.f32 0.0, %v596
    %v902 = vsub.f32 0.0, %v597
    %v903 = vsub.f32 0.0, %v598
    %v904 = vsub.f32 0.0, %v599
    %v905 = vsub.f32 0.0, %v600
    %v906 = vsub.f32 0.0, %v601
    %v907 = vsub.f32 0.0, %v602
    %v908 = vsub.f32 0.0, %v603
    %v909 = vsub.f32 0.0, %v604
    %v910 = vmul.f32 %v894, 1.442695
    %v911 = vpow.pop %v910
    %v912 = vmul.f32 %v895, 1.442695
    %v913 = vpow.pop %v912
    %v914 = vmul.f32 %v896, 1.442695
    %v915 = vpow.pop %v914
    %v916 = vmul.f32 %v897, 1.442695
    %v917 = vpow.pop %v916
    %v918 = vmul.f32 %v898, 1.442695
    %v919 = vpow.pop %v918
    %v920 = vmul.f32 %v899, 1.442695
    %v921 = vpow.pop %v920
    %v922 = vmul.f32 %v900, 1.442695
    %v923 = vpow.pop %v922
    %v924 = vmul.f32 %v901, 1.442695
    %v925 = vpow.pop %v924
    %v926 = vmul.f32 %v902, 1.442695
    %v927 = vpow.pop %v926
    %v928 = vmul.f32 %v903, 1.442695
    %v929 = vpow.pop %v928
    %v930 = vmul.f32 %v904, 1.442695
    %v931 = vpow.pop %v930
    %v932 = vmul.f32 %v905, 1.442695
    %v933 = vpow.pop %v932
    %v934 = vmul.f32 %v906, 1.442695
    %v935 = vpow.pop %v934
    %v936 = vmul.f32 %v907, 1.442695
    %v937 = vpow.pop %v936
    %v938 = vmul.f32 %v908, 1.442695
    %v939 = vpow.pop %v938
    %v940 = vmul.f32 %v909, 1.442695
    %v941 = vpow.pop %v940
    %v942 = vsel %vm878, %v911, 0.0
    %v943 = vsel %vm879, %v913, 0.0
    %v944 = vsel %vm880, %v915, 0.0
    %v945 = vsel %vm881, %v917, 0.0
    %v946 = vsel %vm882, %v919, 0.0
    %v947 = vsel %vm883, %v921, 0.0
    %v948 = vsel %vm884, %v923, 0.0
    %v949 = vsel %vm885, %v925, 0.0
    %v950 = vsel %vm886, %v927, 0.0
    %v951 = vsel %vm887, %v929, 0.0
    %v952 = vsel %vm888, %v931, 0.0
    %v953 = vsel %vm889, %v933, 0.0
    %v954 = vsel %vm890, %v935, 0.0
    %v955 = vsel %vm891, %v937, 0.0
    %v956 = vsel %vm892, %v939, 0.0
    %v957 = vsel %vm893, %v941, 0.0
    %958 = vst.msk [vmem:[#allocation3] sm:$0xff] %vm861, %v942
    %959 = vst.msk [vmem:[#allocation3 + $0x8] sm:$0xff] %vm861, %v943
    %960 = vst.msk [vmem:[#allocation3 + $0x10] sm:$0xff] %vm861, %v944
    %961 = vst.msk [vmem:[#allocation3 + $0x18] sm:$0xff] %vm861, %v945
    %962 = vst.msk [vmem:[#allocation3 + $0x20] sm:$0xff] %vm861, %v946
    %963 = vst.msk [vmem:[#allocation3 + $0x28] sm:$0xff] %vm861, %v947
    %964 = vst.msk [vmem:[#allocation3 + $0x30] sm:$0xff] %vm861, %v948
    %965 = vst.msk [vmem:[#allocation3 + $0x38] sm:$0xff] %vm861, %v949
    %966 = vst.msk [vmem:[#allocation3 + $0x40] sm:$0xff] %vm861, %v950
    %967 = vst.msk [vmem:[#allocation3 + $0x48] sm:$0xff] %vm861, %v951
    %968 = vst.msk [vmem:[#allocation3 + $0x50] sm:$0xff] %vm861, %v952
    %969 = vst.msk [vmem:[#allocation3 + $0x58] sm:$0xff] %vm861, %v953
    %970 = vst.msk [vmem:[#allocation3 + $0x60] sm:$0xff] %vm861, %v954
    %971 = vst.msk [vmem:[#allocation3 + $0x68] sm:$0xff] %vm861, %v955
    %972 = vst.msk [vmem:[#allocation3 + $0x70] sm:$0xff] %vm861, %v956
    %973 = vst.msk [vmem:[#allocation3 + $0x78] sm:$0xff] %vm861, %v957
    %974 = vst.msk [vmem:[%s6] sm:$0xff] %vm861, 0.0
    %975 = vst.msk [vmem:[%s6 + $0x8] sm:$0xff] %vm861, 0.0
    %976 = vst.msk [vmem:[%s6 + $0x10] sm:$0xff] %vm861, 0.0
    %977 = vst.msk [vmem:[%s6 + $0x18] sm:$0xff] %vm861, 0.0
    %978 = vst.msk [vmem:[%s6 + $0x20] sm:$0xff] %vm861, 0.0
    %979 = vst.msk [vmem:[%s6 + $0x28] sm:$0xff] %vm861, 0.0
    %980 = vst.msk [vmem:[%s6 + $0x30] sm:$0xff] %vm861, 0.0
    %981 = vst.msk [vmem:[%s6 + $0x38] sm:$0xff] %vm861, 0.0
    %982 = vst.msk [vmem:[%s6 + $0x40] sm:$0xff] %vm861, 0.0
    %983 = vst.msk [vmem:[%s6 + $0x48] sm:$0xff] %vm861, 0.0
    %984 = vst.msk [vmem:[%s6 + $0x50] sm:$0xff] %vm861, 0.0
    %985 = vst.msk [vmem:[%s6 + $0x58] sm:$0xff] %vm861, 0.0
    %986 = vst.msk [vmem:[%s6 + $0x60] sm:$0xff] %vm861, 0.0
    %987 = vst.msk [vmem:[%s6 + $0x68] sm:$0xff] %vm861, 0.0
    %988 = vst.msk [vmem:[%s6 + $0x70] sm:$0xff] %vm861, 0.0
    %989 = vst.msk [vmem:[%s6 + $0x78] sm:$0xff] %vm861, 0.0
  $region25: #{tpu_custom_call.1} parent=0 // pred_fallthru
    _
  %v990 = vld [vmem:[%s4] sm:$0xff]
  %v991 = vld [vmem:[%s4 + $0x8] sm:$0xff]
  %v992 = vld [vmem:[%s4 + $0x10] sm:$0xff]
  %v993 = vld [vmem:[%s4 + $0x18] sm:$0xff]
  %v994 = vld [vmem:[%s4 + $0x20] sm:$0xff]
  %v995 = vld [vmem:[%s4 + $0x28] sm:$0xff]
  %v996 = vld [vmem:[%s4 + $0x30] sm:$0xff]
  %v997 = vld [vmem:[%s4 + $0x38] sm:$0xff]
  %v998 = vld [vmem:[%s4 + $0x40] sm:$0xff]
  %v999 = vld [vmem:[%s4 + $0x48] sm:$0xff]
  %v1000 = vld [vmem:[%s4 + $0x50] sm:$0xff]
  %v1001 = vld [vmem:[%s4 + $0x58] sm:$0xff]
  %v1002 = vld [vmem:[%s4 + $0x60] sm:$0xff]
  %v1003 = vld [vmem:[%s4 + $0x68] sm:$0xff]
  %v1004 = vld [vmem:[%s4 + $0x70] sm:$0xff]
  %v1005 = vld [vmem:[%s4 + $0x78] sm:$0xff]
  %vm1006 = vcmask 130048
  %v1007 = vsel %vm1006, %v990, -inf
  %1008 = vmax.xlane.f32.xlu0 %v1007
  %v1009 = vpop.xlane.xlu0 %1008
  %v1010 = vsel %vm1006, %v991, -inf
  %1011 = vmax.xlane.f32.xlu0 %v1010
  %v1012 = vpop.xlane.xlu0 %1011
  %v1013 = vsel %vm1006, %v992, -inf
  %1014 = vmax.xlane.f32.xlu0 %v1013
  %v1015 = vpop.xlane.xlu0 %1014
  %v1016 = vsel %vm1006, %v993, -inf
  %1017 = vmax.xlane.f32.xlu0 %v1016
  %v1018 = vpop.xlane.xlu0 %1017
  %v1019 = vsel %vm1006, %v994, -inf
  %1020 = vmax.xlane.f32.xlu0 %v1019
  %v1021 = vpop.xlane.xlu0 %1020
  %v1022 = vsel %vm1006, %v995, -inf
  %1023 = vmax.xlane.f32.xlu0 %v1022
  %v1024 = vpop.xlane.xlu0 %1023
  %v1025 = vsel %vm1006, %v996, -inf
  %1026 = vmax.xlane.f32.xlu0 %v1025
  %v1027 = vpop.xlane.xlu0 %1026
  %v1028 = vsel %vm1006, %v997, -inf
  %1029 = vmax.xlane.f32.xlu0 %v1028
  %v1030 = vpop.xlane.xlu0 %1029
  %v1031 = vsel %vm1006, %v998, -inf
  %1032 = vmax.xlane.f32.xlu0 %v1031
  %v1033 = vpop.xlane.xlu0 %1032
  %v1034 = vsel %vm1006, %v999, -inf
  %1035 = vmax.xlane.f32.xlu0 %v1034
  %v1036 = vpop.xlane.xlu0 %1035
  %v1037 = vsel %vm1006, %v1000, -inf
  %1038 = vmax.xlane.f32.xlu0 %v1037
  %v1039 = vpop.xlane.xlu0 %1038
  %v1040 = vsel %vm1006, %v1001, -inf
  %1041 = vmax.xlane.f32.xlu0 %v1040
  %v1042 = vpop.xlane.xlu0 %1041
  %v1043 = vsel %vm1006, %v1002, -inf
  %1044 = vmax.xlane.f32.xlu0 %v1043
  %v1045 = vpop.xlane.xlu0 %1044
  %v1046 = vsel %vm1006, %v1003, -inf
  %1047 = vmax.xlane.f32.xlu0 %v1046
  %v1048 = vpop.xlane.xlu0 %1047
  %v1049 = vsel %vm1006, %v1004, -inf
  %1050 = vmax.xlane.f32.xlu0 %v1049
  %v1051 = vpop.xlane.xlu0 %1050
  %v1052 = vsel %vm1006, %v1005, -inf
  %1053 = vmax.xlane.f32.xlu0 %v1052
  %v1054 = vpop.xlane.xlu0 %1053
  %v1055 = vmax.f32 %v1009, 0.0
  %v1056 = vmax.f32 %v1012, 0.0
  %v1057 = vmax.f32 %v1015, 0.0
  %v1058 = vmax.f32 %v1018, 0.0
  %v1059 = vmax.f32 %v1021, 0.0
  %v1060 = vmax.f32 %v1024, 0.0
  %v1061 = vmax.f32 %v1027, 0.0
  %v1062 = vmax.f32 %v1030, 0.0
  %v1063 = vmax.f32 %v1033, 0.0
  %v1064 = vmax.f32 %v1036, 0.0
  %v1065 = vmax.f32 %v1039, 0.0
  %v1066 = vmax.f32 %v1042, 0.0
  %v1067 = vmax.f32 %v1045, 0.0
  %v1068 = vmax.f32 %v1048, 0.0
  %v1069 = vmax.f32 %v1051, 0.0
  %v1070 = vmax.f32 %v1054, 0.0
  %v1071 = vsub.f32 %v990, %v1055
  %v1072 = vsub.f32 %v991, %v1056
  %v1073 = vsub.f32 %v992, %v1057
  %v1074 = vsub.f32 %v993, %v1058
  %v1075 = vsub.f32 %v994, %v1059
  %v1076 = vsub.f32 %v995, %v1060
  %v1077 = vsub.f32 %v996, %v1061
  %v1078 = vsub.f32 %v997, %v1062
  %v1079 = vsub.f32 %v998, %v1063
  %v1080 = vsub.f32 %v999, %v1064
  %v1081 = vsub.f32 %v1000, %v1065
  %v1082 = vsub.f32 %v1001, %v1066
  %v1083 = vsub.f32 %v1002, %v1067
  %v1084 = vsub.f32 %v1003, %v1068
  %v1085 = vsub.f32 %v1004, %v1069
  %v1086 = vsub.f32 %v1005, %v1070
  %v1087 = vmul.f32 %v1071, 1.442695
  %v1088 = vpow.pop %v1087
  %v1089 = vmul.f32 %v1072, 1.442695
  %v1090 = vpow.pop %v1089
  %v1091 = vmul.f32 %v1073, 1.442695
  %v1092 = vpow.pop %v1091
  %v1093 = vmul.f32 %v1074, 1.442695
  %v1094 = vpow.pop %v1093
  %v1095 = vmul.f32 %v1075, 1.442695
  %v1096 = vpow.pop %v1095
  %v1097 = vmul.f32 %v1076, 1.442695
  %v1098 = vpow.pop %v1097
  %v1099 = vmul.f32 %v1077, 1.442695
  %v1100 = vpow.pop %v1099
  %v1101 = vmul.f32 %v1078, 1.442695
  %v1102 = vpow.pop %v1101
  %v1103 = vmul.f32 %v1079, 1.442695
  %v1104 = vpow.pop %v1103
  %v1105 = vmul.f32 %v1080, 1.442695
  %v1106 = vpow.pop %v1105
  %v1107 = vmul.f32 %v1081, 1.442695
  %v1108 = vpow.pop %v1107
  %v1109 = vmul.f32 %v1082, 1.442695
  %v1110 = vpow.pop %v1109
  %v1111 = vmul.f32 %v1083, 1.442695
  %v1112 = vpow.pop %v1111
  %v1113 = vmul.f32 %v1084, 1.442695
  %v1114 = vpow.pop %v1113
  %v1115 = vmul.f32 %v1085, 1.442695
  %v1116 = vpow.pop %v1115
  %v1117 = vmul.f32 %v1086, 1.442695
  %v1118 = vpow.pop %v1117
  %v1119 = vsel %vm1006, %v1088, 0.0
  %1120 = vadd.xlane.f32.xlu0 %v1119
  %v1121 = vpop.xlane.xlu0 %1120
  %v1122 = vsel %vm1006, %v1090, 0.0
  %1123 = vadd.xlane.f32.xlu0 %v1122
  %v1124 = vpop.xlane.xlu0 %1123
  %v1125 = vsel %vm1006, %v1092, 0.0
  %1126 = vadd.xlane.f32.xlu0 %v1125
  %v1127 = vpop.xlane.xlu0 %1126
  %v1128 = vsel %vm1006, %v1094, 0.0
  %1129 = vadd.xlane.f32.xlu0 %v1128
  %v1130 = vpop.xlane.xlu0 %1129
  %v1131 = vsel %vm1006, %v1096, 0.0
  %1132 = vadd.xlane.f32.xlu0 %v1131
  %v1133 = vpop.xlane.xlu0 %1132
  %v1134 = vsel %vm1006, %v1098, 0.0
  %1135 = vadd.xlane.f32.xlu0 %v1134
  %v1136 = vpop.xlane.xlu0 %1135
  %v1137 = vsel %vm1006, %v1100, 0.0
  %1138 = vadd.xlane.f32.xlu0 %v1137
  %v1139 = vpop.xlane.xlu0 %1138
  %v1140 = vsel %vm1006, %v1102, 0.0
  %1141 = vadd.xlane.f32.xlu0 %v1140
  %v1142 = vpop.xlane.xlu0 %1141
  %v1143 = vsel %vm1006, %v1104, 0.0
  %1144 = vadd.xlane.f32.xlu0 %v1143
  %v1145 = vpop.xlane.xlu0 %1144
  %v1146 = vsel %vm1006, %v1106, 0.0
  %1147 = vadd.xlane.f32.xlu0 %v1146
  %v1148 = vpop.xlane.xlu0 %1147
  %v1149 = vsel %vm1006, %v1108, 0.0
  %1150 = vadd.xlane.f32.xlu0 %v1149
  %v1151 = vpop.xlane.xlu0 %1150
  %v1152 = vsel %vm1006, %v1110, 0.0
  %1153 = vadd.xlane.f32.xlu0 %v1152
  %v1154 = vpop.xlane.xlu0 %1153
  %v1155 = vsel %vm1006, %v1112, 0.0
  %1156 = vadd.xlane.f32.xlu0 %v1155
  %v1157 = vpop.xlane.xlu0 %1156
  %v1158 = vsel %vm1006, %v1114, 0.0
  %1159 = vadd.xlane.f32.xlu0 %v1158
  %v1160 = vpop.xlane.xlu0 %1159
  %v1161 = vsel %vm1006, %v1116, 0.0
  %1162 = vadd.xlane.f32.xlu0 %v1161
  %v1163 = vpop.xlane.xlu0 %1162
  %v1164 = vsel %vm1006, %v1118, 0.0
  %1165 = vadd.xlane.f32.xlu0 %v1164
  %v1166 = vpop.xlane.xlu0 %1165
  %v1167 = vsub.f32 0.0, %v1055
  %v1168 = vsub.f32 0.0, %v1056
  %v1169 = vsub.f32 0.0, %v1057
  %v1170 = vsub.f32 0.0, %v1058
  %v1171 = vsub.f32 0.0, %v1059
  %v1172 = vsub.f32 0.0, %v1060
  %v1173 = vsub.f32 0.0, %v1061
  %v1174 = vsub.f32 0.0, %v1062
  %v1175 = vsub.f32 0.0, %v1063
  %v1176 = vsub.f32 0.0, %v1064
  %v1177 = vsub.f32 0.0, %v1065
  %v1178 = vsub.f32 0.0, %v1066
  %v1179 = vsub.f32 0.0, %v1067
  %v1180 = vsub.f32 0.0, %v1068
  %v1181 = vsub.f32 0.0, %v1069
  %v1182 = vsub.f32 0.0, %v1070
  %v1183 = vmul.f32 %v1167, 1.442695
  %v1184 = vpow.pop %v1183
  %v1185 = vmul.f32 %v1168, 1.442695
  %v1186 = vpow.pop %v1185
  %v1187 = vmul.f32 %v1169, 1.442695
  %v1188 = vpow.pop %v1187
  %v1189 = vmul.f32 %v1170, 1.442695
  %v1190 = vpow.pop %v1189
  %v1191 = vmul.f32 %v1171, 1.442695
  %v1192 = vpow.pop %v1191
  %v1193 = vmul.f32 %v1172, 1.442695
  %v1194 = vpow.pop %v1193
  %v1195 = vmul.f32 %v1173, 1.442695
  %v1196 = vpow.pop %v1195
  %v1197 = vmul.f32 %v1174, 1.442695
  %v1198 = vpow.pop %v1197
  %v1199 = vmul.f32 %v1175, 1.442695
  %v1200 = vpow.pop %v1199
  %v1201 = vmul.f32 %v1176, 1.442695
  %v1202 = vpow.pop %v1201
  %v1203 = vmul.f32 %v1177, 1.442695
  %v1204 = vpow.pop %v1203
  %v1205 = vmul.f32 %v1178, 1.442695
  %v1206 = vpow.pop %v1205
  %v1207 = vmul.f32 %v1179, 1.442695
  %v1208 = vpow.pop %v1207
  %v1209 = vmul.f32 %v1180, 1.442695
  %v1210 = vpow.pop %v1209
  %v1211 = vmul.f32 %v1181, 1.442695
  %v1212 = vpow.pop %v1211
  %v1213 = vmul.f32 %v1182, 1.442695
  %v1214 = vpow.pop %v1213
  %v1215 = vadd.f32 %v1121, %v1184
  %v1216 = vadd.f32 %v1124, %v1186
  %v1217 = vadd.f32 %v1127, %v1188
  %v1218 = vadd.f32 %v1130, %v1190
  %v1219 = vadd.f32 %v1133, %v1192
  %v1220 = vadd.f32 %v1136, %v1194
  %v1221 = vadd.f32 %v1139, %v1196
  %v1222 = vadd.f32 %v1142, %v1198
  %v1223 = vadd.f32 %v1145, %v1200
  %v1224 = vadd.f32 %v1148, %v1202
  %v1225 = vadd.f32 %v1151, %v1204
  %v1226 = vadd.f32 %v1154, %v1206
  %v1227 = vadd.f32 %v1157, %v1208
  %v1228 = vadd.f32 %v1160, %v1210
  %v1229 = vadd.f32 %v1163, %v1212
  %v1230 = vadd.f32 %v1166, %v1214
  %v1231 = vrcp.pop %v1215
  %v1232 = vmul.f32 1.0, %v1231
  %v1233 = vrcp.pop %v1216
  %v1234 = vmul.f32 1.0, %v1233
  %v1235 = vrcp.pop %v1217
  %v1236 = vmul.f32 1.0, %v1235
  %v1237 = vrcp.pop %v1218
  %v1238 = vmul.f32 1.0, %v1237
  %v1239 = vrcp.pop %v1219
  %v1240 = vmul.f32 1.0, %v1239
  %v1241 = vrcp.pop %v1220
  %v1242 = vmul.f32 1.0, %v1241
  %v1243 = vrcp.pop %v1221
  %v1244 = vmul.f32 1.0, %v1243
  %v1245 = vrcp.pop %v1222
  %v1246 = vmul.f32 1.0, %v1245
  %v1247 = vrcp.pop %v1223
  %v1248 = vmul.f32 1.0, %v1247
  %v1249 = vrcp.pop %v1224
  %v1250 = vmul.f32 1.0, %v1249
  %v1251 = vrcp.pop %v1225
  %v1252 = vmul.f32 1.0, %v1251
  %v1253 = vrcp.pop %v1226
  %v1254 = vmul.f32 1.0, %v1253
  %v1255 = vrcp.pop %v1227
  %v1256 = vmul.f32 1.0, %v1255
  %v1257 = vrcp.pop %v1228
  %v1258 = vmul.f32 1.0, %v1257
  %v1259 = vrcp.pop %v1229
  %v1260 = vmul.f32 1.0, %v1259
  %v1261 = vrcp.pop %v1230
  %v1262 = vmul.f32 1.0, %v1261
  %v1263 = vmul.f32 %v1088, %v1232
  %v1264 = vmul.f32 %v1090, %v1234
  %v1265 = vmul.f32 %v1092, %v1236
  %v1266 = vmul.f32 %v1094, %v1238
  %v1267 = vmul.f32 %v1096, %v1240
  %v1268 = vmul.f32 %v1098, %v1242
  %v1269 = vmul.f32 %v1100, %v1244
  %v1270 = vmul.f32 %v1102, %v1246
  %v1271 = vmul.f32 %v1104, %v1248
  %v1272 = vmul.f32 %v1106, %v1250
  %v1273 = vmul.f32 %v1108, %v1252
  %v1274 = vmul.f32 %v1110, %v1254
  %v1275 = vmul.f32 %v1112, %v1256
  %v1276 = vmul.f32 %v1114, %v1258
  %v1277 = vmul.f32 %v1116, %v1260
  %v1278 = vmul.f32 %v1118, %v1262
  %v1279 = vld [vmem:[#allocation2] sm:$0xff]
  %v1280 = vld [vmem:[#allocation2 + $0x8] sm:$0xff]
  %v1281 = vld [vmem:[#allocation2 + $0x10] sm:$0xff]
  %v1282 = vld [vmem:[#allocation2 + $0x18] sm:$0xff]
  %v1283 = vld [vmem:[#allocation2 + $0x20] sm:$0xff]
  %v1284 = vld [vmem:[#allocation2 + $0x28] sm:$0xff]
  %v1285 = vld [vmem:[#allocation2 + $0x30] sm:$0xff]
  %v1286 = vld [vmem:[#allocation2 + $0x38] sm:$0xff]
  %v1287 = vld [vmem:[#allocation2 + $0x40] sm:$0xff]
  %v1288 = vld [vmem:[#allocation2 + $0x48] sm:$0xff]
  %v1289 = vld [vmem:[#allocation2 + $0x50] sm:$0xff]
  %v1290 = vld [vmem:[#allocation2 + $0x58] sm:$0xff]
  %v1291 = vld [vmem:[#allocation2 + $0x60] sm:$0xff]
  %v1292 = vld [vmem:[#allocation2 + $0x68] sm:$0xff]
  %v1293 = vld [vmem:[#allocation2 + $0x70] sm:$0xff]
  %v1294 = vld [vmem:[#allocation2 + $0x78] sm:$0xff]
  %v1296 = vsel %vm1006, %v1279, 0
  %v1299 = vsel %vm1006, %v1280, 0
  %v1302 = vsel %vm1006, %v1281, 0
  %v1305 = vsel %vm1006, %v1282, 0
  %v1308 = vsel %vm1006, %v1283, 0
  %v1311 = vsel %vm1006, %v1284, 0
  %v1314 = vsel %vm1006, %v1285, 0
  %v1317 = vsel %vm1006, %v1286, 0
  %v1320 = vsel %vm1006, %v1287, 0
  %v1323 = vsel %vm1006, %v1288, 0
  %v1326 = vsel %vm1006, %v1289, 0
  %v1329 = vsel %vm1006, %v1290, 0
  %v1332 = vsel %vm1006, %v1291, 0
  %v1335 = vsel %vm1006, %v1292, 0
  %v1338 = vsel %vm1006, %v1293, 0
  %v1341 = vsel %vm1006, %v1294, 0
  %v1344 = vsel %vm1006, %v1263, 0
  %v1347 = vsel %vm1006, %v1264, 0
  %v1350 = vsel %vm1006, %v1265, 0
  %v1353 = vsel %vm1006, %v1266, 0
  %v1356 = vsel %vm1006, %v1267, 0
  %v1359 = vsel %vm1006, %v1268, 0
  %v1362 = vsel %vm1006, %v1269, 0
  %v1365 = vsel %vm1006, %v1270, 0
  %v1368 = vsel %vm1006, %v1271, 0
  %v1371 = vsel %vm1006, %v1272, 0
  %v1374 = vsel %vm1006, %v1273, 0
  %v1377 = vsel %vm1006, %v1274, 0
  %v1380 = vsel %vm1006, %v1275, 0
  %v1383 = vsel %vm1006, %v1276, 0
  %v1386 = vsel %vm1006, %v1277, 0
  %v1389 = vsel %vm1006, %v1278, 0
  %1391 = vmatprep.subr.mxu0 0.0
  %v1392 = vand.u32 %v1389, 4294901760
  %1393 = vmatpush1.xpose.msra.mxu0 %v1392
  %1394 = vmatprep.subr.mxu0 0.0
  %v1395 = vand.u32 %v1386, 4294901760
  %1396 = vmatpush1.xpose.msra.mxu0 %v1395
  %1397 = vmatprep.subr.mxu0 0.0
  %v1398 = vand.u32 %v1383, 4294901760
  %1399 = vmatpush1.xpose.msra.mxu0 %v1398
  %1400 = vmatprep.subr.mxu0 0.0
  %v1401 = vand.u32 %v1380, 4294901760
  %1402 = vmatpush1.xpose.msra.mxu0 %v1401
  %1403 = vmatprep.subr.mxu0 0.0
  %v1404 = vand.u32 %v1377, 4294901760
  %1405 = vmatpush1.xpose.msra.mxu0 %v1404
  %1406 = vmatprep.subr.mxu0 0.0
  %v1407 = vand.u32 %v1374, 4294901760
  %1408 = vmatpush1.xpose.msra.mxu0 %v1407
  %1409 = vmatprep.subr.mxu0 0.0
  %v1410 = vand.u32 %v1371, 4294901760
  %1411 = vmatpush1.xpose.msra.mxu0 %v1410
  %1412 = vmatprep.subr.mxu0 0.0
  %v1413 = vand.u32 %v1368, 4294901760
  %1414 = vmatpush1.xpose.msra.mxu0 %v1413
  %1415 = vmatprep.subr.mxu0 0.0
  %v1416 = vand.u32 %v1365, 4294901760
  %1417 = vmatpush1.xpose.msra.mxu0 %v1416
  %1418 = vmatprep.subr.mxu0 0.0
  %v1419 = vand.u32 %v1362, 4294901760
  %1420 = vmatpush1.xpose.msra.mxu0 %v1419
  %1421 = vmatprep.subr.mxu0 0.0
  %v1422 = vand.u32 %v1359, 4294901760
  %1423 = vmatpush1.xpose.msra.mxu0 %v1422
  %1424 = vmatprep.subr.mxu0 0.0
  %v1425 = vand.u32 %v1356, 4294901760
  %1426 = vmatpush1.xpose.msra.mxu0 %v1425
  %1427 = vmatprep.subr.mxu0 0.0
  %v1428 = vand.u32 %v1353, 4294901760
  %1429 = vmatpush1.xpose.msra.mxu0 %v1428
  %1430 = vmatprep.subr.mxu0 0.0
  %v1431 = vand.u32 %v1350, 4294901760
  %1432 = vmatpush1.xpose.msra.mxu0 %v1431
  %1433 = vmatprep.subr.mxu0 0.0
  %v1434 = vand.u32 %v1347, 4294901760
  %1435 = vmatpush1.xpose.msra.mxu0 %v1434
  %1436 = vmatprep.subr.mxu0 0.0
  %v1437 = vand.u32 %v1344, 4294901760
  %1438 = vmatpush1.xpose.msra.mxu0 %v1437
  %1439 = vmatprep.subr.mxu0 0.0
  %1440 = vmatpush2.xpose.msra.mxu0 0.0
  %1441 = vmatprep.subr.mxu0 0.0
  %1442 = vmatpush2.xpose.msra.mxu0 0.0
  %1443 = vmatprep.subr.mxu0 0.0
  %1444 = vmatpush2.xpose.msra.mxu0 0.0
  %1445 = vmatprep.subr.mxu0 0.0
  %1446 = vmatpush2.xpose.msra.mxu0 0.0
  %1447 = vmatprep.subr.mxu0 0.0
  %1448 = vmatpush2.xpose.msra.mxu0 0.0
  %1449 = vmatprep.subr.mxu0 0.0
  %1450 = vmatpush2.xpose.msra.mxu0 0.0
  %1451 = vmatprep.subr.mxu0 0.0
  %1452 = vmatpush2.xpose.msra.mxu0 0.0
  %1453 = vmatprep.subr.mxu0 0.0
  %1454 = vmatpush2.xpose.msra.mxu0 0.0
  %1455 = vmatprep.subr.mxu0 0.0
  %1456 = vmatpush2.xpose.msra.mxu0 0.0
  %1457 = vmatprep.subr.mxu0 0.0
  %1458 = vmatpush2.xpose.msra.mxu0 0.0
  %1459 = vmatprep.subr.mxu0 0.0
  %1460 = vmatpush2.xpose.msra.mxu0 0.0
  %1461 = vmatprep.subr.mxu0 0.0
  %1462 = vmatpush2.xpose.msra.mxu0 0.0
  %1463 = vmatprep.subr.mxu0 0.0
  %1464 = vmatpush2.xpose.msra.mxu0 0.0
  %1465 = vmatprep.subr.mxu0 0.0
  %1466 = vmatpush2.xpose.msra.mxu0 0.0
  %1467 = vmatprep.subr.mxu0 0.0
  %1468 = vmatpush2.xpose.msra.mxu0 0.0
  %1469 = vmatprep.subr.mxu0 0.0
  %1470 = vmatpush2.xpose.msra.mxu0 0.0
  %1471 = vmatprep.mubr.f32.mxu0 0.0
  %v1472 = vand.u32 %v1296, 4294901760
  %v1473 = vsub.f32 %v1296, %v1472
  %v1474 = vand.u32 %v1473, 4294901760
  %v1475 = vsub.f32 %v1473, %v1474
  %v1476 = vand.u32 %v1475, 4294901760
  %1477 = vmatmul.mubr.f32.gmra.mxu0 %v1476
  %v1478 = vpop.f32.mrf.mxu0
  %v1479 = vadd.f32 0.0, %v1478
  %v1480 = vpop.f32.mrf.mxu0
  %1481 = vmatprep.mubr.f32.mxu0 0.0
  %v1482 = vand.u32 %v1299, 4294901760
  %v1483 = vsub.f32 %v1299, %v1482
  %v1484 = vand.u32 %v1483, 4294901760
  %v1485 = vsub.f32 %v1483, %v1484
  %v1486 = vand.u32 %v1485, 4294901760
  %1487 = vmatmul.mubr.f32.gmra.mxu0 %v1486
  %v1488 = vpop.f32.mrf.mxu0
  %v1489 = vadd.f32 0.0, %v1488
  %v1490 = vpop.f32.mrf.mxu0
  %1491 = vmatprep.mubr.f32.mxu0 0.0
  %v1492 = vand.u32 %v1302, 4294901760
  %v1493 = vsub.f32 %v1302, %v1492
  %v1494 = vand.u32 %v1493, 4294901760
  %v1495 = vsub.f32 %v1493, %v1494
  %v1496 = vand.u32 %v1495, 4294901760
  %1497 = vmatmul.mubr.f32.gmra.mxu0 %v1496
  %v1498 = vpop.f32.mrf.mxu0
  %v1499 = vadd.f32 0.0, %v1498
  %v1500 = vpop.f32.mrf.mxu0
  %1501 = vmatprep.mubr.f32.mxu0 0.0
  %v1502 = vand.u32 %v1305, 4294901760
  %v1503 = vsub.f32 %v1305, %v1502
  %v1504 = vand.u32 %v1503, 4294901760
  %v1505 = vsub.f32 %v1503, %v1504
  %v1506 = vand.u32 %v1505, 4294901760
  %1507 = vmatmul.mubr.f32.gmra.mxu0 %v1506
  %v1508 = vpop.f32.mrf.mxu0
  %v1509 = vadd.f32 0.0, %v1508
  %v1510 = vpop.f32.mrf.mxu0
  %1511 = vmatprep.mubr.f32.mxu0 0.0
  %v1512 = vand.u32 %v1308, 4294901760
  %v1513 = vsub.f32 %v1308, %v1512
  %v1514 = vand.u32 %v1513, 4294901760
  %v1515 = vsub.f32 %v1513, %v1514
  %v1516 = vand.u32 %v1515, 4294901760
  %1517 = vmatmul.mubr.f32.gmra.mxu0 %v1516
  %v1518 = vpop.f32.mrf.mxu0
  %v1519 = vadd.f32 0.0, %v1518
  %v1520 = vpop.f32.mrf.mxu0
  %1521 = vmatprep.mubr.f32.mxu0 0.0
  %v1522 = vand.u32 %v1311, 4294901760
  %v1523 = vsub.f32 %v1311, %v1522
  %v1524 = vand.u32 %v1523, 4294901760
  %v1525 = vsub.f32 %v1523, %v1524
  %v1526 = vand.u32 %v1525, 4294901760
  %1527 = vmatmul.mubr.f32.gmra.mxu0 %v1526
  %v1528 = vpop.f32.mrf.mxu0
  %v1529 = vadd.f32 0.0, %v1528
  %v1530 = vpop.f32.mrf.mxu0
  %1531 = vmatprep.mubr.f32.mxu0 0.0
  %v1532 = vand.u32 %v1314, 4294901760
  %v1533 = vsub.f32 %v1314, %v1532
  %v1534 = vand.u32 %v1533, 4294901760
  %v1535 = vsub.f32 %v1533, %v1534
  %v1536 = vand.u32 %v1535, 4294901760
  %1537 = vmatmul.mubr.f32.gmra.mxu0 %v1536
  %v1538 = vpop.f32.mrf.mxu0
  %v1539 = vadd.f32 0.0, %v1538
  %v1540 = vpop.f32.mrf.mxu0
  %1541 = vmatprep.mubr.f32.mxu0 0.0
  %v1542 = vand.u32 %v1317, 4294901760
  %v1543 = vsub.f32 %v1317, %v1542
  %v1544 = vand.u32 %v1543, 4294901760
  %v1545 = vsub.f32 %v1543, %v1544
  %v1546 = vand.u32 %v1545, 4294901760
  %1547 = vmatmul.mubr.f32.gmra.mxu0 %v1546
  %v1548 = vpop.f32.mrf.mxu0
  %v1549 = vadd.f32 0.0, %v1548
  %v1550 = vpop.f32.mrf.mxu0
  %1551 = vmatprep.mubr.f32.mxu0 0.0
  %v1552 = vand.u32 %v1320, 4294901760
  %v1553 = vsub.f32 %v1320, %v1552
  %v1554 = vand.u32 %v1553, 4294901760
  %v1555 = vsub.f32 %v1553, %v1554
  %v1556 = vand.u32 %v1555, 4294901760
  %1557 = vmatmul.mubr.f32.gmra.mxu0 %v1556
  %v1558 = vpop.f32.mrf.mxu0
  %v1559 = vadd.f32 0.0, %v1558
  %v1560 = vpop.f32.mrf.mxu0
  %1561 = vmatprep.mubr.f32.mxu0 0.0
  %v1562 = vand.u32 %v1323, 4294901760
  %v1563 = vsub.f32 %v1323, %v1562
  %v1564 = vand.u32 %v1563, 4294901760
  %v1565 = vsub.f32 %v1563, %v1564
  %v1566 = vand.u32 %v1565, 4294901760
  %1567 = vmatmul.mubr.f32.gmra.mxu0 %v1566
  %v1568 = vpop.f32.mrf.mxu0
  %v1569 = vadd.f32 0.0, %v1568
  %v1570 = vpop.f32.mrf.mxu0
  %1571 = vmatprep.mubr.f32.mxu0 0.0
  %v1572 = vand.u32 %v1326, 4294901760
  %v1573 = vsub.f32 %v1326, %v1572
  %v1574 = vand.u32 %v1573, 4294901760
  %v1575 = vsub.f32 %v1573, %v1574
  %v1576 = vand.u32 %v1575, 4294901760
  %1577 = vmatmul.mubr.f32.gmra.mxu0 %v1576
  %v1578 = vpop.f32.mrf.mxu0
  %v1579 = vadd.f32 0.0, %v1578
  %v1580 = vpop.f32.mrf.mxu0
  %1581 = vmatprep.mubr.f32.mxu0 0.0
  %v1582 = vand.u32 %v1329, 4294901760
  %v1583 = vsub.f32 %v1329, %v1582
  %v1584 = vand.u32 %v1583, 4294901760
  %v1585 = vsub.f32 %v1583, %v1584
  %v1586 = vand.u32 %v1585, 4294901760
  %1587 = vmatmul.mubr.f32.gmra.mxu0 %v1586
  %v1588 = vpop.f32.mrf.mxu0
  %v1589 = vadd.f32 0.0, %v1588
  %v1590 = vpop.f32.mrf.mxu0
  %1591 = vmatprep.mubr.f32.mxu0 0.0
  %v1592 = vand.u32 %v1332, 4294901760
  %v1593 = vsub.f32 %v1332, %v1592
  %v1594 = vand.u32 %v1593, 4294901760
  %v1595 = vsub.f32 %v1593, %v1594
  %v1596 = vand.u32 %v1595, 4294901760
  %1597 = vmatmul.mubr.f32.gmra.mxu0 %v1596
  %v1598 = vpop.f32.mrf.mxu0
  %v1599 = vadd.f32 0.0, %v1598
  %v1600 = vpop.f32.mrf.mxu0
  %1601 = vmatprep.mubr.f32.mxu0 0.0
  %v1602 = vand.u32 %v1335, 4294901760
  %v1603 = vsub.f32 %v1335, %v1602
  %v1604 = vand.u32 %v1603, 4294901760
  %v1605 = vsub.f32 %v1603, %v1604
  %v1606 = vand.u32 %v1605, 4294901760
  %1607 = vmatmul.mubr.f32.gmra.mxu0 %v1606
  %v1608 = vpop.f32.mrf.mxu0
  %v1609 = vadd.f32 0.0, %v1608
  %v1610 = vpop.f32.mrf.mxu0
  %1611 = vmatprep.mubr.f32.mxu0 0.0
  %v1612 = vand.u32 %v1338, 4294901760
  %v1613 = vsub.f32 %v1338, %v1612
  %v1614 = vand.u32 %v1613, 4294901760
  %v1615 = vsub.f32 %v1613, %v1614
  %v1616 = vand.u32 %v1615, 4294901760
  %1617 = vmatmul.mubr.f32.gmra.mxu0 %v1616
  %v1618 = vpop.f32.mrf.mxu0
  %v1619 = vadd.f32 0.0, %v1618
  %v1620 = vpop.f32.mrf.mxu0
  %1621 = vmatprep.mubr.f32.mxu0 0.0
  %v1622 = vand.u32 %v1341, 4294901760
  %v1623 = vsub.f32 %v1341, %v1622
  %v1624 = vand.u32 %v1623, 4294901760
  %v1625 = vsub.f32 %v1623, %v1624
  %v1626 = vand.u32 %v1625, 4294901760
  %1627 = vmatmul.mubr.f32.gmra.mxu0 %v1626
  %v1628 = vpop.f32.mrf.mxu0
  %v1629 = vadd.f32 0.0, %v1628
  %v1630 = vpop.f32.mrf.mxu0
  %1631 = vdwg.mxu0
  %1632 = vmatprep.subr.mxu0 0.0
  %v1633 = vand.u32 %v1389, 4294901760
  %v1634 = vsub.f32 %v1389, %v1633
  %v1635 = vand.u32 %v1634, 4294901760
  %v1636 = vsub.f32 %v1634, %v1635
  %v1637 = vand.u32 %v1636, 4294901760
  %1638 = vmatpush1.xpose.msra.mxu0 %v1637
  %1639 = vmatprep.subr.mxu0 0.0
  %v1640 = vand.u32 %v1386, 4294901760
  %v1641 = vsub.f32 %v1386, %v1640
  %v1642 = vand.u32 %v1641, 4294901760
  %v1643 = vsub.f32 %v1641, %v1642
  %v1644 = vand.u32 %v1643, 4294901760
  %1645 = vmatpush1.xpose.msra.mxu0 %v1644
  %1646 = vmatprep.subr.mxu0 0.0
  %v1647 = vand.u32 %v1383, 4294901760
  %v1648 = vsub.f32 %v1383, %v1647
  %v1649 = vand.u32 %v1648, 4294901760
  %v1650 = vsub.f32 %v1648, %v1649
  %v1651 = vand.u32 %v1650, 4294901760
  %1652 = vmatpush1.xpose.msra.mxu0 %v1651
  %1653 = vmatprep.subr.mxu0 0.0
  %v1654 = vand.u32 %v1380, 4294901760
  %v1655 = vsub.f32 %v1380, %v1654
  %v1656 = vand.u32 %v1655, 4294901760
  %v1657 = vsub.f32 %v1655, %v1656
  %v1658 = vand.u32 %v1657, 4294901760
  %1659 = vmatpush1.xpose.msra.mxu0 %v1658
  %1660 = vmatprep.subr.mxu0 0.0
  %v1661 = vand.u32 %v1377, 4294901760
  %v1662 = vsub.f32 %v1377, %v1661
  %v1663 = vand.u32 %v1662, 4294901760
  %v1664 = vsub.f32 %v1662, %v1663
  %v1665 = vand.u32 %v1664, 4294901760
  %1666 = vmatpush1.xpose.msra.mxu0 %v1665
  %1667 = vmatprep.subr.mxu0 0.0
  %v1668 = vand.u32 %v1374, 4294901760
  %v1669 = vsub.f32 %v1374, %v1668
  %v1670 = vand.u32 %v1669, 4294901760
  %v1671 = vsub.f32 %v1669, %v1670
  %v1672 = vand.u32 %v1671, 4294901760
  %1673 = vmatpush1.xpose.msra.mxu0 %v1672
  %1674 = vmatprep.subr.mxu0 0.0
  %v1675 = vand.u32 %v1371, 4294901760
  %v1676 = vsub.f32 %v1371, %v1675
  %v1677 = vand.u32 %v1676, 4294901760
  %v1678 = vsub.f32 %v1676, %v1677
  %v1679 = vand.u32 %v1678, 4294901760
  %1680 = vmatpush1.xpose.msra.mxu0 %v1679
  %1681 = vmatprep.subr.mxu0 0.0
  %v1682 = vand.u32 %v1368, 4294901760
  %v1683 = vsub.f32 %v1368, %v1682
  %v1684 = vand.u32 %v1683, 4294901760
  %v1685 = vsub.f32 %v1683, %v1684
  %v1686 = vand.u32 %v1685, 4294901760
  %1687 = vmatpush1.xpose.msra.mxu0 %v1686
  %1688 = vmatprep.subr.mxu0 0.0
  %v1689 = vand.u32 %v1365, 4294901760
  %v1690 = vsub.f32 %v1365, %v1689
  %v1691 = vand.u32 %v1690, 4294901760
  %v1692 = vsub.f32 %v1690, %v1691
  %v1693 = vand.u32 %v1692, 4294901760
  %1694 = vmatpush1.xpose.msra.mxu0 %v1693
  %1695 = vmatprep.subr.mxu0 0.0
  %v1696 = vand.u32 %v1362, 4294901760
  %v1697 = vsub.f32 %v1362, %v1696
  %v1698 = vand.u32 %v1697, 4294901760
  %v1699 = vsub.f32 %v1697, %v1698
  %v1700 = vand.u32 %v1699, 4294901760
  %1701 = vmatpush1.xpose.msra.mxu0 %v1700
  %1702 = vmatprep.subr.mxu0 0.0
  %v1703 = vand.u32 %v1359, 4294901760
  %v1704 = vsub.f32 %v1359, %v1703
  %v1705 = vand.u32 %v1704, 4294901760
  %v1706 = vsub.f32 %v1704, %v1705
  %v1707 = vand.u32 %v1706, 4294901760
  %1708 = vmatpush1.xpose.msra.mxu0 %v1707
  %1709 = vmatprep.subr.mxu0 0.0
  %v1710 = vand.u32 %v1356, 4294901760
  %v1711 = vsub.f32 %v1356, %v1710
  %v1712 = vand.u32 %v1711, 4294901760
  %v1713 = vsub.f32 %v1711, %v1712
  %v1714 = vand.u32 %v1713, 4294901760
  %1715 = vmatpush1.xpose.msra.mxu0 %v1714
  %1716 = vmatprep.subr.mxu0 0.0
  %v1717 = vand.u32 %v1353, 4294901760
  %v1718 = vsub.f32 %v1353, %v1717
  %v1719 = vand.u32 %v1718, 4294901760
  %v1720 = vsub.f32 %v1718, %v1719
  %v1721 = vand.u32 %v1720, 4294901760
  %1722 = vmatpush1.xpose.msra.mxu0 %v1721
  %1723 = vmatprep.subr.mxu0 0.0
  %v1724 = vand.u32 %v1350, 4294901760
  %v1725 = vsub.f32 %v1350, %v1724
  %v1726 = vand.u32 %v1725, 4294901760
  %v1727 = vsub.f32 %v1725, %v1726
  %v1728 = vand.u32 %v1727, 4294901760
  %1729 = vmatpush1.xpose.msra.mxu0 %v1728
  %1730 = vmatprep.subr.mxu0 0.0
  %v1731 = vand.u32 %v1347, 4294901760
  %v1732 = vsub.f32 %v1347, %v1731
  %v1733 = vand.u32 %v1732, 4294901760
  %v1734 = vsub.f32 %v1732, %v1733
  %v1735 = vand.u32 %v1734, 4294901760
  %1736 = vmatpush1.xpose.msra.mxu0 %v1735
  %1737 = vmatprep.subr.mxu0 0.0
  %v1738 = vand.u32 %v1344, 4294901760
  %v1739 = vsub.f32 %v1344, %v1738
  %v1740 = vand.u32 %v1739, 4294901760
  %v1741 = vsub.f32 %v1739, %v1740
  %v1742 = vand.u32 %v1741, 4294901760
  %1743 = vmatpush1.xpose.msra.mxu0 %v1742
  %1744 = vmatprep.subr.mxu0 0.0
  %1745 = vmatpush2.xpose.msra.mxu0 0.0
  %1746 = vmatprep.subr.mxu0 0.0
  %1747 = vmatpush2.xpose.msra.mxu0 0.0
  %1748 = vmatprep.subr.mxu0 0.0
  %1749 = vmatpush2.xpose.msra.mxu0 0.0
  %1750 = vmatprep.subr.mxu0 0.0
  %1751 = vmatpush2.xpose.msra.mxu0 0.0
  %1752 = vmatprep.subr.mxu0 0.0
  %1753 = vmatpush2.xpose.msra.mxu0 0.0
  %1754 = vmatprep.subr.mxu0 0.0
  %1755 = vmatpush2.xpose.msra.mxu0 0.0
  %1756 = vmatprep.subr.mxu0 0.0
  %1757 = vmatpush2.xpose.msra.mxu0 0.0
  %1758 = vmatprep.subr.mxu0 0.0
  %1759 = vmatpush2.xpose.msra.mxu0 0.0
  %1760 = vmatprep.subr.mxu0 0.0
  %1761 = vmatpush2.xpose.msra.mxu0 0.0
  %1762 = vmatprep.subr.mxu0 0.0
  %1763 = vmatpush2.xpose.msra.mxu0 0.0
  %1764 = vmatprep.subr.mxu0 0.0
  %1765 = vmatpush2.xpose.msra.mxu0 0.0
  %1766 = vmatprep.subr.mxu0 0.0
  %1767 = vmatpush2.xpose.msra.mxu0 0.0
  %1768 = vmatprep.subr.mxu0 0.0
  %1769 = vmatpush2.xpose.msra.mxu0 0.0
  %1770 = vmatprep.subr.mxu0 0.0
  %1771 = vmatpush2.xpose.msra.mxu0 0.0
  %1772 = vmatprep.subr.mxu0 0.0
  %1773 = vmatpush2.xpose.msra.mxu0 0.0
  %1774 = vmatprep.subr.mxu0 0.0
  %1775 = vmatpush2.xpose.msra.mxu0 0.0
  %1776 = vmatprep.mubr.f32.mxu0 0.0
  %v1777 = vand.u32 %v1296, 4294901760
  %1778 = vmatmul.mubr.f32.gmra.mxu0 %v1777
  %v1779 = vpop.f32.mrf.mxu0
  %v1780 = vadd.f32 %v1479, %v1779
  %v1781 = vpop.f32.mrf.mxu0
  %1782 = vmatprep.mubr.f32.mxu0 0.0
  %v1783 = vand.u32 %v1299, 4294901760
  %1784 = vmatmul.mubr.f32.gmra.mxu0 %v1783
  %v1785 = vpop.f32.mrf.mxu0
  %v1786 = vadd.f32 %v1489, %v1785
  %v1787 = vpop.f32.mrf.mxu0
  %1788 = vmatprep.mubr.f32.mxu0 0.0
  %v1789 = vand.u32 %v1302, 4294901760
  %1790 = vmatmul.mubr.f32.gmra.mxu0 %v1789
  %v1791 = vpop.f32.mrf.mxu0
  %v1792 = vadd.f32 %v1499, %v1791
  %v1793 = vpop.f32.mrf.mxu0
  %1794 = vmatprep.mubr.f32.mxu0 0.0
  %v1795 = vand.u32 %v1305, 4294901760
  %1796 = vmatmul.mubr.f32.gmra.mxu0 %v1795
  %v1797 = vpop.f32.mrf.mxu0
  %v1798 = vadd.f32 %v1509, %v1797
  %v1799 = vpop.f32.mrf.mxu0
  %1800 = vmatprep.mubr.f32.mxu0 0.0
  %v1801 = vand.u32 %v1308, 4294901760
  %1802 = vmatmul.mubr.f32.gmra.mxu0 %v1801
  %v1803 = vpop.f32.mrf.mxu0
  %v1804 = vadd.f32 %v1519, %v1803
  %v1805 = vpop.f32.mrf.mxu0
  %1806 = vmatprep.mubr.f32.mxu0 0.0
  %v1807 = vand.u32 %v1311, 4294901760
  %1808 = vmatmul.mubr.f32.gmra.mxu0 %v1807
  %v1809 = vpop.f32.mrf.mxu0
  %v1810 = vadd.f32 %v1529, %v1809
  %v1811 = vpop.f32.mrf.mxu0
  %1812 = vmatprep.mubr.f32.mxu0 0.0
  %v1813 = vand.u32 %v1314, 4294901760
  %1814 = vmatmul.mubr.f32.gmra.mxu0 %v1813
  %v1815 = vpop.f32.mrf.mxu0
  %v1816 = vadd.f32 %v1539, %v1815
  %v1817 = vpop.f32.mrf.mxu0
  %1818 = vmatprep.mubr.f32.mxu0 0.0
  %v1819 = vand.u32 %v1317, 4294901760
  %1820 = vmatmul.mubr.f32.gmra.mxu0 %v1819
  %v1821 = vpop.f32.mrf.mxu0
  %v1822 = vadd.f32 %v1549, %v1821
  %v1823 = vpop.f32.mrf.mxu0
  %1824 = vmatprep.mubr.f32.mxu0 0.0
  %v1825 = vand.u32 %v1320, 4294901760
  %1826 = vmatmul.mubr.f32.gmra.mxu0 %v1825
  %v1827 = vpop.f32.mrf.mxu0
  %v1828 = vadd.f32 %v1559, %v1827
  %v1829 = vpop.f32.mrf.mxu0
  %1830 = vmatprep.mubr.f32.mxu0 0.0
  %v1831 = vand.u32 %v1323, 4294901760
  %1832 = vmatmul.mubr.f32.gmra.mxu0 %v1831
  %v1833 = vpop.f32.mrf.mxu0
  %v1834 = vadd.f32 %v1569, %v1833
  %v1835 = vpop.f32.mrf.mxu0
  %1836 = vmatprep.mubr.f32.mxu0 0.0
  %v1837 = vand.u32 %v1326, 4294901760
  %1838 = vmatmul.mubr.f32.gmra.mxu0 %v1837
  %v1839 = vpop.f32.mrf.mxu0
  %v1840 = vadd.f32 %v1579, %v1839
  %v1841 = vpop.f32.mrf.mxu0
  %1842 = vmatprep.mubr.f32.mxu0 0.0
  %v1843 = vand.u32 %v1329, 4294901760
  %1844 = vmatmul.mubr.f32.gmra.mxu0 %v1843
  %v1845 = vpop.f32.mrf.mxu0
  %v1846 = vadd.f32 %v1589, %v1845
  %v1847 = vpop.f32.mrf.mxu0
  %1848 = vmatprep.mubr.f32.mxu0 0.0
  %v1849 = vand.u32 %v1332, 4294901760
  %1850 = vmatmul.mubr.f32.gmra.mxu0 %v1849
  %v1851 = vpop.f32.mrf.mxu0
  %v1852 = vadd.f32 %v1599, %v1851
  %v1853 = vpop.f32.mrf.mxu0
  %1854 = vmatprep.mubr.f32.mxu0 0.0
  %v1855 = vand.u32 %v1335, 4294901760
  %1856 = vmatmul.mubr.f32.gmra.mxu0 %v1855
  %v1857 = vpop.f32.mrf.mxu0
  %v1858 = vadd.f32 %v1609, %v1857
  %v1859 = vpop.f32.mrf.mxu0
  %1860 = vmatprep.mubr.f32.mxu0 0.0
  %v1861 = vand.u32 %v1338, 4294901760
  %1862 = vmatmul.mubr.f32.gmra.mxu0 %v1861
  %v1863 = vpop.f32.mrf.mxu0
  %v1864 = vadd.f32 %v1619, %v1863
  %v1865 = vpop.f32.mrf.mxu0
  %1866 = vmatprep.mubr.f32.mxu0 0.0
  %v1867 = vand.u32 %v1341, 4294901760
  %1868 = vmatmul.mubr.f32.gmra.mxu0 %v1867
  %v1869 = vpop.f32.mrf.mxu0
  %v1870 = vadd.f32 %v1629, %v1869
  %v1871 = vpop.f32.mrf.mxu0
  %1872 = vdwg.mxu0
  %1873 = vmatprep.subr.mxu0 0.0
  %v1874 = vand.u32 %v1389, 4294901760
  %v1875 = vsub.f32 %v1389, %v1874
  %1876 = vmatpush1.xpose.msra.mxu0 %v1875
  %1877 = vmatprep.subr.mxu0 0.0
  %v1878 = vand.u32 %v1386, 4294901760
  %v1879 = vsub.f32 %v1386, %v1878
  %1880 = vmatpush1.xpose.msra.mxu0 %v1879
  %1881 = vmatprep.subr.mxu0 0.0
  %v1882 = vand.u32 %v1383, 4294901760
  %v1883 = vsub.f32 %v1383, %v1882
  %1884 = vmatpush1.xpose.msra.mxu0 %v1883
  %1885 = vmatprep.subr.mxu0 0.0
  %v1886 = vand.u32 %v1380, 4294901760
  %v1887 = vsub.f32 %v1380, %v1886
  %1888 = vmatpush1.xpose.msra.mxu0 %v1887
  %1889 = vmatprep.subr.mxu0 0.0
  %v1890 = vand.u32 %v1377, 4294901760
  %v1891 = vsub.f32 %v1377, %v1890
  %1892 = vmatpush1.xpose.msra.mxu0 %v1891
  %1893 = vmatprep.subr.mxu0 0.0
  %v1894 = vand.u32 %v1374, 4294901760
  %v1895 = vsub.f32 %v1374, %v1894
  %1896 = vmatpush1.xpose.msra.mxu0 %v1895
  %1897 = vmatprep.subr.mxu0 0.0
  %v1898 = vand.u32 %v1371, 4294901760
  %v1899 = vsub.f32 %v1371, %v1898
  %1900 = vmatpush1.xpose.msra.mxu0 %v1899
  %1901 = vmatprep.subr.mxu0 0.0
  %v1902 = vand.u32 %v1368, 4294901760
  %v1903 = vsub.f32 %v1368, %v1902
  %1904 = vmatpush1.xpose.msra.mxu0 %v1903
  %1905 = vmatprep.subr.mxu0 0.0
  %v1906 = vand.u32 %v1365, 4294901760
  %v1907 = vsub.f32 %v1365, %v1906
  %1908 = vmatpush1.xpose.msra.mxu0 %v1907
  %1909 = vmatprep.subr.mxu0 0.0
  %v1910 = vand.u32 %v1362, 4294901760
  %v1911 = vsub.f32 %v1362, %v1910
  %1912 = vmatpush1.xpose.msra.mxu0 %v1911
  %1913 = vmatprep.subr.mxu0 0.0
  %v1914 = vand.u32 %v1359, 4294901760
  %v1915 = vsub.f32 %v1359, %v1914
  %1916 = vmatpush1.xpose.msra.mxu0 %v1915
  %1917 = vmatprep.subr.mxu0 0.0
  %v1918 = vand.u32 %v1356, 4294901760
  %v1919 = vsub.f32 %v1356, %v1918
  %1920 = vmatpush1.xpose.msra.mxu0 %v1919
  %1921 = vmatprep.subr.mxu0 0.0
  %v1922 = vand.u32 %v1353, 4294901760
  %v1923 = vsub.f32 %v1353, %v1922
  %1924 = vmatpush1.xpose.msra.mxu0 %v1923
  %1925 = vmatprep.subr.mxu0 0.0
  %v1926 = vand.u32 %v1350, 4294901760
  %v1927 = vsub.f32 %v1350, %v1926
  %1928 = vmatpush1.xpose.msra.mxu0 %v1927
  %1929 = vmatprep.subr.mxu0 0.0
  %v1930 = vand.u32 %v1347, 4294901760
  %v1931 = vsub.f32 %v1347, %v1930
  %1932 = vmatpush1.xpose.msra.mxu0 %v1931
  %1933 = vmatprep.subr.mxu0 0.0
  %v1934 = vand.u32 %v1344, 4294901760
  %v1935 = vsub.f32 %v1344, %v1934
  %1936 = vmatpush1.xpose.msra.mxu0 %v1935
  %1937 = vmatprep.subr.mxu0 0.0
  %1938 = vmatpush2.xpose.msra.mxu0 0.0
  %1939 = vmatprep.subr.mxu0 0.0
  %1940 = vmatpush2.xpose.msra.mxu0 0.0
  %1941 = vmatprep.subr.mxu0 0.0
  %1942 = vmatpush2.xpose.msra.mxu0 0.0
  %1943 = vmatprep.subr.mxu0 0.0
  %1944 = vmatpush2.xpose.msra.mxu0 0.0
  %1945 = vmatprep.subr.mxu0 0.0
  %1946 = vmatpush2.xpose.msra.mxu0 0.0
  %1947 = vmatprep.subr.mxu0 0.0
  %1948 = vmatpush2.xpose.msra.mxu0 0.0
  %1949 = vmatprep.subr.mxu0 0.0
  %1950 = vmatpush2.xpose.msra.mxu0 0.0
  %1951 = vmatprep.subr.mxu0 0.0
  %1952 = vmatpush2.xpose.msra.mxu0 0.0
  %1953 = vmatprep.subr.mxu0 0.0
  %1954 = vmatpush2.xpose.msra.mxu0 0.0
  %1955 = vmatprep.subr.mxu0 0.0
  %1956 = vmatpush2.xpose.msra.mxu0 0.0
  %1957 = vmatprep.subr.mxu0 0.0
  %1958 = vmatpush2.xpose.msra.mxu0 0.0
  %1959 = vmatprep.subr.mxu0 0.0
  %1960 = vmatpush2.xpose.msra.mxu0 0.0
  %1961 = vmatprep.subr.mxu0 0.0
  %1962 = vmatpush2.xpose.msra.mxu0 0.0
  %1963 = vmatprep.subr.mxu0 0.0
  %1964 = vmatpush2.xpose.msra.mxu0 0.0
  %1965 = vmatprep.subr.mxu0 0.0
  %1966 = vmatpush2.xpose.msra.mxu0 0.0
  %1967 = vmatprep.subr.mxu0 0.0
  %1968 = vmatpush2.xpose.msra.mxu0 0.0
  %1969 = vmatprep.mubr.f32.mxu0 0.0
  %v1970 = vand.u32 %v1296, 4294901760
  %v1971 = vsub.f32 %v1296, %v1970
  %1972 = vmatmul.mubr.f32.gmra.mxu0 %v1971
  %v1973 = vpop.f32.mrf.mxu0
  %v1974 = vadd.f32 %v1780, %v1973
  %v1975 = vpop.f32.mrf.mxu0
  %1976 = vmatprep.mubr.f32.mxu0 0.0
  %v1977 = vand.u32 %v1299, 4294901760
  %v1978 = vsub.f32 %v1299, %v1977
  %1979 = vmatmul.mubr.f32.gmra.mxu0 %v1978
  %v1980 = vpop.f32.mrf.mxu0
  %v1981 = vadd.f32 %v1786, %v1980
  %v1982 = vpop.f32.mrf.mxu0
  %1983 = vmatprep.mubr.f32.mxu0 0.0
  %v1984 = vand.u32 %v1302, 4294901760
  %v1985 = vsub.f32 %v1302, %v1984
  %1986 = vmatmul.mubr.f32.gmra.mxu0 %v1985
  %v1987 = vpop.f32.mrf.mxu0
  %v1988 = vadd.f32 %v1792, %v1987
  %v1989 = vpop.f32.mrf.mxu0
  %1990 = vmatprep.mubr.f32.mxu0 0.0
  %v1991 = vand.u32 %v1305, 4294901760
  %v1992 = vsub.f32 %v1305, %v1991
  %1993 = vmatmul.mubr.f32.gmra.mxu0 %v1992
  %v1994 = vpop.f32.mrf.mxu0
  %v1995 = vadd.f32 %v1798, %v1994
  %v1996 = vpop.f32.mrf.mxu0
  %1997 = vmatprep.mubr.f32.mxu0 0.0
  %v1998 = vand.u32 %v1308, 4294901760
  %v1999 = vsub.f32 %v1308, %v1998
  %2000 = vmatmul.mubr.f32.gmra.mxu0 %v1999
  %v2001 = vpop.f32.mrf.mxu0
  %v2002 = vadd.f32 %v1804, %v2001
  %v2003 = vpop.f32.mrf.mxu0
  %2004 = vmatprep.mubr.f32.mxu0 0.0
  %v2005 = vand.u32 %v1311, 4294901760
  %v2006 = vsub.f32 %v1311, %v2005
  %2007 = vmatmul.mubr.f32.gmra.mxu0 %v2006
  %v2008 = vpop.f32.mrf.mxu0
  %v2009 = vadd.f32 %v1810, %v2008
  %v2010 = vpop.f32.mrf.mxu0
  %2011 = vmatprep.mubr.f32.mxu0 0.0
  %v2012 = vand.u32 %v1314, 4294901760
  %v2013 = vsub.f32 %v1314, %v2012
  %2014 = vmatmul.mubr.f32.gmra.mxu0 %v2013
  %v2015 = vpop.f32.mrf.mxu0
  %v2016 = vadd.f32 %v1816, %v2015
  %v2017 = vpop.f32.mrf.mxu0
  %2018 = vmatprep.mubr.f32.mxu0 0.0
  %v2019 = vand.u32 %v1317, 4294901760
  %v2020 = vsub.f32 %v1317, %v2019
  %2021 = vmatmul.mubr.f32.gmra.mxu0 %v2020
  %v2022 = vpop.f32.mrf.mxu0
  %v2023 = vadd.f32 %v1822, %v2022
  %v2024 = vpop.f32.mrf.mxu0
  %2025 = vmatprep.mubr.f32.mxu0 0.0
  %v2026 = vand.u32 %v1320, 4294901760
  %v2027 = vsub.f32 %v1320, %v2026
  %2028 = vmatmul.mubr.f32.gmra.mxu0 %v2027
  %v2029 = vpop.f32.mrf.mxu0
  %v2030 = vadd.f32 %v1828, %v2029
  %v2031 = vpop.f32.mrf.mxu0
  %2032 = vmatprep.mubr.f32.mxu0 0.0
  %v2033 = vand.u32 %v1323, 4294901760
  %v2034 = vsub.f32 %v1323, %v2033
  %2035 = vmatmul.mubr.f32.gmra.mxu0 %v2034
  %v2036 = vpop.f32.mrf.mxu0
  %v2037 = vadd.f32 %v1834, %v2036
  %v2038 = vpop.f32.mrf.mxu0
  %2039 = vmatprep.mubr.f32.mxu0 0.0
  %v2040 = vand.u32 %v1326, 4294901760
  %v2041 = vsub.f32 %v1326, %v2040
  %2042 = vmatmul.mubr.f32.gmra.mxu0 %v2041
  %v2043 = vpop.f32.mrf.mxu0
  %v2044 = vadd.f32 %v1840, %v2043
  %v2045 = vpop.f32.mrf.mxu0
  %2046 = vmatprep.mubr.f32.mxu0 0.0
  %v2047 = vand.u32 %v1329, 4294901760
  %v2048 = vsub.f32 %v1329, %v2047
  %2049 = vmatmul.mubr.f32.gmra.mxu0 %v2048
  %v2050 = vpop.f32.mrf.mxu0
  %v2051 = vadd.f32 %v1846, %v2050
  %v2052 = vpop.f32.mrf.mxu0
  %2053 = vmatprep.mubr.f32.mxu0 0.0
  %v2054 = vand.u32 %v1332, 4294901760
  %v2055 = vsub.f32 %v1332, %v2054
  %2056 = vmatmul.mubr.f32.gmra.mxu0 %v2055
  %v2057 = vpop.f32.mrf.mxu0
  %v2058 = vadd.f32 %v1852, %v2057
  %v2059 = vpop.f32.mrf.mxu0
  %2060 = vmatprep.mubr.f32.mxu0 0.0
  %v2061 = vand.u32 %v1335, 4294901760
  %v2062 = vsub.f32 %v1335, %v2061
  %2063 = vmatmul.mubr.f32.gmra.mxu0 %v2062
  %v2064 = vpop.f32.mrf.mxu0
  %v2065 = vadd.f32 %v1858, %v2064
  %v2066 = vpop.f32.mrf.mxu0
  %2067 = vmatprep.mubr.f32.mxu0 0.0
  %v2068 = vand.u32 %v1338, 4294901760
  %v2069 = vsub.f32 %v1338, %v2068
  %2070 = vmatmul.mubr.f32.gmra.mxu0 %v2069
  %v2071 = vpop.f32.mrf.mxu0
  %v2072 = vadd.f32 %v1864, %v2071
  %v2073 = vpop.f32.mrf.mxu0
  %2074 = vmatprep.mubr.f32.mxu0 0.0
  %v2075 = vand.u32 %v1341, 4294901760
  %v2076 = vsub.f32 %v1341, %v2075
  %2077 = vmatmul.mubr.f32.gmra.mxu0 %v2076
  %v2078 = vpop.f32.mrf.mxu0
  %v2079 = vadd.f32 %v1870, %v2078
  %v2080 = vpop.f32.mrf.mxu0
  %2081 = vdwg.mxu0
  %2082 = vmatprep.subr.mxu0 0.0
  %v2083 = vand.u32 %v1389, 4294901760
  %2084 = vmatpush1.xpose.msra.mxu0 %v2083
  %2085 = vmatprep.subr.mxu0 0.0
  %v2086 = vand.u32 %v1386, 4294901760
  %2087 = vmatpush1.xpose.msra.mxu0 %v2086
  %2088 = vmatprep.subr.mxu0 0.0
  %v2089 = vand.u32 %v1383, 4294901760
  %2090 = vmatpush1.xpose.msra.mxu0 %v2089
  %2091 = vmatprep.subr.mxu0 0.0
  %v2092 = vand.u32 %v1380, 4294901760
  %2093 = vmatpush1.xpose.msra.mxu0 %v2092
  %2094 = vmatprep.subr.mxu0 0.0
  %v2095 = vand.u32 %v1377, 4294901760
  %2096 = vmatpush1.xpose.msra.mxu0 %v2095
  %2097 = vmatprep.subr.mxu0 0.0
  %v2098 = vand.u32 %v1374, 4294901760
  %2099 = vmatpush1.xpose.msra.mxu0 %v2098
  %2100 = vmatprep.subr.mxu0 0.0
  %v2101 = vand.u32 %v1371, 4294901760
  %2102 = vmatpush1.xpose.msra.mxu0 %v2101
  %2103 = vmatprep.subr.mxu0 0.0
  %v2104 = vand.u32 %v1368, 4294901760
  %2105 = vmatpush1.xpose.msra.mxu0 %v2104
  %2106 = vmatprep.subr.mxu0 0.0
  %v2107 = vand.u32 %v1365, 4294901760
  %2108 = vmatpush1.xpose.msra.mxu0 %v2107
  %2109 = vmatprep.subr.mxu0 0.0
  %v2110 = vand.u32 %v1362, 4294901760
  %2111 = vmatpush1.xpose.msra.mxu0 %v2110
  %2112 = vmatprep.subr.mxu0 0.0
  %v2113 = vand.u32 %v1359, 4294901760
  %2114 = vmatpush1.xpose.msra.mxu0 %v2113
  %2115 = vmatprep.subr.mxu0 0.0
  %v2116 = vand.u32 %v1356, 4294901760
  %2117 = vmatpush1.xpose.msra.mxu0 %v2116
  %2118 = vmatprep.subr.mxu0 0.0
  %v2119 = vand.u32 %v1353, 4294901760
  %2120 = vmatpush1.xpose.msra.mxu0 %v2119
  %2121 = vmatprep.subr.mxu0 0.0
  %v2122 = vand.u32 %v1350, 4294901760
  %2123 = vmatpush1.xpose.msra.mxu0 %v2122
  %2124 = vmatprep.subr.mxu0 0.0
  %v2125 = vand.u32 %v1347, 4294901760
  %2126 = vmatpush1.xpose.msra.mxu0 %v2125
  %2127 = vmatprep.subr.mxu0 0.0
  %v2128 = vand.u32 %v1344, 4294901760
  %2129 = vmatpush1.xpose.msra.mxu0 %v2128
  %2130 = vmatprep.subr.mxu0 0.0
  %2131 = vmatpush2.xpose.msra.mxu0 0.0
  %2132 = vmatprep.subr.mxu0 0.0
  %2133 = vmatpush2.xpose.msra.mxu0 0.0
  %2134 = vmatprep.subr.mxu0 0.0
  %2135 = vmatpush2.xpose.msra.mxu0 0.0
  %2136 = vmatprep.subr.mxu0 0.0
  %2137 = vmatpush2.xpose.msra.mxu0 0.0
  %2138 = vmatprep.subr.mxu0 0.0
  %2139 = vmatpush2.xpose.msra.mxu0 0.0
  %2140 = vmatprep.subr.mxu0 0.0
  %2141 = vmatpush2.xpose.msra.mxu0 0.0
  %2142 = vmatprep.subr.mxu0 0.0
  %2143 = vmatpush2.xpose.msra.mxu0 0.0
  %2144 = vmatprep.subr.mxu0 0.0
  %2145 = vmatpush2.xpose.msra.mxu0 0.0
  %2146 = vmatprep.subr.mxu0 0.0
  %2147 = vmatpush2.xpose.msra.mxu0 0.0
  %2148 = vmatprep.subr.mxu0 0.0
  %2149 = vmatpush2.xpose.msra.mxu0 0.0
  %2150 = vmatprep.subr.mxu0 0.0
  %2151 = vmatpush2.xpose.msra.mxu0 0.0
  %2152 = vmatprep.subr.mxu0 0.0
  %2153 = vmatpush2.xpose.msra.mxu0 0.0
  %2154 = vmatprep.subr.mxu0 0.0
  %2155 = vmatpush2.xpose.msra.mxu0 0.0
  %2156 = vmatprep.subr.mxu0 0.0
  %2157 = vmatpush2.xpose.msra.mxu0 0.0
  %2158 = vmatprep.subr.mxu0 0.0
  %2159 = vmatpush2.xpose.msra.mxu0 0.0
  %2160 = vmatprep.subr.mxu0 0.0
  %2161 = vmatpush2.xpose.msra.mxu0 0.0
  %2162 = vmatprep.mubr.f32.mxu0 0.0
  %v2163 = vand.u32 %v1296, 4294901760
  %v2164 = vsub.f32 %v1296, %v2163
  %v2165 = vand.u32 %v2164, 4294901760
  %2166 = vmatmul.mubr.f32.gmra.mxu0 %v2165
  %v2167 = vpop.f32.mrf.mxu0
  %v2168 = vadd.f32 %v1974, %v2167
  %v2169 = vpop.f32.mrf.mxu0
  %2170 = vmatprep.mubr.f32.mxu0 0.0
  %v2171 = vand.u32 %v1299, 4294901760
  %v2172 = vsub.f32 %v1299, %v2171
  %v2173 = vand.u32 %v2172, 4294901760
  %2174 = vmatmul.mubr.f32.gmra.mxu0 %v2173
  %v2175 = vpop.f32.mrf.mxu0
  %v2176 = vadd.f32 %v1981, %v2175
  %v2177 = vpop.f32.mrf.mxu0
  %2178 = vmatprep.mubr.f32.mxu0 0.0
  %v2179 = vand.u32 %v1302, 4294901760
  %v2180 = vsub.f32 %v1302, %v2179
  %v2181 = vand.u32 %v2180, 4294901760
  %2182 = vmatmul.mubr.f32.gmra.mxu0 %v2181
  %v2183 = vpop.f32.mrf.mxu0
  %v2184 = vadd.f32 %v1988, %v2183
  %v2185 = vpop.f32.mrf.mxu0
  %2186 = vmatprep.mubr.f32.mxu0 0.0
  %v2187 = vand.u32 %v1305, 4294901760
  %v2188 = vsub.f32 %v1305, %v2187
  %v2189 = vand.u32 %v2188, 4294901760
  %2190 = vmatmul.mubr.f32.gmra.mxu0 %v2189
  %v2191 = vpop.f32.mrf.mxu0
  %v2192 = vadd.f32 %v1995, %v2191
  %v2193 = vpop.f32.mrf.mxu0
  %2194 = vmatprep.mubr.f32.mxu0 0.0
  %v2195 = vand.u32 %v1308, 4294901760
  %v2196 = vsub.f32 %v1308, %v2195
  %v2197 = vand.u32 %v2196, 4294901760
  %2198 = vmatmul.mubr.f32.gmra.mxu0 %v2197
  %v2199 = vpop.f32.mrf.mxu0
  %v2200 = vadd.f32 %v2002, %v2199
  %v2201 = vpop.f32.mrf.mxu0
  %2202 = vmatprep.mubr.f32.mxu0 0.0
  %v2203 = vand.u32 %v1311, 4294901760
  %v2204 = vsub.f32 %v1311, %v2203
  %v2205 = vand.u32 %v2204, 4294901760
  %2206 = vmatmul.mubr.f32.gmra.mxu0 %v2205
  %v2207 = vpop.f32.mrf.mxu0
  %v2208 = vadd.f32 %v2009, %v2207
  %v2209 = vpop.f32.mrf.mxu0
  %2210 = vmatprep.mubr.f32.mxu0 0.0
  %v2211 = vand.u32 %v1314, 4294901760
  %v2212 = vsub.f32 %v1314, %v2211
  %v2213 = vand.u32 %v2212, 4294901760
  %2214 = vmatmul.mubr.f32.gmra.mxu0 %v2213
  %v2215 = vpop.f32.mrf.mxu0
  %v2216 = vadd.f32 %v2016, %v2215
  %v2217 = vpop.f32.mrf.mxu0
  %2218 = vmatprep.mubr.f32.mxu0 0.0
  %v2219 = vand.u32 %v1317, 4294901760
  %v2220 = vsub.f32 %v1317, %v2219
  %v2221 = vand.u32 %v2220, 4294901760
  %2222 = vmatmul.mubr.f32.gmra.mxu0 %v2221
  %v2223 = vpop.f32.mrf.mxu0
  %v2224 = vadd.f32 %v2023, %v2223
  %v2225 = vpop.f32.mrf.mxu0
  %2226 = vmatprep.mubr.f32.mxu0 0.0
  %v2227 = vand.u32 %v1320, 4294901760
  %v2228 = vsub.f32 %v1320, %v2227
  %v2229 = vand.u32 %v2228, 4294901760
  %2230 = vmatmul.mubr.f32.gmra.mxu0 %v2229
  %v2231 = vpop.f32.mrf.mxu0
  %v2232 = vadd.f32 %v2030, %v2231
  %v2233 = vpop.f32.mrf.mxu0
  %2234 = vmatprep.mubr.f32.mxu0 0.0
  %v2235 = vand.u32 %v1323, 4294901760
  %v2236 = vsub.f32 %v1323, %v2235
  %v2237 = vand.u32 %v2236, 4294901760
  %2238 = vmatmul.mubr.f32.gmra.mxu0 %v2237
  %v2239 = vpop.f32.mrf.mxu0
  %v2240 = vadd.f32 %v2037, %v2239
  %v2241 = vpop.f32.mrf.mxu0
  %2242 = vmatprep.mubr.f32.mxu0 0.0
  %v2243 = vand.u32 %v1326, 4294901760
  %v2244 = vsub.f32 %v1326, %v2243
  %v2245 = vand.u32 %v2244, 4294901760
  %2246 = vmatmul.mubr.f32.gmra.mxu0 %v2245
  %v2247 = vpop.f32.mrf.mxu0
  %v2248 = vadd.f32 %v2044, %v2247
  %v2249 = vpop.f32.mrf.mxu0
  %2250 = vmatprep.mubr.f32.mxu0 0.0
  %v2251 = vand.u32 %v1329, 4294901760
  %v2252 = vsub.f32 %v1329, %v2251
  %v2253 = vand.u32 %v2252, 4294901760
  %2254 = vmatmul.mubr.f32.gmra.mxu0 %v2253
  %v2255 = vpop.f32.mrf.mxu0
  %v2256 = vadd.f32 %v2051, %v2255
  %v2257 = vpop.f32.mrf.mxu0
  %2258 = vmatprep.mubr.f32.mxu0 0.0
  %v2259 = vand.u32 %v1332, 4294901760
  %v2260 = vsub.f32 %v1332, %v2259
  %v2261 = vand.u32 %v2260, 4294901760
  %2262 = vmatmul.mubr.f32.gmra.mxu0 %v2261
  %v2263 = vpop.f32.mrf.mxu0
  %v2264 = vadd.f32 %v2058, %v2263
  %v2265 = vpop.f32.mrf.mxu0
  %2266 = vmatprep.mubr.f32.mxu0 0.0
  %v2267 = vand.u32 %v1335, 4294901760
  %v2268 = vsub.f32 %v1335, %v2267
  %v2269 = vand.u32 %v2268, 4294901760
  %2270 = vmatmul.mubr.f32.gmra.mxu0 %v2269
  %v2271 = vpop.f32.mrf.mxu0
  %v2272 = vadd.f32 %v2065, %v2271
  %v2273 = vpop.f32.mrf.mxu0
  %2274 = vmatprep.mubr.f32.mxu0 0.0
  %v2275 = vand.u32 %v1338, 4294901760
  %v2276 = vsub.f32 %v1338, %v2275
  %v2277 = vand.u32 %v2276, 4294901760
  %2278 = vmatmul.mubr.f32.gmra.mxu0 %v2277
  %v2279 = vpop.f32.mrf.mxu0
  %v2280 = vadd.f32 %v2072, %v2279
  %v2281 = vpop.f32.mrf.mxu0
  %2282 = vmatprep.mubr.f32.mxu0 0.0
  %v2283 = vand.u32 %v1341, 4294901760
  %v2284 = vsub.f32 %v1341, %v2283
  %v2285 = vand.u32 %v2284, 4294901760
  %2286 = vmatmul.mubr.f32.gmra.mxu0 %v2285
  %v2287 = vpop.f32.mrf.mxu0
  %v2288 = vadd.f32 %v2079, %v2287
  %v2289 = vpop.f32.mrf.mxu0
  %2290 = vdwg.mxu0
  %2291 = vmatprep.subr.mxu0 0.0
  %v2292 = vand.u32 %v1389, 4294901760
  %v2293 = vsub.f32 %v1389, %v2292
  %v2294 = vand.u32 %v2293, 4294901760
  %2295 = vmatpush1.xpose.msra.mxu0 %v2294
  %2296 = vmatprep.subr.mxu0 0.0
  %v2297 = vand.u32 %v1386, 4294901760
  %v2298 = vsub.f32 %v1386, %v2297
  %v2299 = vand.u32 %v2298, 4294901760
  %2300 = vmatpush1.xpose.msra.mxu0 %v2299
  %2301 = vmatprep.subr.mxu0 0.0
  %v2302 = vand.u32 %v1383, 4294901760
  %v2303 = vsub.f32 %v1383, %v2302
  %v2304 = vand.u32 %v2303, 4294901760
  %2305 = vmatpush1.xpose.msra.mxu0 %v2304
  %2306 = vmatprep.subr.mxu0 0.0
  %v2307 = vand.u32 %v1380, 4294901760
  %v2308 = vsub.f32 %v1380, %v2307
  %v2309 = vand.u32 %v2308, 4294901760
  %2310 = vmatpush1.xpose.msra.mxu0 %v2309
  %2311 = vmatprep.subr.mxu0 0.0
  %v2312 = vand.u32 %v1377, 4294901760
  %v2313 = vsub.f32 %v1377, %v2312
  %v2314 = vand.u32 %v2313, 4294901760
  %2315 = vmatpush1.xpose.msra.mxu0 %v2314
  %2316 = vmatprep.subr.mxu0 0.0
  %v2317 = vand.u32 %v1374, 4294901760
  %v2318 = vsub.f32 %v1374, %v2317
  %v2319 = vand.u32 %v2318, 4294901760
  %2320 = vmatpush1.xpose.msra.mxu0 %v2319
  %2321 = vmatprep.subr.mxu0 0.0
  %v2322 = vand.u32 %v1371, 4294901760
  %v2323 = vsub.f32 %v1371, %v2322
  %v2324 = vand.u32 %v2323, 4294901760
  %2325 = vmatpush1.xpose.msra.mxu0 %v2324
  %2326 = vmatprep.subr.mxu0 0.0
  %v2327 = vand.u32 %v1368, 4294901760
  %v2328 = vsub.f32 %v1368, %v2327
  %v2329 = vand.u32 %v2328, 4294901760
  %2330 = vmatpush1.xpose.msra.mxu0 %v2329
  %2331 = vmatprep.subr.mxu0 0.0
  %v2332 = vand.u32 %v1365, 4294901760
  %v2333 = vsub.f32 %v1365, %v2332
  %v2334 = vand.u32 %v2333, 4294901760
  %2335 = vmatpush1.xpose.msra.mxu0 %v2334
  %2336 = vmatprep.subr.mxu0 0.0
  %v2337 = vand.u32 %v1362, 4294901760
  %v2338 = vsub.f32 %v1362, %v2337
  %v2339 = vand.u32 %v2338, 4294901760
  %2340 = vmatpush1.xpose.msra.mxu0 %v2339
  %2341 = vmatprep.subr.mxu0 0.0
  %v2342 = vand.u32 %v1359, 4294901760
  %v2343 = vsub.f32 %v1359, %v2342
  %v2344 = vand.u32 %v2343, 4294901760
  %2345 = vmatpush1.xpose.msra.mxu0 %v2344
  %2346 = vmatprep.subr.mxu0 0.0
  %v2347 = vand.u32 %v1356, 4294901760
  %v2348 = vsub.f32 %v1356, %v2347
  %v2349 = vand.u32 %v2348, 4294901760
  %2350 = vmatpush1.xpose.msra.mxu0 %v2349
  %2351 = vmatprep.subr.mxu0 0.0
  %v2352 = vand.u32 %v1353, 4294901760
  %v2353 = vsub.f32 %v1353, %v2352
  %v2354 = vand.u32 %v2353, 4294901760
  %2355 = vmatpush1.xpose.msra.mxu0 %v2354
  %2356 = vmatprep.subr.mxu0 0.0
  %v2357 = vand.u32 %v1350, 4294901760
  %v2358 = vsub.f32 %v1350, %v2357
  %v2359 = vand.u32 %v2358, 4294901760
  %2360 = vmatpush1.xpose.msra.mxu0 %v2359
  %2361 = vmatprep.subr.mxu0 0.0
  %v2362 = vand.u32 %v1347, 4294901760
  %v2363 = vsub.f32 %v1347, %v2362
  %v2364 = vand.u32 %v2363, 4294901760
  %2365 = vmatpush1.xpose.msra.mxu0 %v2364
  %2366 = vmatprep.subr.mxu0 0.0
  %v2367 = vand.u32 %v1344, 4294901760
  %v2368 = vsub.f32 %v1344, %v2367
  %v2369 = vand.u32 %v2368, 4294901760
  %2370 = vmatpush1.xpose.msra.mxu0 %v2369
  %2371 = vmatprep.subr.mxu0 0.0
  %2372 = vmatpush2.xpose.msra.mxu0 0.0
  %2373 = vmatprep.subr.mxu0 0.0
  %2374 = vmatpush2.xpose.msra.mxu0 0.0
  %2375 = vmatprep.subr.mxu0 0.0
  %2376 = vmatpush2.xpose.msra.mxu0 0.0
  %2377 = vmatprep.subr.mxu0 0.0
  %2378 = vmatpush2.xpose.msra.mxu0 0.0
  %2379 = vmatprep.subr.mxu0 0.0
  %2380 = vmatpush2.xpose.msra.mxu0 0.0
  %2381 = vmatprep.subr.mxu0 0.0
  %2382 = vmatpush2.xpose.msra.mxu0 0.0
  %2383 = vmatprep.subr.mxu0 0.0
  %2384 = vmatpush2.xpose.msra.mxu0 0.0
  %2385 = vmatprep.subr.mxu0 0.0
  %2386 = vmatpush2.xpose.msra.mxu0 0.0
  %2387 = vmatprep.subr.mxu0 0.0
  %2388 = vmatpush2.xpose.msra.mxu0 0.0
  %2389 = vmatprep.subr.mxu0 0.0
  %2390 = vmatpush2.xpose.msra.mxu0 0.0
  %2391 = vmatprep.subr.mxu0 0.0
  %2392 = vmatpush2.xpose.msra.mxu0 0.0
  %2393 = vmatprep.subr.mxu0 0.0
  %2394 = vmatpush2.xpose.msra.mxu0 0.0
  %2395 = vmatprep.subr.mxu0 0.0
  %2396 = vmatpush2.xpose.msra.mxu0 0.0
  %2397 = vmatprep.subr.mxu0 0.0
  %2398 = vmatpush2.xpose.msra.mxu0 0.0
  %2399 = vmatprep.subr.mxu0 0.0
  %2400 = vmatpush2.xpose.msra.mxu0 0.0
  %2401 = vmatprep.subr.mxu0 0.0
  %2402 = vmatpush2.xpose.msra.mxu0 0.0
  %2403 = vmatprep.mubr.f32.mxu0 0.0
  %v2404 = vand.u32 %v1296, 4294901760
  %2405 = vmatmul.mubr.f32.gmra.mxu0 %v2404
  %v2406 = vpop.f32.mrf.mxu0
  %v2407 = vadd.f32 %v2168, %v2406
  %v2408 = vpop.f32.mrf.mxu0
  %2409 = vmatprep.mubr.f32.mxu0 0.0
  %v2410 = vand.u32 %v1299, 4294901760
  %2411 = vmatmul.mubr.f32.gmra.mxu0 %v2410
  %v2412 = vpop.f32.mrf.mxu0
  %v2413 = vadd.f32 %v2176, %v2412
  %v2414 = vpop.f32.mrf.mxu0
  %2415 = vmatprep.mubr.f32.mxu0 0.0
  %v2416 = vand.u32 %v1302, 4294901760
  %2417 = vmatmul.mubr.f32.gmra.mxu0 %v2416
  %v2418 = vpop.f32.mrf.mxu0
  %v2419 = vadd.f32 %v2184, %v2418
  %v2420 = vpop.f32.mrf.mxu0
  %2421 = vmatprep.mubr.f32.mxu0 0.0
  %v2422 = vand.u32 %v1305, 4294901760
  %2423 = vmatmul.mubr.f32.gmra.mxu0 %v2422
  %v2424 = vpop.f32.mrf.mxu0
  %v2425 = vadd.f32 %v2192, %v2424
  %v2426 = vpop.f32.mrf.mxu0
  %2427 = vmatprep.mubr.f32.mxu0 0.0
  %v2428 = vand.u32 %v1308, 4294901760
  %2429 = vmatmul.mubr.f32.gmra.mxu0 %v2428
  %v2430 = vpop.f32.mrf.mxu0
  %v2431 = vadd.f32 %v2200, %v2430
  %v2432 = vpop.f32.mrf.mxu0
  %2433 = vmatprep.mubr.f32.mxu0 0.0
  %v2434 = vand.u32 %v1311, 4294901760
  %2435 = vmatmul.mubr.f32.gmra.mxu0 %v2434
  %v2436 = vpop.f32.mrf.mxu0
  %v2437 = vadd.f32 %v2208, %v2436
  %v2438 = vpop.f32.mrf.mxu0
  %2439 = vmatprep.mubr.f32.mxu0 0.0
  %v2440 = vand.u32 %v1314, 4294901760
  %2441 = vmatmul.mubr.f32.gmra.mxu0 %v2440
  %v2442 = vpop.f32.mrf.mxu0
  %v2443 = vadd.f32 %v2216, %v2442
  %v2444 = vpop.f32.mrf.mxu0
  %2445 = vmatprep.mubr.f32.mxu0 0.0
  %v2446 = vand.u32 %v1317, 4294901760
  %2447 = vmatmul.mubr.f32.gmra.mxu0 %v2446
  %v2448 = vpop.f32.mrf.mxu0
  %v2449 = vadd.f32 %v2224, %v2448
  %v2450 = vpop.f32.mrf.mxu0
  %2451 = vmatprep.mubr.f32.mxu0 0.0
  %v2452 = vand.u32 %v1320, 4294901760
  %2453 = vmatmul.mubr.f32.gmra.mxu0 %v2452
  %v2454 = vpop.f32.mrf.mxu0
  %v2455 = vadd.f32 %v2232, %v2454
  %v2456 = vpop.f32.mrf.mxu0
  %2457 = vmatprep.mubr.f32.mxu0 0.0
  %v2458 = vand.u32 %v1323, 4294901760
  %2459 = vmatmul.mubr.f32.gmra.mxu0 %v2458
  %v2460 = vpop.f32.mrf.mxu0
  %v2461 = vadd.f32 %v2240, %v2460
  %v2462 = vpop.f32.mrf.mxu0
  %2463 = vmatprep.mubr.f32.mxu0 0.0
  %v2464 = vand.u32 %v1326, 4294901760
  %2465 = vmatmul.mubr.f32.gmra.mxu0 %v2464
  %v2466 = vpop.f32.mrf.mxu0
  %v2467 = vadd.f32 %v2248, %v2466
  %v2468 = vpop.f32.mrf.mxu0
  %2469 = vmatprep.mubr.f32.mxu0 0.0
  %v2470 = vand.u32 %v1329, 4294901760
  %2471 = vmatmul.mubr.f32.gmra.mxu0 %v2470
  %v2472 = vpop.f32.mrf.mxu0
  %v2473 = vadd.f32 %v2256, %v2472
  %v2474 = vpop.f32.mrf.mxu0
  %2475 = vmatprep.mubr.f32.mxu0 0.0
  %v2476 = vand.u32 %v1332, 4294901760
  %2477 = vmatmul.mubr.f32.gmra.mxu0 %v2476
  %v2478 = vpop.f32.mrf.mxu0
  %v2479 = vadd.f32 %v2264, %v2478
  %v2480 = vpop.f32.mrf.mxu0
  %2481 = vmatprep.mubr.f32.mxu0 0.0
  %v2482 = vand.u32 %v1335, 4294901760
  %2483 = vmatmul.mubr.f32.gmra.mxu0 %v2482
  %v2484 = vpop.f32.mrf.mxu0
  %v2485 = vadd.f32 %v2272, %v2484
  %v2486 = vpop.f32.mrf.mxu0
  %2487 = vmatprep.mubr.f32.mxu0 0.0
  %v2488 = vand.u32 %v1338, 4294901760
  %2489 = vmatmul.mubr.f32.gmra.mxu0 %v2488
  %v2490 = vpop.f32.mrf.mxu0
  %v2491 = vadd.f32 %v2280, %v2490
  %v2492 = vpop.f32.mrf.mxu0
  %2493 = vmatprep.mubr.f32.mxu0 0.0
  %v2494 = vand.u32 %v1341, 4294901760
  %2495 = vmatmul.mubr.f32.gmra.mxu0 %v2494
  %v2496 = vpop.f32.mrf.mxu0
  %v2497 = vadd.f32 %v2288, %v2496
  %v2498 = vpop.f32.mrf.mxu0
  %2499 = vdwg.mxu0
  %2500 = vmatprep.subr.mxu0 0.0
  %v2501 = vand.u32 %v1389, 4294901760
  %2502 = vmatpush1.xpose.msra.mxu0 %v2501
  %2503 = vmatprep.subr.mxu0 0.0
  %v2504 = vand.u32 %v1386, 4294901760
  %2505 = vmatpush1.xpose.msra.mxu0 %v2504
  %2506 = vmatprep.subr.mxu0 0.0
  %v2507 = vand.u32 %v1383, 4294901760
  %2508 = vmatpush1.xpose.msra.mxu0 %v2507
  %2509 = vmatprep.subr.mxu0 0.0
  %v2510 = vand.u32 %v1380, 4294901760
  %2511 = vmatpush1.xpose.msra.mxu0 %v2510
  %2512 = vmatprep.subr.mxu0 0.0
  %v2513 = vand.u32 %v1377, 4294901760
  %2514 = vmatpush1.xpose.msra.mxu0 %v2513
  %2515 = vmatprep.subr.mxu0 0.0
  %v2516 = vand.u32 %v1374, 4294901760
  %2517 = vmatpush1.xpose.msra.mxu0 %v2516
  %2518 = vmatprep.subr.mxu0 0.0
  %v2519 = vand.u32 %v1371, 4294901760
  %2520 = vmatpush1.xpose.msra.mxu0 %v2519
  %2521 = vmatprep.subr.mxu0 0.0
  %v2522 = vand.u32 %v1368, 4294901760
  %2523 = vmatpush1.xpose.msra.mxu0 %v2522
  %2524 = vmatprep.subr.mxu0 0.0
  %v2525 = vand.u32 %v1365, 4294901760
  %2526 = vmatpush1.xpose.msra.mxu0 %v2525
  %2527 = vmatprep.subr.mxu0 0.0
  %v2528 = vand.u32 %v1362, 4294901760
  %2529 = vmatpush1.xpose.msra.mxu0 %v2528
  %2530 = vmatprep.subr.mxu0 0.0
  %v2531 = vand.u32 %v1359, 4294901760
  %2532 = vmatpush1.xpose.msra.mxu0 %v2531
  %2533 = vmatprep.subr.mxu0 0.0
  %v2534 = vand.u32 %v1356, 4294901760
  %2535 = vmatpush1.xpose.msra.mxu0 %v2534
  %2536 = vmatprep.subr.mxu0 0.0
  %v2537 = vand.u32 %v1353, 4294901760
  %2538 = vmatpush1.xpose.msra.mxu0 %v2537
  %2539 = vmatprep.subr.mxu0 0.0
  %v2540 = vand.u32 %v1350, 4294901760
  %2541 = vmatpush1.xpose.msra.mxu0 %v2540
  %2542 = vmatprep.subr.mxu0 0.0
  %v2543 = vand.u32 %v1347, 4294901760
  %2544 = vmatpush1.xpose.msra.mxu0 %v2543
  %2545 = vmatprep.subr.mxu0 0.0
  %v2546 = vand.u32 %v1344, 4294901760
  %2547 = vmatpush1.xpose.msra.mxu0 %v2546
  %2548 = vmatprep.subr.mxu0 0.0
  %2549 = vmatpush2.xpose.msra.mxu0 0.0
  %2550 = vmatprep.subr.mxu0 0.0
  %2551 = vmatpush2.xpose.msra.mxu0 0.0
  %2552 = vmatprep.subr.mxu0 0.0
  %2553 = vmatpush2.xpose.msra.mxu0 0.0
  %2554 = vmatprep.subr.mxu0 0.0
  %2555 = vmatpush2.xpose.msra.mxu0 0.0
  %2556 = vmatprep.subr.mxu0 0.0
  %2557 = vmatpush2.xpose.msra.mxu0 0.0
  %2558 = vmatprep.subr.mxu0 0.0
  %2559 = vmatpush2.xpose.msra.mxu0 0.0
  %2560 = vmatprep.subr.mxu0 0.0
  %2561 = vmatpush2.xpose.msra.mxu0 0.0
  %2562 = vmatprep.subr.mxu0 0.0
  %2563 = vmatpush2.xpose.msra.mxu0 0.0
  %2564 = vmatprep.subr.mxu0 0.0
  %2565 = vmatpush2.xpose.msra.mxu0 0.0
  %2566 = vmatprep.subr.mxu0 0.0
  %2567 = vmatpush2.xpose.msra.mxu0 0.0
  %2568 = vmatprep.subr.mxu0 0.0
  %2569 = vmatpush2.xpose.msra.mxu0 0.0
  %2570 = vmatprep.subr.mxu0 0.0
  %2571 = vmatpush2.xpose.msra.mxu0 0.0
  %2572 = vmatprep.subr.mxu0 0.0
  %2573 = vmatpush2.xpose.msra.mxu0 0.0
  %2574 = vmatprep.subr.mxu0 0.0
  %2575 = vmatpush2.xpose.msra.mxu0 0.0
  %2576 = vmatprep.subr.mxu0 0.0
  %2577 = vmatpush2.xpose.msra.mxu0 0.0
  %2578 = vmatprep.subr.mxu0 0.0
  %2579 = vmatpush2.xpose.msra.mxu0 0.0
  %2580 = vmatprep.mubr.f32.mxu0 0.0
  %v2581 = vand.u32 %v1296, 4294901760
  %2582 = vmatmul.mubr.f32.gmra.mxu0 %v2581
  %v2583 = vpop.f32.mrf.mxu0
  %v2584 = vadd.f32 %v2407, %v2583
  %v2585 = vpop.f32.mrf.mxu0
  %2586 = vmatprep.mubr.f32.mxu0 0.0
  %v2587 = vand.u32 %v1299, 4294901760
  %2588 = vmatmul.mubr.f32.gmra.mxu0 %v2587
  %v2589 = vpop.f32.mrf.mxu0
  %v2590 = vadd.f32 %v2413, %v2589
  %v2591 = vpop.f32.mrf.mxu0
  %2592 = vmatprep.mubr.f32.mxu0 0.0
  %v2593 = vand.u32 %v1302, 4294901760
  %2594 = vmatmul.mubr.f32.gmra.mxu0 %v2593
  %v2595 = vpop.f32.mrf.mxu0
  %v2596 = vadd.f32 %v2419, %v2595
  %v2597 = vpop.f32.mrf.mxu0
  %2598 = vmatprep.mubr.f32.mxu0 0.0
  %v2599 = vand.u32 %v1305, 4294901760
  %2600 = vmatmul.mubr.f32.gmra.mxu0 %v2599
  %v2601 = vpop.f32.mrf.mxu0
  %v2602 = vadd.f32 %v2425, %v2601
  %v2603 = vpop.f32.mrf.mxu0
  %2604 = vmatprep.mubr.f32.mxu0 0.0
  %v2605 = vand.u32 %v1308, 4294901760
  %2606 = vmatmul.mubr.f32.gmra.mxu0 %v2605
  %v2607 = vpop.f32.mrf.mxu0
  %v2608 = vadd.f32 %v2431, %v2607
  %v2609 = vpop.f32.mrf.mxu0
  %2610 = vmatprep.mubr.f32.mxu0 0.0
  %v2611 = vand.u32 %v1311, 4294901760
  %2612 = vmatmul.mubr.f32.gmra.mxu0 %v2611
  %v2613 = vpop.f32.mrf.mxu0
  %v2614 = vadd.f32 %v2437, %v2613
  %v2615 = vpop.f32.mrf.mxu0
  %2616 = vmatprep.mubr.f32.mxu0 0.0
  %v2617 = vand.u32 %v1314, 4294901760
  %2618 = vmatmul.mubr.f32.gmra.mxu0 %v2617
  %v2619 = vpop.f32.mrf.mxu0
  %v2620 = vadd.f32 %v2443, %v2619
  %v2621 = vpop.f32.mrf.mxu0
  %2622 = vmatprep.mubr.f32.mxu0 0.0
  %v2623 = vand.u32 %v1317, 4294901760
  %2624 = vmatmul.mubr.f32.gmra.mxu0 %v2623
  %v2625 = vpop.f32.mrf.mxu0
  %v2626 = vadd.f32 %v2449, %v2625
  %v2627 = vpop.f32.mrf.mxu0
  %2628 = vmatprep.mubr.f32.mxu0 0.0
  %v2629 = vand.u32 %v1320, 4294901760
  %2630 = vmatmul.mubr.f32.gmra.mxu0 %v2629
  %v2631 = vpop.f32.mrf.mxu0
  %v2632 = vadd.f32 %v2455, %v2631
  %v2633 = vpop.f32.mrf.mxu0
  %2634 = vmatprep.mubr.f32.mxu0 0.0
  %v2635 = vand.u32 %v1323, 4294901760
  %2636 = vmatmul.mubr.f32.gmra.mxu0 %v2635
  %v2637 = vpop.f32.mrf.mxu0
  %v2638 = vadd.f32 %v2461, %v2637
  %v2639 = vpop.f32.mrf.mxu0
  %2640 = vmatprep.mubr.f32.mxu0 0.0
  %v2641 = vand.u32 %v1326, 4294901760
  %2642 = vmatmul.mubr.f32.gmra.mxu0 %v2641
  %v2643 = vpop.f32.mrf.mxu0
  %v2644 = vadd.f32 %v2467, %v2643
  %v2645 = vpop.f32.mrf.mxu0
  %2646 = vmatprep.mubr.f32.mxu0 0.0
  %v2647 = vand.u32 %v1329, 4294901760
  %2648 = vmatmul.mubr.f32.gmra.mxu0 %v2647
  %v2649 = vpop.f32.mrf.mxu0
  %v2650 = vadd.f32 %v2473, %v2649
  %v2651 = vpop.f32.mrf.mxu0
  %2652 = vmatprep.mubr.f32.mxu0 0.0
  %v2653 = vand.u32 %v1332, 4294901760
  %2654 = vmatmul.mubr.f32.gmra.mxu0 %v2653
  %v2655 = vpop.f32.mrf.mxu0
  %v2656 = vadd.f32 %v2479, %v2655
  %v2657 = vpop.f32.mrf.mxu0
  %2658 = vmatprep.mubr.f32.mxu0 0.0
  %v2659 = vand.u32 %v1335, 4294901760
  %2660 = vmatmul.mubr.f32.gmra.mxu0 %v2659
  %v2661 = vpop.f32.mrf.mxu0
  %v2662 = vadd.f32 %v2485, %v2661
  %v2663 = vpop.f32.mrf.mxu0
  %2664 = vmatprep.mubr.f32.mxu0 0.0
  %v2665 = vand.u32 %v1338, 4294901760
  %2666 = vmatmul.mubr.f32.gmra.mxu0 %v2665
  %v2667 = vpop.f32.mrf.mxu0
  %v2668 = vadd.f32 %v2491, %v2667
  %v2669 = vpop.f32.mrf.mxu0
  %2670 = vmatprep.mubr.f32.mxu0 0.0
  %v2671 = vand.u32 %v1341, 4294901760
  %2672 = vmatmul.mubr.f32.gmra.mxu0 %v2671
  %v2673 = vpop.f32.mrf.mxu0
  %v2674 = vadd.f32 %v2497, %v2673
  %v2675 = vpop.f32.mrf.mxu0
  %2676 = vdwg.mxu0
  %v2677 = vld [vmem:[%s0] sm:$0xff]
  %v2678 = vld [vmem:[%s0 + $0x8] sm:$0xff]
  %v2679 = vld [vmem:[%s0 + $0x10] sm:$0xff]
  %v2680 = vld [vmem:[%s0 + $0x18] sm:$0xff]
  %v2681 = vld [vmem:[%s0 + $0x20] sm:$0xff]
  %v2682 = vld [vmem:[%s0 + $0x28] sm:$0xff]
  %v2683 = vld [vmem:[%s0 + $0x30] sm:$0xff]
  %v2684 = vld [vmem:[%s0 + $0x38] sm:$0xff]
  %v2685 = vld [vmem:[%s0 + $0x40] sm:$0xff]
  %v2686 = vld [vmem:[%s0 + $0x48] sm:$0xff]
  %v2687 = vld [vmem:[%s0 + $0x50] sm:$0xff]
  %v2688 = vld [vmem:[%s0 + $0x58] sm:$0xff]
  %v2689 = vld [vmem:[%s0 + $0x60] sm:$0xff]
  %v2690 = vld [vmem:[%s0 + $0x68] sm:$0xff]
  %v2691 = vld [vmem:[%s0 + $0x70] sm:$0xff]
  %v2692 = vld [vmem:[%s0 + $0x78] sm:$0xff]
  %v2693 = vld [vmem:[%s1] sm:$0x1]
  %2694 = vset.pattern.permute.xlu0 0
  %2695 = vperm.xlu0 %2694, %v2677
  %v2696 = vpop.permute.xlu0 %2695
  %2697 = vset.pattern.permute.xlu0 0
  %2698 = vperm.xlu0 %2697, %v2678
  %v2699 = vpop.permute.xlu0 %2698
  %2700 = vset.pattern.permute.xlu0 0
  %2701 = vperm.xlu0 %2700, %v2679
  %v2702 = vpop.permute.xlu0 %2701
  %2703 = vset.pattern.permute.xlu0 0
  %2704 = vperm.xlu0 %2703, %v2680
  %v2705 = vpop.permute.xlu0 %2704
  %2706 = vset.pattern.permute.xlu0 0
  %2707 = vperm.xlu0 %2706, %v2681
  %v2708 = vpop.permute.xlu0 %2707
  %2709 = vset.pattern.permute.xlu0 0
  %2710 = vperm.xlu0 %2709, %v2682
  %v2711 = vpop.permute.xlu0 %2710
  %2712 = vset.pattern.permute.xlu0 0
  %2713 = vperm.xlu0 %2712, %v2683
  %v2714 = vpop.permute.xlu0 %2713
  %2715 = vset.pattern.permute.xlu0 0
  %2716 = vperm.xlu0 %2715, %v2684
  %v2717 = vpop.permute.xlu0 %2716
  %2718 = vset.pattern.permute.xlu0 0
  %2719 = vperm.xlu0 %2718, %v2685
  %v2720 = vpop.permute.xlu0 %2719
  %2721 = vset.pattern.permute.xlu0 0
  %2722 = vperm.xlu0 %2721, %v2686
  %v2723 = vpop.permute.xlu0 %2722
  %2724 = vset.pattern.permute.xlu0 0
  %2725 = vperm.xlu0 %2724, %v2687
  %v2726 = vpop.permute.xlu0 %2725
  %2727 = vset.pattern.permute.xlu0 0
  %2728 = vperm.xlu0 %2727, %v2688
  %v2729 = vpop.permute.xlu0 %2728
  %2730 = vset.pattern.permute.xlu0 0
  %2731 = vperm.xlu0 %2730, %v2689
  %v2732 = vpop.permute.xlu0 %2731
  %2733 = vset.pattern.permute.xlu0 0
  %2734 = vperm.xlu0 %2733, %v2690
  %v2735 = vpop.permute.xlu0 %2734
  %2736 = vset.pattern.permute.xlu0 0
  %2737 = vperm.xlu0 %2736, %v2691
  %v2738 = vpop.permute.xlu0 %2737
  %2739 = vset.pattern.permute.xlu0 0
  %2740 = vperm.xlu0 %2739, %v2692
  %v2741 = vpop.permute.xlu0 %2740
  %v2742 = vlaneseq
  %v2743 = vshrl.u32 %v2742, 7
  %v2744 = vsub.s32 0, %v2743
  %v2745 = vrot.slane %v2693, %v2744
  %vm2746 = vcmp.lt.s32.totalorder %v2696, %v2745
  %vm2747 = vcmp.lt.s32.totalorder %v2699, %v2745
  %vm2748 = vcmp.lt.s32.totalorder %v2702, %v2745
  %vm2749 = vcmp.lt.s32.totalorder %v2705, %v2745
  %vm2750 = vcmp.lt.s32.totalorder %v2708, %v2745
  %vm2751 = vcmp.lt.s32.totalorder %v2711, %v2745
  %vm2752 = vcmp.lt.s32.totalorder %v2714, %v2745
  %vm2753 = vcmp.lt.s32.totalorder %v2717, %v2745
  %vm2754 = vcmp.lt.s32.totalorder %v2720, %v2745
  %vm2755 = vcmp.lt.s32.totalorder %v2723, %v2745
  %vm2756 = vcmp.lt.s32.totalorder %v2726, %v2745
  %vm2757 = vcmp.lt.s32.totalorder %v2729, %v2745
  %vm2758 = vcmp.lt.s32.totalorder %v2732, %v2745
  %vm2759 = vcmp.lt.s32.totalorder %v2735, %v2745
  %vm2760 = vcmp.lt.s32.totalorder %v2738, %v2745
  %vm2761 = vcmp.lt.s32.totalorder %v2741, %v2745
  %v2762 = vmul.f32 %v2584, 1.442695
  %v2763 = vpow.pop %v2762
  %v2764 = vmul.f32 %v2590, 1.442695
  %v2765 = vpow.pop %v2764
  %v2766 = vmul.f32 %v2596, 1.442695
  %v2767 = vpow.pop %v2766
  %v2768 = vmul.f32 %v2602, 1.442695
  %v2769 = vpow.pop %v2768
  %v2770 = vmul.f32 %v2608, 1.442695
  %v2771 = vpow.pop %v2770
  %v2772 = vmul.f32 %v2614, 1.442695
  %v2773 = vpow.pop %v2772
  %v2774 = vmul.f32 %v2620, 1.442695
  %v2775 = vpow.pop %v2774
  %v2776 = vmul.f32 %v2626, 1.442695
  %v2777 = vpow.pop %v2776
  %v2778 = vmul.f32 %v2632, 1.442695
  %v2779 = vpow.pop %v2778
  %v2780 = vmul.f32 %v2638, 1.442695
  %v2781 = vpow.pop %v2780
  %v2782 = vmul.f32 %v2644, 1.442695
  %v2783 = vpow.pop %v2782
  %v2784 = vmul.f32 %v2650, 1.442695
  %v2785 = vpow.pop %v2784
  %v2786 = vmul.f32 %v2656, 1.442695
  %v2787 = vpow.pop %v2786
  %v2788 = vmul.f32 %v2662, 1.442695
  %v2789 = vpow.pop %v2788
  %v2790 = vmul.f32 %v2668, 1.442695
  %v2791 = vpow.pop %v2790
  %v2792 = vmul.f32 %v2674, 1.442695
  %v2793 = vpow.pop %v2792
  %v2794 = vsel %vm2746, %v2763, 0.0
  %v2795 = vsel %vm2747, %v2765, 0.0
  %v2796 = vsel %vm2748, %v2767, 0.0
  %v2797 = vsel %vm2749, %v2769, 0.0
  %v2798 = vsel %vm2750, %v2771, 0.0
  %v2799 = vsel %vm2751, %v2773, 0.0
  %v2800 = vsel %vm2752, %v2775, 0.0
  %v2801 = vsel %vm2753, %v2777, 0.0
  %v2802 = vsel %vm2754, %v2779, 0.0
  %v2803 = vsel %vm2755, %v2781, 0.0
  %v2804 = vsel %vm2756, %v2783, 0.0
  %v2805 = vsel %vm2757, %v2785, 0.0
  %v2806 = vsel %vm2758, %v2787, 0.0
  %v2807 = vsel %vm2759, %v2789, 0.0
  %v2808 = vsel %vm2760, %v2791, 0.0
  %v2809 = vsel %vm2761, %v2793, 0.0
  %2810 = vadd.xlane.f32.xlu0 %v2794
  %v2811 = vpop.xlane.xlu0 %2810
  %2812 = vadd.xlane.f32.xlu0 %v2795
  %v2813 = vpop.xlane.xlu0 %2812
  %2814 = vadd.xlane.f32.xlu0 %v2796
  %v2815 = vpop.xlane.xlu0 %2814
  %2816 = vadd.xlane.f32.xlu0 %v2797
  %v2817 = vpop.xlane.xlu0 %2816
  %2818 = vadd.xlane.f32.xlu0 %v2798
  %v2819 = vpop.xlane.xlu0 %2818
  %2820 = vadd.xlane.f32.xlu0 %v2799
  %v2821 = vpop.xlane.xlu0 %2820
  %2822 = vadd.xlane.f32.xlu0 %v2800
  %v2823 = vpop.xlane.xlu0 %2822
  %2824 = vadd.xlane.f32.xlu0 %v2801
  %v2825 = vpop.xlane.xlu0 %2824
  %2826 = vadd.xlane.f32.xlu0 %v2802
  %v2827 = vpop.xlane.xlu0 %2826
  %2828 = vadd.xlane.f32.xlu0 %v2803
  %v2829 = vpop.xlane.xlu0 %2828
  %2830 = vadd.xlane.f32.xlu0 %v2804
  %v2831 = vpop.xlane.xlu0 %2830
  %2832 = vadd.xlane.f32.xlu0 %v2805
  %v2833 = vpop.xlane.xlu0 %2832
  %2834 = vadd.xlane.f32.xlu0 %v2806
  %v2835 = vpop.xlane.xlu0 %2834
  %2836 = vadd.xlane.f32.xlu0 %v2807
  %v2837 = vpop.xlane.xlu0 %2836
  %2838 = vadd.xlane.f32.xlu0 %v2808
  %v2839 = vpop.xlane.xlu0 %2838
  %2840 = vadd.xlane.f32.xlu0 %v2809
  %v2841 = vpop.xlane.xlu0 %2840
  %v2842 = vld [vmem:[%s6] sm:$0xff]
  %v2843 = vld [vmem:[%s6 + $0x8] sm:$0xff]
  %v2844 = vld [vmem:[%s6 + $0x10] sm:$0xff]
  %v2845 = vld [vmem:[%s6 + $0x18] sm:$0xff]
  %v2846 = vld [vmem:[%s6 + $0x20] sm:$0xff]
  %v2847 = vld [vmem:[%s6 + $0x28] sm:$0xff]
  %v2848 = vld [vmem:[%s6 + $0x30] sm:$0xff]
  %v2849 = vld [vmem:[%s6 + $0x38] sm:$0xff]
  %v2850 = vld [vmem:[%s6 + $0x40] sm:$0xff]
  %v2851 = vld [vmem:[%s6 + $0x48] sm:$0xff]
  %v2852 = vld [vmem:[%s6 + $0x50] sm:$0xff]
  %v2853 = vld [vmem:[%s6 + $0x58] sm:$0xff]
  %v2854 = vld [vmem:[%s6 + $0x60] sm:$0xff]
  %v2855 = vld [vmem:[%s6 + $0x68] sm:$0xff]
  %v2856 = vld [vmem:[%s6 + $0x70] sm:$0xff]
  %v2857 = vld [vmem:[%s6 + $0x78] sm:$0xff]
  %v2858 = vld [vmem:[#allocation3] sm:$0xff]
  %v2859 = vld [vmem:[#allocation3 + $0x8] sm:$0xff]
  %v2860 = vld [vmem:[#allocation3 + $0x10] sm:$0xff]
  %v2861 = vld [vmem:[#allocation3 + $0x18] sm:$0xff]
  %v2862 = vld [vmem:[#allocation3 + $0x20] sm:$0xff]
  %v2863 = vld [vmem:[#allocation3 + $0x28] sm:$0xff]
  %v2864 = vld [vmem:[#allocation3 + $0x30] sm:$0xff]
  %v2865 = vld [vmem:[#allocation3 + $0x38] sm:$0xff]
  %v2866 = vld [vmem:[#allocation3 + $0x40] sm:$0xff]
  %v2867 = vld [vmem:[#allocation3 + $0x48] sm:$0xff]
  %v2868 = vld [vmem:[#allocation3 + $0x50] sm:$0xff]
  %v2869 = vld [vmem:[#allocation3 + $0x58] sm:$0xff]
  %v2870 = vld [vmem:[#allocation3 + $0x60] sm:$0xff]
  %v2871 = vld [vmem:[#allocation3 + $0x68] sm:$0xff]
  %v2872 = vld [vmem:[#allocation3 + $0x70] sm:$0xff]
  %v2873 = vld [vmem:[#allocation3 + $0x78] sm:$0xff]
  %v2874 = vmul.f32 %v2858, %v2811
  %v2875 = vmul.f32 %v2859, %v2813
  %v2876 = vmul.f32 %v2860, %v2815
  %v2877 = vmul.f32 %v2861, %v2817
  %v2878 = vmul.f32 %v2862, %v2819
  %v2879 = vmul.f32 %v2863, %v2821
  %v2880 = vmul.f32 %v2864, %v2823
  %v2881 = vmul.f32 %v2865, %v2825
  %v2882 = vmul.f32 %v2866, %v2827
  %v2883 = vmul.f32 %v2867, %v2829
  %v2884 = vmul.f32 %v2868, %v2831
  %v2885 = vmul.f32 %v2869, %v2833
  %v2886 = vmul.f32 %v2870, %v2835
  %v2887 = vmul.f32 %v2871, %v2837
  %v2888 = vmul.f32 %v2872, %v2839
  %v2889 = vmul.f32 %v2873, %v2841
  %v2890 = vadd.f32 %v2842, %v2874
  %v2891 = vadd.f32 %v2843, %v2875
  %v2892 = vadd.f32 %v2844, %v2876
  %v2893 = vadd.f32 %v2845, %v2877
  %v2894 = vadd.f32 %v2846, %v2878
  %v2895 = vadd.f32 %v2847, %v2879
  %v2896 = vadd.f32 %v2848, %v2880
  %v2897 = vadd.f32 %v2849, %v2881
  %v2898 = vadd.f32 %v2850, %v2882
  %v2899 = vadd.f32 %v2851, %v2883
  %v2900 = vadd.f32 %v2852, %v2884
  %v2901 = vadd.f32 %v2853, %v2885
  %v2902 = vadd.f32 %v2854, %v2886
  %v2903 = vadd.f32 %v2855, %v2887
  %v2904 = vadd.f32 %v2856, %v2888
  %v2905 = vadd.f32 %v2857, %v2889
  %vm2906 = vcmask 7168
  %2907 = vst.msk [vmem:[%s6] sm:$0xff] %vm2906, %v2890
  %2908 = vst.msk [vmem:[%s6 + $0x8] sm:$0xff] %vm2906, %v2891
  %2909 = vst.msk [vmem:[%s6 + $0x10] sm:$0xff] %vm2906, %v2892
  %2910 = vst.msk [vmem:[%s6 + $0x18] sm:$0xff] %vm2906, %v2893
  %2911 = vst.msk [vmem:[%s6 + $0x20] sm:$0xff] %vm2906, %v2894
  %2912 = vst.msk [vmem:[%s6 + $0x28] sm:$0xff] %vm2906, %v2895
  %2913 = vst.msk [vmem:[%s6 + $0x30] sm:$0xff] %vm2906, %v2896
  %2914 = vst.msk [vmem:[%s6 + $0x38] sm:$0xff] %vm2906, %v2897
  %2915 = vst.msk [vmem:[%s6 + $0x40] sm:$0xff] %vm2906, %v2898
  %2916 = vst.msk [vmem:[%s6 + $0x48] sm:$0xff] %vm2906, %v2899
  %2917 = vst.msk [vmem:[%s6 + $0x50] sm:$0xff] %vm2906, %v2900
  %2918 = vst.msk [vmem:[%s6 + $0x58] sm:$0xff] %vm2906, %v2901
  %2919 = vst.msk [vmem:[%s6 + $0x60] sm:$0xff] %vm2906, %v2902
  %2920 = vst.msk [vmem:[%s6 + $0x68] sm:$0xff] %vm2906, %v2903
  %2921 = vst.msk [vmem:[%s6 + $0x70] sm:$0xff] %vm2906, %v2904
  %2922 = vst.msk [vmem:[%s6 + $0x78] sm:$0xff] %vm2906, %v2905
  // Predicated region
  $region26: #{tpu_custom_call.1} parent=0 // pred_check
    _
  $region27: #{tpu_custom_call.1} parent=0 // pred_check_branch
    %2924 = sbr.rel (0) target = $region29
  $region28: #{tpu_custom_call.1} parent=0 // pred_region
    _
  $region29: #{tpu_custom_call.1} parent=0 // pred_fallthru
    _
  // Predicated region
  $region30: #{tpu_custom_call.1} parent=0 // pred_check
    _
  $region31: #{tpu_custom_call.1} parent=0 // pred_check_branch
    %2926 = sbr.rel (0) target = $region33
  $region32: #{tpu_custom_call.1} parent=0 // pred_region
    _
  $region33: #{tpu_custom_call.1} parent=0 // pred_fallthru
    _
  // Predicated region
  $region34: #{tpu_custom_call.1} parent=0 // pred_check
    _
  $region35: #{tpu_custom_call.1} parent=0 // pred_check_branch
    %2928 = sbr.rel (0) target = $region37
  $region36: #{tpu_custom_call.1} parent=0 // pred_region
    _
  $region37: #{tpu_custom_call.1} parent=0 // pred_fallthru
    _
  // Predicated region
  $region38: #{tpu_custom_call.1} parent=0 // pred_check
    _
  $region39: #{tpu_custom_call.1} parent=0 // pred_check_branch
    %2930 = sbr.rel (0) target = $region41
  $region40: #{tpu_custom_call.1} parent=0 // pred_region
    _
  $region41: #{tpu_custom_call.1} parent=0 // pred_fallthru
    _

</llo_original>
